<compile_context>
chip_gen: v7x
topology: tpu7x:2x2x1
jax: 0.10.0
libtpu: 0.0.40
codegen_flags: <defaults>
</compile_context>

<pallas_src>
import functools

import jax
import jax.numpy as jnp
from jax.experimental import pallas as pl
from jax.experimental.pallas import tpu as pltpu


# -----------------------------------------------------------------------------
# Pallas kernel: one batch *chunk* (batch_block elements folded into rows) per
# grid step.  All of GAT attention, the LSTM recurrence and the final Linear
# run inside this single body.
# -----------------------------------------------------------------------------
def lstm_gat_kernel(x_ref, adj_ref, w_gat_ref, a_src_ref, a_dst_ref, b_gat_ref,
                    head_mask_ref, w_ih_ref, w_hh_ref, b_lstm_ref,
                    w_fc_ref, b_fc_ref, out_ref, *,
                    heads, lstm_hidden, seq_len, num_nodes, batch_block):
    M = batch_block * num_nodes          # rows handled by this grid step
    H = lstm_hidden

    x = x_ref[...]                                                    # [M, D_in]

    # ---- GATConv: shared linear projection (all heads, all rows at once) ----
    h = jnp.dot(x, w_gat_ref[...], preferred_element_type=jnp.float32)  # [M, HF]

    # Per-head attention scores via block-diagonal attention matrices:
    # column hd of a_src/a_dst only touches head hd's feature block.
    e_src = jnp.dot(h, a_src_ref[...], preferred_element_type=jnp.float32)  # [M, heads]
    e_dst = jnp.dot(h, a_dst_ref[...], preferred_element_type=jnp.float32)  # [M, heads]
    src_t = e_src.T                                                    # [heads, M]

    # Build head-stacked masked logits: rows [hd*M:(hd+1)*M] belong to head hd.
    # logits[hd*M + i, j] = LeakyReLU(e_dst[i, hd] + e_src[j, hd]), masked by adj.
    # Self-loops guarantee every row keeps >= 1 unmasked entry, so -1e30 is safe.
    adj_pos = adj_ref[...] > 0                                         # [M, M]
    blocks = []
    for hd in range(heads):
        lg = e_dst[:, hd:hd + 1] + src_t[hd:hd + 1, :]                 # [M, M]
        lg = jnp.where(lg > 0, lg, 0.2 * lg)                           # LeakyReLU(0.2)
        blocks.append(jnp.where(adj_pos, lg, -1e30))
    logits = jnp.concatenate(blocks, axis=0)                           # [heads*M, M]

    mx = jnp.max(logits, axis=-1, keepdims=True)
    p = jnp.exp(logits - mx)
    alpha = p / jnp.sum(p, axis=-1, keepdims=True)                     # softmax over sources

    # One stacked matmul for all heads; keep each head's own feature block only.
    att = jnp.dot(alpha, h, preferred_element_type=jnp.float32)        # [heads*M, HF]
    gat_out = b_gat_ref[...]                                           # [1, HF] (broadcast)
    for hd in range(heads):
        gat_out = gat_out + (att[hd * M:(hd + 1) * M, :] *
                             head_mask_ref[hd:hd + 1, :])              # -> [M, HF]

    # ---- LSTM over seq_len steps, gate-major weights (order: i, f, g, o) ----
    # The LSTM input is the same gat_out at every time step, so the input
    # projection is hoisted out of the recurrence.
    xp = [jnp.dot(gat_out, w_ih_ref[g], preferred_element_type=jnp.float32)
          + b_lstm_ref[g] for g in range(4)]                           # 4 x [M, H]
    w_hh = [w_hh_ref[g] for g in range(4)]                             # 4 x [H, H]

    # Step 0 peeled: h_{-1} = c_{-1} = 0, so recurrent matmuls and the forget
    # gate contribute nothing.
    i_g = jax.nn.sigmoid(xp[0])
    g_g = jnp.tanh(xp[2])
    o_g = jax.nn.sigmoid(xp[3])
    c_t = i_g * g_g                                                    # [M, H]
    h_t = o_g * jnp.tanh(c_t)                                          # [M, H]

    for _ in range(seq_len - 1):                   # static unroll (seq_len small)
        i_g = jax.nn.sigmoid(xp[0] + jnp.dot(h_t, w_hh[0], preferred_element_type=jnp.float32))
        f_g = jax.nn.sigmoid(xp[1] + jnp.dot(h_t, w_hh[1], preferred_element_type=jnp.float32))
        g_g = jnp.tanh(xp[2] + jnp.dot(h_t, w_hh[2], preferred_element_type=jnp.float32))
        o_g = jax.nn.sigmoid(xp[3] + jnp.dot(h_t, w_hh[3], preferred_element_type=jnp.float32))
        c_t = f_g * c_t + i_g * g_g
        h_t = o_g * jnp.tanh(c_t)

    # ---- Final Linear (H -> 1) as VPU multiply + reduce, lane-dense store ---
    # rows[0, m] = sum_h h_t[m, h] * w_fc[h] + b_fc ;  single unstrided store.
    rows = (jnp.sum(h_t.T * w_fc_ref[...], axis=0, keepdims=True)
            + b_fc_ref[...])                                           # [1, M]
    out_ref[...] = rows


# -----------------------------------------------------------------------------
# Wrapper: builds the (batch-block-diagonal) adjacency, reshapes parameters to
# the kernel-friendly layouts, and calls pallas_call.
# -----------------------------------------------------------------------------
def lstm_gat_forward(x_seq, edge_index, params, *, heads, gat_hidden,
                     lstm_hidden, num_chunks=1):
    B, N, T, D = x_seq.shape
    F = gat_hidden
    HF = heads * F
    H = lstm_hidden

    assert B % num_chunks == 0, "num_chunks must divide the batch size"
    batch_block = B // num_chunks
    M = batch_block * N

    # Only the last time step feeds the GAT (x_seq[:, :, -1, :] in the module).
    # Kept as a tiny wrapper-side slice+reshape (one fused XLA copy) instead of
    # a strided 4-D BlockSpec read, for lowering robustness.
    # TODO(synk): fetch the last time step directly via a 4-D BlockSpec once a
    # size-1 block on the (second-minor) time dim is verified on this toolchain.
    x2d = x_seq[:, :, -1, :].reshape(B * N, D)

    # Dense adjacency for one graph: adj[dst, src] = 1 for edges src->dst,
    # plus self loops (GATConv default).
    adj1 = jnp.zeros((N, N), jnp.float32)
    adj1 = adj1.at[edge_index[1], edge_index[0]].set(1.0)
    adj1 = adj1.at[jnp.arange(N), jnp.arange(N)].set(1.0)
    # Block-diagonal over the batch chunk (== expand_edge_index in the module).
    # Identical for every chunk, so a single [M, M] mask is shared.
    adj_chunk = jnp.kron(jnp.eye(batch_block, dtype=jnp.float32), adj1)   # [M, M]

    # Block-diagonal per-head attention vectors (column hd sees head hd only).
    a_src_mat = jnp.zeros((HF, heads), jnp.float32)
    a_dst_mat = jnp.zeros((HF, heads), jnp.float32)
    for hd in range(heads):
        a_src_mat = a_src_mat.at[hd * F:(hd + 1) * F, hd].set(params["a_src"][hd])
        a_dst_mat = a_dst_mat.at[hd * F:(hd + 1) * F, hd].set(params["a_dst"][hd])
    head_mask = jnp.repeat(jnp.eye(heads, dtype=jnp.float32), F, axis=1)  # [heads, HF]

    # Gate-major LSTM weights (PyTorch gate order i, f, g, o).
    w_ih_g = jnp.stack([params["w_ih"][:, g * H:(g + 1) * H] for g in range(4)])   # [4, HF, H]
    w_hh_g = jnp.stack([params["w_hh"][:, g * H:(g + 1) * H] for g in range(4)])   # [4, H, H]
    b_g = jnp.stack([params["b_lstm"][:, g * H:(g + 1) * H] for g in range(4)])    # [4, 1, H]

    kernel = functools.partial(
        lstm_gat_kernel, heads=heads, lstm_hidden=H, seq_len=T,
        num_nodes=N, batch_block=batch_block)

    full = lambda i: (0, 0)
    full3 = lambda i: (0, 0, 0)
    out_flat = pl.pallas_call(
        kernel,
        out_shape=jax.ShapeDtypeStruct((num_chunks, M), jnp.float32),
        grid_spec=pltpu.PrefetchScalarGridSpec(
            num_scalar_prefetch=0,
            grid=(num_chunks,),
            in_specs=[
                pl.BlockSpec((M, D), lambda i: (i, 0)),              # x2d row chunk
                pl.BlockSpec((M, M), full),                          # adjacency mask (shared)
                pl.BlockSpec((D, HF), full),                         # GAT lin weight
                pl.BlockSpec((HF, heads), full),                     # att_src (block-diag)
                pl.BlockSpec((HF, heads), full),                     # att_dst (block-diag)
                pl.BlockSpec((1, HF), full),                         # GAT bias
                pl.BlockSpec((heads, HF), full),                     # per-head output mask
                pl.BlockSpec((4, HF, H), full3),                     # LSTM W_ih^T (gate-major)
                pl.BlockSpec((4, H, H), full3),                      # LSTM W_hh^T (gate-major)
                pl.BlockSpec((4, 1, H), full3),                      # LSTM bias (b_ih+b_hh)
                pl.BlockSpec((H, 1), full),                          # fc weight (column)
                pl.BlockSpec((1, 1), full),                          # fc bias
            ],
            out_specs=pl.BlockSpec((1, M), lambda i: (i, 0)),        # lane-dense row per chunk
        ),
        compiler_params=pltpu.CompilerParams(
            dimension_semantics=("parallel",)),
    )(x2d, adj_chunk, params["w_gat"], a_src_mat, a_dst_mat, params["b_gat"],
      head_mask, w_ih_g, w_hh_g, b_g, params["w_fc"], params["b_fc"])
    # [num_chunks, batch_block*N] row-major == [B, N]
    return out_flat.reshape(B, N)


# -----------------------------------------------------------------------------
# Pure-JAX reference (same math, combined weight layout) for correctness check.
# -----------------------------------------------------------------------------
def reference_forward(x_seq, edge_index, params, *, heads, gat_hidden, lstm_hidden):
    B, N, T, D = x_seq.shape
    adj = jnp.zeros((N, N), jnp.float32)
    adj = adj.at[edge_index[1], edge_index[0]].set(1.0)
    adj = adj.at[jnp.arange(N), jnp.arange(N)].set(1.0)

    x = x_seq[:, :, -1, :]                                            # [B, N, D]
    h = x @ params["w_gat"]                                           # [B, N, HF]
    outs = []
    for hd in range(heads):
        hh = h[..., hd * gat_hidden:(hd + 1) * gat_hidden]
        e_src = jnp.sum(hh * params["a_src"][hd], axis=-1)            # [B, N]
        e_dst = jnp.sum(hh * params["a_dst"][hd], axis=-1)
        logits = e_dst[:, :, None] + e_src[:, None, :]
        logits = jnp.where(logits > 0, logits, 0.2 * logits)
        logits = jnp.where(adj[None] > 0, logits, -1e30)
        alpha = jax.nn.softmax(logits, axis=-1)
        outs.append(jnp.einsum("bij,bjf->bif", alpha, hh))
    gat_out = jnp.concatenate(outs, axis=-1) + params["b_gat"]

    H = lstm_hidden
    x_proj = gat_out @ params["w_ih"] + params["b_lstm"]              # [B, N, 4H]
    h_t = jnp.zeros((B, N, H), jnp.float32)
    c_t = jnp.zeros((B, N, H), jnp.float32)
    for _ in range(T):
        gates = x_proj + h_t @ params["w_hh"]
        i_g = jax.nn.sigmoid(gates[..., 0:H])
        f_g = jax.nn.sigmoid(gates[..., H:2 * H])
        g_g = jnp.tanh(gates[..., 2 * H:3 * H])
        o_g = jax.nn.sigmoid(gates[..., 3 * H:4 * H])
        c_t = f_g * c_t + i_g * g_g
        h_t = o_g * jnp.tanh(c_t)

    out = h_t @ params["w_fc"] + params["b_fc"]                       # [B, N, 1]
    return out[..., 0]


# -----------------------------------------------------------------------------
# Deterministic parameter initialization (synthetic, no checkpoint).
# -----------------------------------------------------------------------------
def init_params(key, *, input_dim, gat_hidden, lstm_hidden, heads, output_dim=1):
    HF = heads * gat_hidden
    ks = jax.random.split(key, 9)
    s = 0.1
    return {
        "w_gat":  s * jax.random.normal(ks[0], (input_dim, HF), jnp.float32),
        "a_src":  s * jax.random.normal(ks[1], (heads, gat_hidden), jnp.float32),
        "a_dst":  s * jax.random.normal(ks[2], (heads, gat_hidden), jnp.float32),
        "b_gat":  s * jax.random.normal(ks[3], (1, HF), jnp.float32),
        "w_ih":   s * jax.random.normal(ks[4], (HF, 4 * lstm_hidden), jnp.float32),
        "w_hh":   s * jax.random.normal(ks[5], (lstm_hidden, 4 * lstm_hidden), jnp.float32),
        "b_lstm": s * jax.random.normal(ks[6], (1, 4 * lstm_hidden), jnp.float32),  # b_ih + b_hh
        "w_fc":   s * jax.random.normal(ks[7], (lstm_hidden, output_dim), jnp.float32),
        "b_fc":   s * jax.random.normal(ks[8], (1, output_dim), jnp.float32),
    }


if __name__ == "__main__":
    # x_seq: [batch, num_nodes, seq_len, input_dim]
    B, N, T, D_in = 2, 16, 8, 4
    gat_hidden, heads, lstm_hidden = 8, 2, 32

    key = jax.random.PRNGKey(0)
    k_x, k_p = jax.random.split(key)
    x_seq = jax.random.normal(k_x, (B, N, T, D_in), jnp.float32)

    # Simple deterministic graph: bidirectional ring over N nodes -> (2, 2N)
    src = jnp.arange(N, dtype=jnp.int32)
    dst = (src + 1) % N
    edge_index = jnp.concatenate(
        [jnp.stack([src, dst], axis=0), jnp.stack([dst, src], axis=0)], axis=1)

    params = init_params(k_p, input_dim=D_in, gat_hidden=gat_hidden,
                         lstm_hidden=lstm_hidden, heads=heads, output_dim=1)

    # num_chunks=1: whole batch folded into one grid step (best on v5e/v6e).
    # On v7x, num_chunks=2 keeps both TensorCores busy.
    out = lstm_gat_forward(x_seq, edge_index, params, heads=heads,
                           gat_hidden=gat_hidden, lstm_hidden=lstm_hidden,
                           num_chunks=1)
    out = jax.block_until_ready(out)

    ref = reference_forward(x_seq, edge_index, params, heads=heads,
                            gat_hidden=gat_hidden, lstm_hidden=lstm_hidden)
    ref = jax.block_until_ready(ref)

    assert out.shape == (B, N), out.shape
    assert jnp.allclose(out, ref, atol=1e-4, rtol=1e-4), (out, ref)
    print("KERNEL_OK")
</pallas_src>

<mosaic_0001>
module attributes {stable_mosaic.version = 11 : i64} {
  func.func @lstm_gat_kernel(%arg0: i32, %arg1: memref<32x4xf32, #tpu.memory_space<vmem>>, %arg2: memref<32x32xf32, #tpu.memory_space<vmem>>, %arg3: memref<4x16xf32, #tpu.memory_space<vmem>>, %arg4: memref<16x2xf32, #tpu.memory_space<vmem>>, %arg5: memref<16x2xf32, #tpu.memory_space<vmem>>, %arg6: memref<1x16xf32, #tpu.memory_space<vmem>>, %arg7: memref<2x16xf32, #tpu.memory_space<vmem>>, %arg8: memref<4x16x32xf32, #tpu.memory_space<vmem>>, %arg9: memref<4x32x32xf32, #tpu.memory_space<vmem>>, %arg10: memref<4x1x32xf32, #tpu.memory_space<vmem>>, %arg11: memref<32x1xf32, #tpu.memory_space<vmem>>, %arg12: memref<1x1xf32, #tpu.memory_space<vmem>>, %arg13: memref<1x32xf32, #tpu.memory_space<vmem>>) attributes {dimension_semantics = [#tpu.dimension_semantics<parallel>], iteration_bounds = array<i64: 1>, scalar_prefetch = 0 : i64, scratch_operands = 0 : i64, tpu.core_type = #tpu.core_type<tc>, window_params = [{transform_indices = @transform_0, window_bounds = array<i64: 32, 4>}, {pipeline_mode = #tpu.pipeline_mode<synchronous>, transform_indices = @transform_1, window_bounds = array<i64: 32, 32>}, {pipeline_mode = #tpu.pipeline_mode<synchronous>, transform_indices = @transform_2, window_bounds = array<i64: 4, 16>}, {pipeline_mode = #tpu.pipeline_mode<synchronous>, transform_indices = @transform_3, window_bounds = array<i64: 16, 2>}, {pipeline_mode = #tpu.pipeline_mode<synchronous>, transform_indices = @transform_4, window_bounds = array<i64: 16, 2>}, {pipeline_mode = #tpu.pipeline_mode<synchronous>, transform_indices = @transform_5, window_bounds = array<i64: 1, 16>}, {pipeline_mode = #tpu.pipeline_mode<synchronous>, transform_indices = @transform_6, window_bounds = array<i64: 2, 16>}, {pipeline_mode = #tpu.pipeline_mode<synchronous>, transform_indices = @transform_7, window_bounds = array<i64: 4, 16, 32>}, {pipeline_mode = #tpu.pipeline_mode<synchronous>, transform_indices = @transform_8, window_bounds = array<i64: 4, 32, 32>}, {pipeline_mode = #tpu.pipeline_mode<synchronous>, transform_indices = @transform_9, window_bounds = array<i64: 4, 1, 32>}, {pipeline_mode = #tpu.pipeline_mode<synchronous>, transform_indices = @transform_10, window_bounds = array<i64: 32, 1>}, {pipeline_mode = #tpu.pipeline_mode<synchronous>, transform_indices = @transform_11, window_bounds = array<i64: 1, 1>}, {transform_indices = @transform_12, window_bounds = array<i64: 1, 32>}]} {
    %c0 = arith.constant 0 : index
    %c0_0 = arith.constant 0 : index
    %0 = vector.load %arg1[%c0, %c0_0] : memref<32x4xf32, #tpu.memory_space<vmem>>, vector<32x4xf32>
    %c0_1 = arith.constant 0 : index
    %c0_2 = arith.constant 0 : index
    %1 = vector.load %arg3[%c0_1, %c0_2] : memref<4x16xf32, #tpu.memory_space<vmem>>, vector<4x16xf32>
    %cst = arith.constant dense<0.000000e+00> : vector<32x16xf32>
    %2 = tpu.matmul %0, %1, %cst {dimension_numbers = #tpu.dot_dimension_numbers<[1], [0], [0], [1], [0, 0, 1, 1], [], []>} : vector<32x4xf32>, vector<4x16xf32>, vector<32x16xf32> -> vector<32x16xf32>
    %c0_3 = arith.constant 0 : index
    %c0_4 = arith.constant 0 : index
    %3 = vector.load %arg4[%c0_3, %c0_4] : memref<16x2xf32, #tpu.memory_space<vmem>>, vector<16x2xf32>
    %cst_5 = arith.constant dense<0.000000e+00> : vector<32x2xf32>
    %4 = tpu.matmul %2, %3, %cst_5 {dimension_numbers = #tpu.dot_dimension_numbers<[1], [0], [0], [1], [0, 0, 1, 1], [], []>} : vector<32x16xf32>, vector<16x2xf32>, vector<32x2xf32> -> vector<32x2xf32>
    %c0_6 = arith.constant 0 : index
    %c0_7 = arith.constant 0 : index
    %5 = vector.load %arg5[%c0_6, %c0_7] : memref<16x2xf32, #tpu.memory_space<vmem>>, vector<16x2xf32>
    %cst_8 = arith.constant dense<0.000000e+00> : vector<32x2xf32>
    %6 = tpu.matmul %2, %5, %cst_8 {dimension_numbers = #tpu.dot_dimension_numbers<[1], [0], [0], [1], [0, 0, 1, 1], [], []>} : vector<32x16xf32>, vector<16x2xf32>, vector<32x2xf32> -> vector<32x2xf32>
    %7 = tpu.transpose %4, [1, 0] : vector<32x2xf32> -> vector<2x32xf32>
    %c0_9 = arith.constant 0 : index
    %c0_10 = arith.constant 0 : index
    %8 = vector.load %arg2[%c0_9, %c0_10] : memref<32x32xf32, #tpu.memory_space<vmem>>, vector<32x32xf32>
    %cst_11 = arith.constant 0.000000e+00 : f32
    %9 = vector.broadcast %cst_11 : f32 to vector<32x32xf32>
    %10 = arith.cmpf ogt, %8, %9 : vector<32x32xf32>
    %11 = vector.extract_strided_slice %6 {offsets = [0, 0], sizes = [32, 1], strides = [1, 1]} : vector<32x2xf32> to vector<32x1xf32>
    %12 = vector.extract_strided_slice %7 {offsets = [0, 0], sizes = [1, 32], strides = [1, 1]} : vector<2x32xf32> to vector<1x32xf32>
    %13 = vector.broadcast %11 : vector<32x1xf32> to vector<32x32xf32>
    %14 = vector.broadcast %12 : vector<1x32xf32> to vector<32x32xf32>
    %15 = arith.addf %13, %14 : vector<32x32xf32>
    %cst_12 = arith.constant 0.000000e+00 : f32
    %16 = vector.broadcast %cst_12 : f32 to vector<32x32xf32>
    %17 = arith.cmpf ogt, %15, %16 : vector<32x32xf32>
    %cst_13 = arith.constant 2.000000e-01 : f32
    %18 = vector.broadcast %cst_13 : f32 to vector<32x32xf32>
    %19 = arith.mulf %18, %15 : vector<32x32xf32>
    %20 = arith.select %17, %15, %19 : vector<32x32xi1>, vector<32x32xf32>
    %cst_14 = arith.constant -1.000000e+30 : f32
    %21 = vector.broadcast %cst_14 : f32 to vector<32x32xf32>
    %22 = arith.select %10, %20, %21 : vector<32x32xi1>, vector<32x32xf32>
    %23 = vector.extract_strided_slice %6 {offsets = [0, 1], sizes = [32, 1], strides = [1, 1]} : vector<32x2xf32> to vector<32x1xf32>
    %24 = vector.extract_strided_slice %7 {offsets = [1, 0], sizes = [1, 32], strides = [1, 1]} : vector<2x32xf32> to vector<1x32xf32>
    %25 = vector.broadcast %23 : vector<32x1xf32> to vector<32x32xf32>
    %26 = vector.broadcast %24 : vector<1x32xf32> to vector<32x32xf32>
    %27 = arith.addf %25, %26 : vector<32x32xf32>
    %cst_15 = arith.constant 0.000000e+00 : f32
    %28 = vector.broadcast %cst_15 : f32 to vector<32x32xf32>
    %29 = arith.cmpf ogt, %27, %28 : vector<32x32xf32>
    %cst_16 = arith.constant 2.000000e-01 : f32
    %30 = vector.broadcast %cst_16 : f32 to vector<32x32xf32>
    %31 = arith.mulf %30, %27 : vector<32x32xf32>
    %32 = arith.select %29, %27, %31 : vector<32x32xi1>, vector<32x32xf32>
    %cst_17 = arith.constant -1.000000e+30 : f32
    %33 = vector.broadcast %cst_17 : f32 to vector<32x32xf32>
    %34 = arith.select %10, %32, %33 : vector<32x32xi1>, vector<32x32xf32>
    %35 = tpu.concatenate %22, %34 in 0 : vector<32x32xf32>, vector<32x32xf32> -> vector<64x32xf32>
    %cst_18 = arith.constant dense<0xFF800000> : vector<64xf32>
    %36 = vector.multi_reduction <maximumf>, %35, %cst_18 [1] : vector<64x32xf32> to vector<64xf32>
    %37 = vector.shape_cast %36 : vector<64xf32> to vector<64x1xf32>
    %38 = vector.broadcast %37 : vector<64x1xf32> to vector<64x32xf32>
    %39 = arith.subf %35, %38 : vector<64x32xf32>
    %40 = math.exp %39 : vector<64x32xf32>
    %cst_19 = arith.constant dense<0.000000e+00> : vector<64xf32>
    %41 = vector.multi_reduction <add>, %40, %cst_19 [1] : vector<64x32xf32> to vector<64xf32>
    %42 = vector.shape_cast %41 : vector<64xf32> to vector<64x1xf32>
    %43 = vector.broadcast %42 : vector<64x1xf32> to vector<64x32xf32>
    %44 = arith.divf %40, %43 : vector<64x32xf32>
    %cst_20 = arith.constant dense<0.000000e+00> : vector<64x16xf32>
    %45 = tpu.matmul %44, %2, %cst_20 {dimension_numbers = #tpu.dot_dimension_numbers<[1], [0], [0], [1], [0, 0, 1, 1], [], []>} : vector<64x32xf32>, vector<32x16xf32>, vector<64x16xf32> -> vector<64x16xf32>
    %c0_21 = arith.constant 0 : index
    %c0_22 = arith.constant 0 : index
    %46 = vector.load %arg6[%c0_21, %c0_22] : memref<1x16xf32, #tpu.memory_space<vmem>>, vector<1x16xf32>
    %47 = vector.extract_strided_slice %45 {offsets = [0, 0], sizes = [32, 16], strides = [1, 1]} : vector<64x16xf32> to vector<32x16xf32>
    %c0_23 = arith.constant 0 : index
    %c0_24 = arith.constant 0 : index
    %48 = vector.load %arg7[%c0_23, %c0_24] : memref<2x16xf32, #tpu.memory_space<vmem>>, vector<1x16xf32>
    %49 = vector.broadcast %48 : vector<1x16xf32> to vector<32x16xf32>
    %50 = arith.mulf %47, %49 : vector<32x16xf32>
    %51 = vector.broadcast %46 : vector<1x16xf32> to vector<32x16xf32>
    %52 = arith.addf %51, %50 : vector<32x16xf32>
    %53 = vector.extract_strided_slice %45 {offsets = [32, 0], sizes = [32, 16], strides = [1, 1]} : vector<64x16xf32> to vector<32x16xf32>
    %c1 = arith.constant 1 : index
    %c0_25 = arith.constant 0 : index
    %54 = vector.load %arg7[%c1, %c0_25] : memref<2x16xf32, #tpu.memory_space<vmem>>, vector<1x16xf32>
    %55 = vector.broadcast %54 : vector<1x16xf32> to vector<32x16xf32>
    %56 = arith.mulf %53, %55 : vector<32x16xf32>
    %57 = arith.addf %52, %56 : vector<32x16xf32>
    %c0_26 = arith.constant 0 : index
    %c0_27 = arith.constant 0 : index
    %c0_28 = arith.constant 0 : index
    %58 = vector.load %arg8[%c0_26, %c0_27, %c0_28] : memref<4x16x32xf32, #tpu.memory_space<vmem>>, vector<1x16x32xf32>
    %59 = vector.shape_cast %58 : vector<1x16x32xf32> to vector<16x32xf32>
    %cst_29 = arith.constant dense<0.000000e+00> : vector<32x32xf32>
    %60 = tpu.matmul %57, %59, %cst_29 {dimension_numbers = #tpu.dot_dimension_numbers<[1], [0], [0], [1], [0, 0, 1, 1], [], []>} : vector<32x16xf32>, vector<16x32xf32>, vector<32x32xf32> -> vector<32x32xf32>
    %c0_30 = arith.constant 0 : index
    %c0_31 = arith.constant 0 : index
    %c0_32 = arith.constant 0 : index
    %61 = vector.load %arg10[%c0_30, %c0_31, %c0_32] : memref<4x1x32xf32, #tpu.memory_space<vmem>>, vector<1x1x32xf32>
    %62 = vector.shape_cast %61 : vector<1x1x32xf32> to vector<1x32xf32>
    %63 = vector.broadcast %62 : vector<1x32xf32> to vector<32x32xf32>
    %64 = arith.addf %60, %63 : vector<32x32xf32>
    %c1_33 = arith.constant 1 : index
    %c0_34 = arith.constant 0 : index
    %c0_35 = arith.constant 0 : index
    %65 = vector.load %arg8[%c1_33, %c0_34, %c0_35] : memref<4x16x32xf32, #tpu.memory_space<vmem>>, vector<1x16x32xf32>
    %66 = vector.shape_cast %65 : vector<1x16x32xf32> to vector<16x32xf32>
    %cst_36 = arith.constant dense<0.000000e+00> : vector<32x32xf32>
    %67 = tpu.matmul %57, %66, %cst_36 {dimension_numbers = #tpu.dot_dimension_numbers<[1], [0], [0], [1], [0, 0, 1, 1], [], []>} : vector<32x16xf32>, vector<16x32xf32>, vector<32x32xf32> -> vector<32x32xf32>
    %c1_37 = arith.constant 1 : index
    %c0_38 = arith.constant 0 : index
    %c0_39 = arith.constant 0 : index
    %68 = vector.load %arg10[%c1_37, %c0_38, %c0_39] : memref<4x1x32xf32, #tpu.memory_space<vmem>>, vector<1x1x32xf32>
    %69 = vector.shape_cast %68 : vector<1x1x32xf32> to vector<1x32xf32>
    %70 = vector.broadcast %69 : vector<1x32xf32> to vector<32x32xf32>
    %71 = arith.addf %67, %70 : vector<32x32xf32>
    %c2 = arith.constant 2 : index
    %c0_40 = arith.constant 0 : index
    %c0_41 = arith.constant 0 : index
    %72 = vector.load %arg8[%c2, %c0_40, %c0_41] : memref<4x16x32xf32, #tpu.memory_space<vmem>>, vector<1x16x32xf32>
    %73 = vector.shape_cast %72 : vector<1x16x32xf32> to vector<16x32xf32>
    %cst_42 = arith.constant dense<0.000000e+00> : vector<32x32xf32>
    %74 = tpu.matmul %57, %73, %cst_42 {dimension_numbers = #tpu.dot_dimension_numbers<[1], [0], [0], [1], [0, 0, 1, 1], [], []>} : vector<32x16xf32>, vector<16x32xf32>, vector<32x32xf32> -> vector<32x32xf32>
    %c2_43 = arith.constant 2 : index
    %c0_44 = arith.constant 0 : index
    %c0_45 = arith.constant 0 : index
    %75 = vector.load %arg10[%c2_43, %c0_44, %c0_45] : memref<4x1x32xf32, #tpu.memory_space<vmem>>, vector<1x1x32xf32>
    %76 = vector.shape_cast %75 : vector<1x1x32xf32> to vector<1x32xf32>
    %77 = vector.broadcast %76 : vector<1x32xf32> to vector<32x32xf32>
    %78 = arith.addf %74, %77 : vector<32x32xf32>
    %c3 = arith.constant 3 : index
    %c0_46 = arith.constant 0 : index
    %c0_47 = arith.constant 0 : index
    %79 = vector.load %arg8[%c3, %c0_46, %c0_47] : memref<4x16x32xf32, #tpu.memory_space<vmem>>, vector<1x16x32xf32>
    %80 = vector.shape_cast %79 : vector<1x16x32xf32> to vector<16x32xf32>
    %cst_48 = arith.constant dense<0.000000e+00> : vector<32x32xf32>
    %81 = tpu.matmul %57, %80, %cst_48 {dimension_numbers = #tpu.dot_dimension_numbers<[1], [0], [0], [1], [0, 0, 1, 1], [], []>} : vector<32x16xf32>, vector<16x32xf32>, vector<32x32xf32> -> vector<32x32xf32>
    %c3_49 = arith.constant 3 : index
    %c0_50 = arith.constant 0 : index
    %c0_51 = arith.constant 0 : index
    %82 = vector.load %arg10[%c3_49, %c0_50, %c0_51] : memref<4x1x32xf32, #tpu.memory_space<vmem>>, vector<1x1x32xf32>
    %83 = vector.shape_cast %82 : vector<1x1x32xf32> to vector<1x32xf32>
    %84 = vector.broadcast %83 : vector<1x32xf32> to vector<32x32xf32>
    %85 = arith.addf %81, %84 : vector<32x32xf32>
    %c0_52 = arith.constant 0 : index
    %c0_53 = arith.constant 0 : index
    %c0_54 = arith.constant 0 : index
    %86 = vector.load %arg9[%c0_52, %c0_53, %c0_54] : memref<4x32x32xf32, #tpu.memory_space<vmem>>, vector<1x32x32xf32>
    %87 = vector.shape_cast %86 : vector<1x32x32xf32> to vector<32x32xf32>
    %c1_55 = arith.constant 1 : index
    %c0_56 = arith.constant 0 : index
    %c0_57 = arith.constant 0 : index
    %88 = vector.load %arg9[%c1_55, %c0_56, %c0_57] : memref<4x32x32xf32, #tpu.memory_space<vmem>>, vector<1x32x32xf32>
    %89 = vector.shape_cast %88 : vector<1x32x32xf32> to vector<32x32xf32>
    %c2_58 = arith.constant 2 : index
    %c0_59 = arith.constant 0 : index
    %c0_60 = arith.constant 0 : index
    %90 = vector.load %arg9[%c2_58, %c0_59, %c0_60] : memref<4x32x32xf32, #tpu.memory_space<vmem>>, vector<1x32x32xf32>
    %91 = vector.shape_cast %90 : vector<1x32x32xf32> to vector<32x32xf32>
    %c3_61 = arith.constant 3 : index
    %c0_62 = arith.constant 0 : index
    %c0_63 = arith.constant 0 : index
    %92 = vector.load %arg9[%c3_61, %c0_62, %c0_63] : memref<4x32x32xf32, #tpu.memory_space<vmem>>, vector<1x32x32xf32>
    %93 = vector.shape_cast %92 : vector<1x32x32xf32> to vector<32x32xf32>
    %94 = arith.negf %64 : vector<32x32xf32>
    %95 = math.exp %94 : vector<32x32xf32>
    %cst_64 = arith.constant 1.000000e+00 : f32
    %96 = vector.broadcast %cst_64 : f32 to vector<32x32xf32>
    %97 = arith.addf %96, %95 : vector<32x32xf32>
    %98 = arith.divf %96, %97 : vector<32x32xf32>
    %99 = math.tanh %78 : vector<32x32xf32>
    %100 = arith.negf %85 : vector<32x32xf32>
    %101 = math.exp %100 : vector<32x32xf32>
    %cst_65 = arith.constant 1.000000e+00 : f32
    %102 = vector.broadcast %cst_65 : f32 to vector<32x32xf32>
    %103 = arith.addf %102, %101 : vector<32x32xf32>
    %104 = arith.divf %102, %103 : vector<32x32xf32>
    %105 = arith.mulf %98, %99 : vector<32x32xf32>
    %106 = math.tanh %105 : vector<32x32xf32>
    %107 = arith.mulf %104, %106 : vector<32x32xf32>
    %cst_66 = arith.constant dense<0.000000e+00> : vector<32x32xf32>
    %108 = tpu.matmul %107, %87, %cst_66 {dimension_numbers = #tpu.dot_dimension_numbers<[1], [0], [0], [1], [0, 0, 1, 1], [], []>} : vector<32x32xf32>, vector<32x32xf32>, vector<32x32xf32> -> vector<32x32xf32>
    %109 = arith.addf %64, %108 : vector<32x32xf32>
    %110 = arith.negf %109 : vector<32x32xf32>
    %111 = math.exp %110 : vector<32x32xf32>
    %cst_67 = arith.constant 1.000000e+00 : f32
    %112 = vector.broadcast %cst_67 : f32 to vector<32x32xf32>
    %113 = arith.addf %112, %111 : vector<32x32xf32>
    %114 = arith.divf %112, %113 : vector<32x32xf32>
    %cst_68 = arith.constant dense<0.000000e+00> : vector<32x32xf32>
    %115 = tpu.matmul %107, %89, %cst_68 {dimension_numbers = #tpu.dot_dimension_numbers<[1], [0], [0], [1], [0, 0, 1, 1], [], []>} : vector<32x32xf32>, vector<32x32xf32>, vector<32x32xf32> -> vector<32x32xf32>
    %116 = arith.addf %71, %115 : vector<32x32xf32>
    %117 = arith.negf %116 : vector<32x32xf32>
    %118 = math.exp %117 : vector<32x32xf32>
    %cst_69 = arith.constant 1.000000e+00 : f32
    %119 = vector.broadcast %cst_69 : f32 to vector<32x32xf32>
    %120 = arith.addf %119, %118 : vector<32x32xf32>
    %121 = arith.divf %119, %120 : vector<32x32xf32>
    %cst_70 = arith.constant dense<0.000000e+00> : vector<32x32xf32>
    %122 = tpu.matmul %107, %91, %cst_70 {dimension_numbers = #tpu.dot_dimension_numbers<[1], [0], [0], [1], [0, 0, 1, 1], [], []>} : vector<32x32xf32>, vector<32x32xf32>, vector<32x32xf32> -> vector<32x32xf32>
    %123 = arith.addf %78, %122 : vector<32x32xf32>
    %124 = math.tanh %123 : vector<32x32xf32>
    %cst_71 = arith.constant dense<0.000000e+00> : vector<32x32xf32>
    %125 = tpu.matmul %107, %93, %cst_71 {dimension_numbers = #tpu.dot_dimension_numbers<[1], [0], [0], [1], [0, 0, 1, 1], [], []>} : vector<32x32xf32>, vector<32x32xf32>, vector<32x32xf32> -> vector<32x32xf32>
    %126 = arith.addf %85, %125 : vector<32x32xf32>
    %127 = arith.negf %126 : vector<32x32xf32>
    %128 = math.exp %127 : vector<32x32xf32>
    %cst_72 = arith.constant 1.000000e+00 : f32
    %129 = vector.broadcast %cst_72 : f32 to vector<32x32xf32>
    %130 = arith.addf %129, %128 : vector<32x32xf32>
    %131 = arith.divf %129, %130 : vector<32x32xf32>
    %132 = arith.mulf %121, %105 : vector<32x32xf32>
    %133 = arith.mulf %114, %124 : vector<32x32xf32>
    %134 = arith.addf %132, %133 : vector<32x32xf32>
    %135 = math.tanh %134 : vector<32x32xf32>
    %136 = arith.mulf %131, %135 : vector<32x32xf32>
    %cst_73 = arith.constant dense<0.000000e+00> : vector<32x32xf32>
    %137 = tpu.matmul %136, %87, %cst_73 {dimension_numbers = #tpu.dot_dimension_numbers<[1], [0], [0], [1], [0, 0, 1, 1], [], []>} : vector<32x32xf32>, vector<32x32xf32>, vector<32x32xf32> -> vector<32x32xf32>
    %138 = arith.addf %64, %137 : vector<32x32xf32>
    %139 = arith.negf %138 : vector<32x32xf32>
    %140 = math.exp %139 : vector<32x32xf32>
    %cst_74 = arith.constant 1.000000e+00 : f32
    %141 = vector.broadcast %cst_74 : f32 to vector<32x32xf32>
    %142 = arith.addf %141, %140 : vector<32x32xf32>
    %143 = arith.divf %141, %142 : vector<32x32xf32>
    %cst_75 = arith.constant dense<0.000000e+00> : vector<32x32xf32>
    %144 = tpu.matmul %136, %89, %cst_75 {dimension_numbers = #tpu.dot_dimension_numbers<[1], [0], [0], [1], [0, 0, 1, 1], [], []>} : vector<32x32xf32>, vector<32x32xf32>, vector<32x32xf32> -> vector<32x32xf32>
    %145 = arith.addf %71, %144 : vector<32x32xf32>
    %146 = arith.negf %145 : vector<32x32xf32>
    %147 = math.exp %146 : vector<32x32xf32>
    %cst_76 = arith.constant 1.000000e+00 : f32
    %148 = vector.broadcast %cst_76 : f32 to vector<32x32xf32>
    %149 = arith.addf %148, %147 : vector<32x32xf32>
    %150 = arith.divf %148, %149 : vector<32x32xf32>
    %cst_77 = arith.constant dense<0.000000e+00> : vector<32x32xf32>
    %151 = tpu.matmul %136, %91, %cst_77 {dimension_numbers = #tpu.dot_dimension_numbers<[1], [0], [0], [1], [0, 0, 1, 1], [], []>} : vector<32x32xf32>, vector<32x32xf32>, vector<32x32xf32> -> vector<32x32xf32>
    %152 = arith.addf %78, %151 : vector<32x32xf32>
    %153 = math.tanh %152 : vector<32x32xf32>
    %cst_78 = arith.constant dense<0.000000e+00> : vector<32x32xf32>
    %154 = tpu.matmul %136, %93, %cst_78 {dimension_numbers = #tpu.dot_dimension_numbers<[1], [0], [0], [1], [0, 0, 1, 1], [], []>} : vector<32x32xf32>, vector<32x32xf32>, vector<32x32xf32> -> vector<32x32xf32>
    %155 = arith.addf %85, %154 : vector<32x32xf32>
    %156 = arith.negf %155 : vector<32x32xf32>
    %157 = math.exp %156 : vector<32x32xf32>
    %cst_79 = arith.constant 1.000000e+00 : f32
    %158 = vector.broadcast %cst_79 : f32 to vector<32x32xf32>
    %159 = arith.addf %158, %157 : vector<32x32xf32>
    %160 = arith.divf %158, %159 : vector<32x32xf32>
    %161 = arith.mulf %150, %134 : vector<32x32xf32>
    %162 = arith.mulf %143, %153 : vector<32x32xf32>
    %163 = arith.addf %161, %162 : vector<32x32xf32>
    %164 = math.tanh %163 : vector<32x32xf32>
    %165 = arith.mulf %160, %164 : vector<32x32xf32>
    %cst_80 = arith.constant dense<0.000000e+00> : vector<32x32xf32>
    %166 = tpu.matmul %165, %87, %cst_80 {dimension_numbers = #tpu.dot_dimension_numbers<[1], [0], [0], [1], [0, 0, 1, 1], [], []>} : vector<32x32xf32>, vector<32x32xf32>, vector<32x32xf32> -> vector<32x32xf32>
    %167 = arith.addf %64, %166 : vector<32x32xf32>
    %168 = arith.negf %167 : vector<32x32xf32>
    %169 = math.exp %168 : vector<32x32xf32>
    %cst_81 = arith.constant 1.000000e+00 : f32
    %170 = vector.broadcast %cst_81 : f32 to vector<32x32xf32>
    %171 = arith.addf %170, %169 : vector<32x32xf32>
    %172 = arith.divf %170, %171 : vector<32x32xf32>
    %cst_82 = arith.constant dense<0.000000e+00> : vector<32x32xf32>
    %173 = tpu.matmul %165, %89, %cst_82 {dimension_numbers = #tpu.dot_dimension_numbers<[1], [0], [0], [1], [0, 0, 1, 1], [], []>} : vector<32x32xf32>, vector<32x32xf32>, vector<32x32xf32> -> vector<32x32xf32>
    %174 = arith.addf %71, %173 : vector<32x32xf32>
    %175 = arith.negf %174 : vector<32x32xf32>
    %176 = math.exp %175 : vector<32x32xf32>
    %cst_83 = arith.constant 1.000000e+00 : f32
    %177 = vector.broadcast %cst_83 : f32 to vector<32x32xf32>
    %178 = arith.addf %177, %176 : vector<32x32xf32>
    %179 = arith.divf %177, %178 : vector<32x32xf32>
    %cst_84 = arith.constant dense<0.000000e+00> : vector<32x32xf32>
    %180 = tpu.matmul %165, %91, %cst_84 {dimension_numbers = #tpu.dot_dimension_numbers<[1], [0], [0], [1], [0, 0, 1, 1], [], []>} : vector<32x32xf32>, vector<32x32xf32>, vector<32x32xf32> -> vector<32x32xf32>
    %181 = arith.addf %78, %180 : vector<32x32xf32>
    %182 = math.tanh %181 : vector<32x32xf32>
    %cst_85 = arith.constant dense<0.000000e+00> : vector<32x32xf32>
    %183 = tpu.matmul %165, %93, %cst_85 {dimension_numbers = #tpu.dot_dimension_numbers<[1], [0], [0], [1], [0, 0, 1, 1], [], []>} : vector<32x32xf32>, vector<32x32xf32>, vector<32x32xf32> -> vector<32x32xf32>
    %184 = arith.addf %85, %183 : vector<32x32xf32>
    %185 = arith.negf %184 : vector<32x32xf32>
    %186 = math.exp %185 : vector<32x32xf32>
    %cst_86 = arith.constant 1.000000e+00 : f32
    %187 = vector.broadcast %cst_86 : f32 to vector<32x32xf32>
    %188 = arith.addf %187, %186 : vector<32x32xf32>
    %189 = arith.divf %187, %188 : vector<32x32xf32>
    %190 = arith.mulf %179, %163 : vector<32x32xf32>
    %191 = arith.mulf %172, %182 : vector<32x32xf32>
    %192 = arith.addf %190, %191 : vector<32x32xf32>
    %193 = math.tanh %192 : vector<32x32xf32>
    %194 = arith.mulf %189, %193 : vector<32x32xf32>
    %cst_87 = arith.constant dense<0.000000e+00> : vector<32x32xf32>
    %195 = tpu.matmul %194, %87, %cst_87 {dimension_numbers = #tpu.dot_dimension_numbers<[1], [0], [0], [1], [0, 0, 1, 1], [], []>} : vector<32x32xf32>, vector<32x32xf32>, vector<32x32xf32> -> vector<32x32xf32>
    %196 = arith.addf %64, %195 : vector<32x32xf32>
    %197 = arith.negf %196 : vector<32x32xf32>
    %198 = math.exp %197 : vector<32x32xf32>
    %cst_88 = arith.constant 1.000000e+00 : f32
    %199 = vector.broadcast %cst_88 : f32 to vector<32x32xf32>
    %200 = arith.addf %199, %198 : vector<32x32xf32>
    %201 = arith.divf %199, %200 : vector<32x32xf32>
    %cst_89 = arith.constant dense<0.000000e+00> : vector<32x32xf32>
    %202 = tpu.matmul %194, %89, %cst_89 {dimension_numbers = #tpu.dot_dimension_numbers<[1], [0], [0], [1], [0, 0, 1, 1], [], []>} : vector<32x32xf32>, vector<32x32xf32>, vector<32x32xf32> -> vector<32x32xf32>
    %203 = arith.addf %71, %202 : vector<32x32xf32>
    %204 = arith.negf %203 : vector<32x32xf32>
    %205 = math.exp %204 : vector<32x32xf32>
    %cst_90 = arith.constant 1.000000e+00 : f32
    %206 = vector.broadcast %cst_90 : f32 to vector<32x32xf32>
    %207 = arith.addf %206, %205 : vector<32x32xf32>
    %208 = arith.divf %206, %207 : vector<32x32xf32>
    %cst_91 = arith.constant dense<0.000000e+00> : vector<32x32xf32>
    %209 = tpu.matmul %194, %91, %cst_91 {dimension_numbers = #tpu.dot_dimension_numbers<[1], [0], [0], [1], [0, 0, 1, 1], [], []>} : vector<32x32xf32>, vector<32x32xf32>, vector<32x32xf32> -> vector<32x32xf32>
    %210 = arith.addf %78, %209 : vector<32x32xf32>
    %211 = math.tanh %210 : vector<32x32xf32>
    %cst_92 = arith.constant dense<0.000000e+00> : vector<32x32xf32>
    %212 = tpu.matmul %194, %93, %cst_92 {dimension_numbers = #tpu.dot_dimension_numbers<[1], [0], [0], [1], [0, 0, 1, 1], [], []>} : vector<32x32xf32>, vector<32x32xf32>, vector<32x32xf32> -> vector<32x32xf32>
    %213 = arith.addf %85, %212 : vector<32x32xf32>
    %214 = arith.negf %213 : vector<32x32xf32>
    %215 = math.exp %214 : vector<32x32xf32>
    %cst_93 = arith.constant 1.000000e+00 : f32
    %216 = vector.broadcast %cst_93 : f32 to vector<32x32xf32>
    %217 = arith.addf %216, %215 : vector<32x32xf32>
    %218 = arith.divf %216, %217 : vector<32x32xf32>
    %219 = arith.mulf %208, %192 : vector<32x32xf32>
    %220 = arith.mulf %201, %211 : vector<32x32xf32>
    %221 = arith.addf %219, %220 : vector<32x32xf32>
    %222 = math.tanh %221 : vector<32x32xf32>
    %223 = arith.mulf %218, %222 : vector<32x32xf32>
    %cst_94 = arith.constant dense<0.000000e+00> : vector<32x32xf32>
    %224 = tpu.matmul %223, %87, %cst_94 {dimension_numbers = #tpu.dot_dimension_numbers<[1], [0], [0], [1], [0, 0, 1, 1], [], []>} : vector<32x32xf32>, vector<32x32xf32>, vector<32x32xf32> -> vector<32x32xf32>
    %225 = arith.addf %64, %224 : vector<32x32xf32>
    %226 = arith.negf %225 : vector<32x32xf32>
    %227 = math.exp %226 : vector<32x32xf32>
    %cst_95 = arith.constant 1.000000e+00 : f32
    %228 = vector.broadcast %cst_95 : f32 to vector<32x32xf32>
    %229 = arith.addf %228, %227 : vector<32x32xf32>
    %230 = arith.divf %228, %229 : vector<32x32xf32>
    %cst_96 = arith.constant dense<0.000000e+00> : vector<32x32xf32>
    %231 = tpu.matmul %223, %89, %cst_96 {dimension_numbers = #tpu.dot_dimension_numbers<[1], [0], [0], [1], [0, 0, 1, 1], [], []>} : vector<32x32xf32>, vector<32x32xf32>, vector<32x32xf32> -> vector<32x32xf32>
    %232 = arith.addf %71, %231 : vector<32x32xf32>
    %233 = arith.negf %232 : vector<32x32xf32>
    %234 = math.exp %233 : vector<32x32xf32>
    %cst_97 = arith.constant 1.000000e+00 : f32
    %235 = vector.broadcast %cst_97 : f32 to vector<32x32xf32>
    %236 = arith.addf %235, %234 : vector<32x32xf32>
    %237 = arith.divf %235, %236 : vector<32x32xf32>
    %cst_98 = arith.constant dense<0.000000e+00> : vector<32x32xf32>
    %238 = tpu.matmul %223, %91, %cst_98 {dimension_numbers = #tpu.dot_dimension_numbers<[1], [0], [0], [1], [0, 0, 1, 1], [], []>} : vector<32x32xf32>, vector<32x32xf32>, vector<32x32xf32> -> vector<32x32xf32>
    %239 = arith.addf %78, %238 : vector<32x32xf32>
    %240 = math.tanh %239 : vector<32x32xf32>
    %cst_99 = arith.constant dense<0.000000e+00> : vector<32x32xf32>
    %241 = tpu.matmul %223, %93, %cst_99 {dimension_numbers = #tpu.dot_dimension_numbers<[1], [0], [0], [1], [0, 0, 1, 1], [], []>} : vector<32x32xf32>, vector<32x32xf32>, vector<32x32xf32> -> vector<32x32xf32>
    %242 = arith.addf %85, %241 : vector<32x32xf32>
    %243 = arith.negf %242 : vector<32x32xf32>
    %244 = math.exp %243 : vector<32x32xf32>
    %cst_100 = arith.constant 1.000000e+00 : f32
    %245 = vector.broadcast %cst_100 : f32 to vector<32x32xf32>
    %246 = arith.addf %245, %244 : vector<32x32xf32>
    %247 = arith.divf %245, %246 : vector<32x32xf32>
    %248 = arith.mulf %237, %221 : vector<32x32xf32>
    %249 = arith.mulf %230, %240 : vector<32x32xf32>
    %250 = arith.addf %248, %249 : vector<32x32xf32>
    %251 = math.tanh %250 : vector<32x32xf32>
    %252 = arith.mulf %247, %251 : vector<32x32xf32>
    %cst_101 = arith.constant dense<0.000000e+00> : vector<32x32xf32>
    %253 = tpu.matmul %252, %87, %cst_101 {dimension_numbers = #tpu.dot_dimension_numbers<[1], [0], [0], [1], [0, 0, 1, 1], [], []>} : vector<32x32xf32>, vector<32x32xf32>, vector<32x32xf32> -> vector<32x32xf32>
    %254 = arith.addf %64, %253 : vector<32x32xf32>
    %255 = arith.negf %254 : vector<32x32xf32>
    %256 = math.exp %255 : vector<32x32xf32>
    %cst_102 = arith.constant 1.000000e+00 : f32
    %257 = vector.broadcast %cst_102 : f32 to vector<32x32xf32>
    %258 = arith.addf %257, %256 : vector<32x32xf32>
    %259 = arith.divf %257, %258 : vector<32x32xf32>
    %cst_103 = arith.constant dense<0.000000e+00> : vector<32x32xf32>
    %260 = tpu.matmul %252, %89, %cst_103 {dimension_numbers = #tpu.dot_dimension_numbers<[1], [0], [0], [1], [0, 0, 1, 1], [], []>} : vector<32x32xf32>, vector<32x32xf32>, vector<32x32xf32> -> vector<32x32xf32>
    %261 = arith.addf %71, %260 : vector<32x32xf32>
    %262 = arith.negf %261 : vector<32x32xf32>
    %263 = math.exp %262 : vector<32x32xf32>
    %cst_104 = arith.constant 1.000000e+00 : f32
    %264 = vector.broadcast %cst_104 : f32 to vector<32x32xf32>
    %265 = arith.addf %264, %263 : vector<32x32xf32>
    %266 = arith.divf %264, %265 : vector<32x32xf32>
    %cst_105 = arith.constant dense<0.000000e+00> : vector<32x32xf32>
    %267 = tpu.matmul %252, %91, %cst_105 {dimension_numbers = #tpu.dot_dimension_numbers<[1], [0], [0], [1], [0, 0, 1, 1], [], []>} : vector<32x32xf32>, vector<32x32xf32>, vector<32x32xf32> -> vector<32x32xf32>
    %268 = arith.addf %78, %267 : vector<32x32xf32>
    %269 = math.tanh %268 : vector<32x32xf32>
    %cst_106 = arith.constant dense<0.000000e+00> : vector<32x32xf32>
    %270 = tpu.matmul %252, %93, %cst_106 {dimension_numbers = #tpu.dot_dimension_numbers<[1], [0], [0], [1], [0, 0, 1, 1], [], []>} : vector<32x32xf32>, vector<32x32xf32>, vector<32x32xf32> -> vector<32x32xf32>
    %271 = arith.addf %85, %270 : vector<32x32xf32>
    %272 = arith.negf %271 : vector<32x32xf32>
    %273 = math.exp %272 : vector<32x32xf32>
    %cst_107 = arith.constant 1.000000e+00 : f32
    %274 = vector.broadcast %cst_107 : f32 to vector<32x32xf32>
    %275 = arith.addf %274, %273 : vector<32x32xf32>
    %276 = arith.divf %274, %275 : vector<32x32xf32>
    %277 = arith.mulf %266, %250 : vector<32x32xf32>
    %278 = arith.mulf %259, %269 : vector<32x32xf32>
    %279 = arith.addf %277, %278 : vector<32x32xf32>
    %280 = math.tanh %279 : vector<32x32xf32>
    %281 = arith.mulf %276, %280 : vector<32x32xf32>
    %cst_108 = arith.constant dense<0.000000e+00> : vector<32x32xf32>
    %282 = tpu.matmul %281, %87, %cst_108 {dimension_numbers = #tpu.dot_dimension_numbers<[1], [0], [0], [1], [0, 0, 1, 1], [], []>} : vector<32x32xf32>, vector<32x32xf32>, vector<32x32xf32> -> vector<32x32xf32>
    %283 = arith.addf %64, %282 : vector<32x32xf32>
    %284 = arith.negf %283 : vector<32x32xf32>
    %285 = math.exp %284 : vector<32x32xf32>
    %cst_109 = arith.constant 1.000000e+00 : f32
    %286 = vector.broadcast %cst_109 : f32 to vector<32x32xf32>
    %287 = arith.addf %286, %285 : vector<32x32xf32>
    %288 = arith.divf %286, %287 : vector<32x32xf32>
    %cst_110 = arith.constant dense<0.000000e+00> : vector<32x32xf32>
    %289 = tpu.matmul %281, %89, %cst_110 {dimension_numbers = #tpu.dot_dimension_numbers<[1], [0], [0], [1], [0, 0, 1, 1], [], []>} : vector<32x32xf32>, vector<32x32xf32>, vector<32x32xf32> -> vector<32x32xf32>
    %290 = arith.addf %71, %289 : vector<32x32xf32>
    %291 = arith.negf %290 : vector<32x32xf32>
    %292 = math.exp %291 : vector<32x32xf32>
    %cst_111 = arith.constant 1.000000e+00 : f32
    %293 = vector.broadcast %cst_111 : f32 to vector<32x32xf32>
    %294 = arith.addf %293, %292 : vector<32x32xf32>
    %295 = arith.divf %293, %294 : vector<32x32xf32>
    %cst_112 = arith.constant dense<0.000000e+00> : vector<32x32xf32>
    %296 = tpu.matmul %281, %91, %cst_112 {dimension_numbers = #tpu.dot_dimension_numbers<[1], [0], [0], [1], [0, 0, 1, 1], [], []>} : vector<32x32xf32>, vector<32x32xf32>, vector<32x32xf32> -> vector<32x32xf32>
    %297 = arith.addf %78, %296 : vector<32x32xf32>
    %298 = math.tanh %297 : vector<32x32xf32>
    %cst_113 = arith.constant dense<0.000000e+00> : vector<32x32xf32>
    %299 = tpu.matmul %281, %93, %cst_113 {dimension_numbers = #tpu.dot_dimension_numbers<[1], [0], [0], [1], [0, 0, 1, 1], [], []>} : vector<32x32xf32>, vector<32x32xf32>, vector<32x32xf32> -> vector<32x32xf32>
    %300 = arith.addf %85, %299 : vector<32x32xf32>
    %301 = arith.negf %300 : vector<32x32xf32>
    %302 = math.exp %301 : vector<32x32xf32>
    %cst_114 = arith.constant 1.000000e+00 : f32
    %303 = vector.broadcast %cst_114 : f32 to vector<32x32xf32>
    %304 = arith.addf %303, %302 : vector<32x32xf32>
    %305 = arith.divf %303, %304 : vector<32x32xf32>
    %306 = arith.mulf %295, %279 : vector<32x32xf32>
    %307 = arith.mulf %288, %298 : vector<32x32xf32>
    %308 = arith.addf %306, %307 : vector<32x32xf32>
    %309 = math.tanh %308 : vector<32x32xf32>
    %310 = arith.mulf %305, %309 : vector<32x32xf32>
    %311 = tpu.transpose %310, [1, 0] : vector<32x32xf32> -> vector<32x32xf32>
    %c0_115 = arith.constant 0 : index
    %c0_116 = arith.constant 0 : index
    %312 = vector.load %arg11[%c0_115, %c0_116] : memref<32x1xf32, #tpu.memory_space<vmem>>, vector<32x1xf32>
    %313 = vector.broadcast %312 : vector<32x1xf32> to vector<32x32xf32>
    %314 = arith.mulf %311, %313 : vector<32x32xf32>
    %cst_117 = arith.constant dense<0.000000e+00> : vector<32xf32>
    %315 = vector.multi_reduction <add>, %314, %cst_117 [0] : vector<32x32xf32> to vector<32xf32>
    %316 = vector.shape_cast %315 : vector<32xf32> to vector<1x32xf32>
    %c0_118 = arith.constant 0 : index
    %c0_119 = arith.constant 0 : index
    %317 = vector.load %arg12[%c0_118, %c0_119] : memref<1x1xf32, #tpu.memory_space<vmem>>, vector<1x1xf32>
    %318 = vector.broadcast %317 : vector<1x1xf32> to vector<1x32xf32>
    %319 = arith.addf %316, %318 : vector<1x32xf32>
    %c0_120 = arith.constant 0 : index
    %c0_121 = arith.constant 0 : index
    %320 = vector.load %arg13[%c0_120, %c0_121] : memref<1x32xf32, #tpu.memory_space<vmem>>, vector<1x32xf32>
    tpu.vector_store %arg13[%c0_120, %c0_121], %319 {strides = array<i32>} : memref<1x32xf32, #tpu.memory_space<vmem>>, vector<1x32xf32>,
    return
  }
  func.func @transform_0(%arg0: i32) -> (i32, i32) {
    %c0_i32 = arith.constant 0 : i32
    %c0_i32_0 = arith.constant 0 : i32
    return %arg0, %c0_i32 : i32, i32
  }
  func.func @transform_1(%arg0: i32) -> (i32, i32) {
    %c0_i32 = arith.constant 0 : i32
    %c0_i32_0 = arith.constant 0 : i32
    %c0_i32_1 = arith.constant 0 : i32
    return %c0_i32, %c0_i32_0 : i32, i32
  }
  func.func @transform_2(%arg0: i32) -> (i32, i32) {
    %c0_i32 = arith.constant 0 : i32
    %c0_i32_0 = arith.constant 0 : i32
    %c0_i32_1 = arith.constant 0 : i32
    return %c0_i32, %c0_i32_0 : i32, i32
  }
  func.func @transform_3(%arg0: i32) -> (i32, i32) {
    %c0_i32 = arith.constant 0 : i32
    %c0_i32_0 = arith.constant 0 : i32
    %c0_i32_1 = arith.constant 0 : i32
    return %c0_i32, %c0_i32_0 : i32, i32
  }
  func.func @transform_4(%arg0: i32) -> (i32, i32) {
    %c0_i32 = arith.constant 0 : i32
    %c0_i32_0 = arith.constant 0 : i32
    %c0_i32_1 = arith.constant 0 : i32
    return %c0_i32, %c0_i32_0 : i32, i32
  }
  func.func @transform_5(%arg0: i32) -> (i32, i32) {
    %c0_i32 = arith.constant 0 : i32
    %c0_i32_0 = arith.constant 0 : i32
    %c0_i32_1 = arith.constant 0 : i32
    return %c0_i32, %c0_i32_0 : i32, i32
  }
  func.func @transform_6(%arg0: i32) -> (i32, i32) {
    %c0_i32 = arith.constant 0 : i32
    %c0_i32_0 = arith.constant 0 : i32
    %c0_i32_1 = arith.constant 0 : i32
    return %c0_i32, %c0_i32_0 : i32, i32
  }
  func.func @transform_7(%arg0: i32) -> (i32, i32, i32) {
    %c0_i32 = arith.constant 0 : i32
    %c0_i32_0 = arith.constant 0 : i32
    %c0_i32_1 = arith.constant 0 : i32
    %c0_i32_2 = arith.constant 0 : i32
    return %c0_i32, %c0_i32_0, %c0_i32_1 : i32, i32, i32
  }
  func.func @transform_8(%arg0: i32) -> (i32, i32, i32) {
    %c0_i32 = arith.constant 0 : i32
    %c0_i32_0 = arith.constant 0 : i32
    %c0_i32_1 = arith.constant 0 : i32
    %c0_i32_2 = arith.constant 0 : i32
    return %c0_i32, %c0_i32_0, %c0_i32_1 : i32, i32, i32
  }
  func.func @transform_9(%arg0: i32) -> (i32, i32, i32) {
    %c0_i32 = arith.constant 0 : i32
    %c0_i32_0 = arith.constant 0 : i32
    %c0_i32_1 = arith.constant 0 : i32
    %c0_i32_2 = arith.constant 0 : i32
    return %c0_i32, %c0_i32_0, %c0_i32_1 : i32, i32, i32
  }
  func.func @transform_10(%arg0: i32) -> (i32, i32) {
    %c0_i32 = arith.constant 0 : i32
    %c0_i32_0 = arith.constant 0 : i32
    %c0_i32_1 = arith.constant 0 : i32
    return %c0_i32, %c0_i32_0 : i32, i32
  }
  func.func @transform_11(%arg0: i32) -> (i32, i32) {
    %c0_i32 = arith.constant 0 : i32
    %c0_i32_0 = arith.constant 0 : i32
    %c0_i32_1 = arith.constant 0 : i32
    return %c0_i32, %c0_i32_0 : i32, i32
  }
  func.func @transform_12(%arg0: i32) -> (i32, i32) {
    %c0_i32 = arith.constant 0 : i32
    %c0_i32_0 = arith.constant 0 : i32
    return %arg0, %c0_i32 : i32, i32
  }
}

</mosaic_0001>

<llo_original>
// kernel: tpu_custom_call.1
$region0: #{tpu_custom_call.1}
  #allocation0 [shape = 'u32[]', space=smem, size = 0x4, offset = 0x4, fixed_abs, tag = 'smem constant byte address 0x4 - core index']
  #allocation1 [shape = 'u32[144,128]{1,0:T(1,128)}', space=vmem, size = 0x12000, scoped, tag = 'internal scratch']
  #allocation2 [shape = 'f32[1,1]{1,0:T(1,128)S(1)}', space=vmem, size = 0x200, scoped, tag = 'scoped memory for tpu_custom_call.1']
  %s0 = inlined_call_operand.vmem [shape: f32[32,4], index: 0, kind: input, shape index: {}]
  %s1 = inlined_call_operand.hbm [shape: f32[32,32], index: 1, kind: input, shape index: {}]
  %s2 = inlined_call_operand.vmem [shape: f32[4,16], index: 2, kind: input, shape index: {}]
  %s3 = inlined_call_operand.vmem [shape: f32[16,2], index: 3, kind: input, shape index: {}]
  %s4 = inlined_call_operand.vmem [shape: f32[16,2], index: 4, kind: input, shape index: {}]
  %s5 = inlined_call_operand.vmem [shape: f32[1,16], index: 5, kind: input, shape index: {}]
  %s6 = inlined_call_operand.vmem [shape: f32[2,16], index: 6, kind: input, shape index: {}]
  %s7 = inlined_call_operand.hbm [shape: f32[4,16,32], index: 7, kind: input, shape index: {}]
  %s8 = inlined_call_operand.vmem [shape: f32[4,32,32], index: 8, kind: input, shape index: {}]
  %s9 = inlined_call_operand.vmem [shape: f32[4,1,32], index: 9, kind: input, shape index: {}]
  %s10 = inlined_call_operand.vmem [shape: f32[32,1], index: 10, kind: input, shape index: {}]
  %s11 = inlined_call_operand.<no memory space> [shape: f32[1,1], index: 11, kind: input, shape index: {}]
  %s12 = inlined_call_operand.hbm [shape: f32[1,32], index: 12, kind: output, shape index: {}]
  %s13 = sld [smem:[#allocation0]]
  $region66: #{tpu_custom_call.1} parent=0
    _
  %s15 = ssub.s32 1, %s13
  %s16 = scalar_select 0, %s15, %s13
  %v17 = vstv %s11
  %18 = vst [vmem:[#allocation2] sm:$0x1] %v17
  $region1: #{tpu_custom_call.1} parent=0
    #allocation3 [shape = 'u8[16384]{0}', space=vmem, size = 0x4000, scoped, tag = 'input window, operand 1, single buffered']
    #allocation4 [shape = 's32[1]{0}', space=sflag, size = 0x4, scoped, tag = 'scoped memory for tpu_custom_call.1']
    #allocation5 [shape = 's32[1]{0}', space=sflag, size = 0x4, scoped, tag = 'scoped memory for tpu_custom_call.1']
    #allocation6 [shape = 'u8[32768]{0}', space=vmem, size = 0x8000, scoped, tag = 'input window, operand 7, single buffered']
    #allocation7 [shape = 's32[1]{0}', space=sflag, size = 0x4, scoped, tag = 'scoped memory for tpu_custom_call.1']
    #allocation8 [shape = 'u8[512]{0}', space=vmem, size = 0x400, scoped, tag = 'output window, operand 0, single buffered']
    %19 = vsyncpa [#allocation4], 0
    %20 = vsyncpa [#allocation7], 0
    %21 = vsyncpa [#allocation5], 0
    // Predicated region
    $region2: #{tpu_custom_call.1} parent=1 // pred_check
      _
    $region3: #{tpu_custom_call.1} parent=1 // pred_check_branch
      %23 = sbr.rel (0) target = $region5
    $region4: #{tpu_custom_call.1} parent=1 // pred_region
      _
    $region5: #{tpu_custom_call.1} parent=1 // pred_fallthru
      _
    // Predicated region
    $region6: #{tpu_custom_call.1} parent=1 // pred_check
      _
    $region7: #{tpu_custom_call.1} parent=1 // pred_check_branch
      %25 = sbr.rel (0) target = $region9
    $region8: #{tpu_custom_call.1} parent=1 // pred_region
      %s27 = ssub.s32 512, 512
      %28 = vsyncadd [#allocation4], %s27
      %s29 = sshll.u32 [#allocation3], 4
      %s30 = int_to_ptr.vmem [resolvable:$true] %s29
      %35 = dma.hbm_to_vmem [thread:$0]  %s1, 512, %s30, [#allocation4], 128, 128, 8
    $region9: #{tpu_custom_call.1} parent=1 // pred_fallthru
      _
    // Predicated region
    $region10: #{tpu_custom_call.1} parent=1 // pred_check
      _
    $region11: #{tpu_custom_call.1} parent=1 // pred_check_branch
      %37 = sbr.rel (0) target = $region13
    $region12: #{tpu_custom_call.1} parent=1 // pred_region
      _
    $region13: #{tpu_custom_call.1} parent=1 // pred_fallthru
      _
    // Predicated region
    $region14: #{tpu_custom_call.1} parent=1 // pred_check
      _
    $region15: #{tpu_custom_call.1} parent=1 // pred_check_branch
      %39 = sbr.rel (0) target = $region17
    $region16: #{tpu_custom_call.1} parent=1 // pred_region
      _
    $region17: #{tpu_custom_call.1} parent=1 // pred_fallthru
      _
    // Predicated region
    $region18: #{tpu_custom_call.1} parent=1 // pred_check
      _
    $region19: #{tpu_custom_call.1} parent=1 // pred_check_branch
      %41 = sbr.rel (0) target = $region21
    $region20: #{tpu_custom_call.1} parent=1 // pred_region
      _
    $region21: #{tpu_custom_call.1} parent=1 // pred_fallthru
      _
    // Predicated region
    $region22: #{tpu_custom_call.1} parent=1 // pred_check
      _
    $region23: #{tpu_custom_call.1} parent=1 // pred_check_branch
      %43 = sbr.rel (0) target = $region25
    $region24: #{tpu_custom_call.1} parent=1 // pred_region
      _
    $region25: #{tpu_custom_call.1} parent=1 // pred_fallthru
      _
    // Predicated region
    $region26: #{tpu_custom_call.1} parent=1 // pred_check
      _
    $region27: #{tpu_custom_call.1} parent=1 // pred_check_branch
      %45 = sbr.rel (0) target = $region29
    $region28: #{tpu_custom_call.1} parent=1 // pred_region
      _
    $region29: #{tpu_custom_call.1} parent=1 // pred_fallthru
      _
    // Predicated region
    $region30: #{tpu_custom_call.1} parent=1 // pred_check
      _
    $region31: #{tpu_custom_call.1} parent=1 // pred_check_branch
      %47 = sbr.rel (0) target = $region33
    $region32: #{tpu_custom_call.1} parent=1 // pred_region
      %s49 = ssub.s32 1024, 1024
      %50 = vsyncadd [#allocation7], %s49
      %s51 = sshll.u32 [#allocation6], 4
      %s52 = int_to_ptr.vmem [resolvable:$true] %s51
      %57 = dma.hbm_to_vmem [thread:$0]  %s7, 1024, %s52, [#allocation7], 128, 128, 8
    $region33: #{tpu_custom_call.1} parent=1 // pred_fallthru
      _
    // Predicated region
    $region34: #{tpu_custom_call.1} parent=1 // pred_check
      _
    $region35: #{tpu_custom_call.1} parent=1 // pred_check_branch
      %59 = sbr.rel (0) target = $region37
    $region36: #{tpu_custom_call.1} parent=1 // pred_region
      _
    $region37: #{tpu_custom_call.1} parent=1 // pred_fallthru
      _
    // Predicated region
    $region38: #{tpu_custom_call.1} parent=1 // pred_check
      _
    $region39: #{tpu_custom_call.1} parent=1 // pred_check_branch
      %61 = sbr.rel (0) target = $region41
    $region40: #{tpu_custom_call.1} parent=1 // pred_region
      _
    $region41: #{tpu_custom_call.1} parent=1 // pred_fallthru
      _
    // Predicated region
    $region42: #{tpu_custom_call.1} parent=1 // pred_check
      _
    $region43: #{tpu_custom_call.1} parent=1 // pred_check_branch
      %63 = sbr.rel (0) target = $region45
    $region44: #{tpu_custom_call.1} parent=1 // pred_region
      _
    $region45: #{tpu_custom_call.1} parent=1 // pred_fallthru
      _
    // Predicated region
    $region46: #{tpu_custom_call.1} parent=1 // pred_check
      _
    $region47: #{tpu_custom_call.1} parent=1 // pred_check_branch
      %65 = sbr.rel (0) target = $region49
    $region48: #{tpu_custom_call.1} parent=1 // pred_region
      _
    $region49: #{tpu_custom_call.1} parent=1 // pred_fallthru
      _
    // Predicated region
    $region50: #{tpu_custom_call.1} parent=1 // pred_check
      _
    $region51: #{tpu_custom_call.1} parent=1 // pred_check_branch
      %67 = sbr.rel (0) target = $region53
    $region52: #{tpu_custom_call.1} parent=1 // pred_region
      %68 = dma.done [#allocation4], 512
    $region53: #{tpu_custom_call.1} parent=1 // pred_fallthru
      _
    // Predicated region
    $region54: #{tpu_custom_call.1} parent=1 // pred_check
      _
    $region55: #{tpu_custom_call.1} parent=1 // pred_check_branch
      %70 = sbr.rel (0) target = $region57
    $region56: #{tpu_custom_call.1} parent=1 // pred_region
      %71 = dma.done [#allocation7], 1024
    $region57: #{tpu_custom_call.1} parent=1 // pred_fallthru
      _
    %v72 = vld [vmem:[%s0] sm:$0xff]
    %v73 = vld [vmem:[%s0 + $0x8] sm:$0xff]
    %v74 = vld [vmem:[%s0 + $0x10] sm:$0xff]
    %v75 = vld [vmem:[%s0 + $0x18] sm:$0xff]
    %v76 = vld [vmem:[%s2] sm:$0xf]
    %vm77 = vcmask 31744
    %v79 = vsel %vm77, %v72, 0
    %v82 = vsel %vm77, %v73, 0
    %v85 = vsel %vm77, %v74, 0
    %v88 = vsel %vm77, %v75, 0
    %vm90 = vcmask 1043456
    %v92 = vsel %vm90, %v76, 0
    %94 = vmatprep.subr.mxu0 0.0
    %95 = vmatpush1.msra.mxu0 %v92
    %96 = vmatprep.subr.mxu0 0.0
    %97 = vmatpush1.msra.mxu0 0.0
    %98 = vmatprep.subr.mxu0 0.0
    %99 = vmatpush1.msra.mxu0 0.0
    %100 = vmatprep.subr.mxu0 0.0
    %101 = vmatpush1.msra.mxu0 0.0
    %102 = vmatprep.subr.mxu0 0.0
    %103 = vmatpush1.msra.mxu0 0.0
    %104 = vmatprep.subr.mxu0 0.0
    %105 = vmatpush1.msra.mxu0 0.0
    %106 = vmatprep.subr.mxu0 0.0
    %107 = vmatpush1.msra.mxu0 0.0
    %108 = vmatprep.subr.mxu0 0.0
    %109 = vmatpush1.msra.mxu0 0.0
    %110 = vmatprep.subr.mxu0 0.0
    %111 = vmatpush1.msra.mxu0 0.0
    %112 = vmatprep.subr.mxu0 0.0
    %113 = vmatpush1.msra.mxu0 0.0
    %114 = vmatprep.subr.mxu0 0.0
    %115 = vmatpush1.msra.mxu0 0.0
    %116 = vmatprep.subr.mxu0 0.0
    %117 = vmatpush1.msra.mxu0 0.0
    %118 = vmatprep.subr.mxu0 0.0
    %119 = vmatpush1.msra.mxu0 0.0
    %120 = vmatprep.subr.mxu0 0.0
    %121 = vmatpush1.msra.mxu0 0.0
    %122 = vmatprep.subr.mxu0 0.0
    %123 = vmatpush1.msra.mxu0 0.0
    %124 = vmatprep.subr.mxu0 0.0
    %125 = vmatpush1.msra.mxu0 0.0
    %126 = vmatprep.subr.mxu0 0.0
    %127 = vmatpush1.msra.mxu0 0.0
    %128 = vmatprep.subr.mxu0 0.0
    %129 = vmatpush1.msra.mxu0 0.0
    %130 = vmatprep.subr.mxu0 0.0
    %131 = vmatpush1.msra.mxu0 0.0
    %132 = vmatprep.subr.mxu0 0.0
    %133 = vmatpush1.msra.mxu0 0.0
    %134 = vmatprep.subr.mxu0 0.0
    %135 = vmatpush1.msra.mxu0 0.0
    %136 = vmatprep.subr.mxu0 0.0
    %137 = vmatpush1.msra.mxu0 0.0
    %138 = vmatprep.subr.mxu0 0.0
    %139 = vmatpush1.msra.mxu0 0.0
    %140 = vmatprep.subr.mxu0 0.0
    %141 = vmatpush1.msra.mxu0 0.0
    %142 = vmatprep.subr.mxu0 0.0
    %143 = vmatpush1.msra.mxu0 0.0
    %144 = vmatprep.subr.mxu0 0.0
    %145 = vmatpush1.msra.mxu0 0.0
    %146 = vmatprep.subr.mxu0 0.0
    %147 = vmatpush1.msra.mxu0 0.0
    %148 = vmatprep.subr.mxu0 0.0
    %149 = vmatpush1.msra.mxu0 0.0
    %150 = vmatprep.subr.mxu0 0.0
    %151 = vmatpush1.msra.mxu0 0.0
    %152 = vmatprep.subr.mxu0 0.0
    %153 = vmatpush1.msra.mxu0 0.0
    %154 = vmatprep.subr.mxu0 0.0
    %155 = vmatpush1.msra.mxu0 0.0
    %156 = vmatprep.subr.mxu0 0.0
    %157 = vmatpush1.msra.mxu0 0.0
    %158 = vmatprep.mubr.f32.mxu0 0.0
    %159 = vmatmul.mubr.f32.gmra.mrb[0].mxu0 %v79
    %v160 = vpop.f32.mrb[0].mxu0
    %v161 = vadd.f32 0.0, %v160
    %v162 = vpop.f32.mrb[0].mxu0
    %163 = vmatprep.mubr.f32.mxu0 0.0
    %164 = vmatmul.mubr.f32.gmra.mrb[0].mxu0 %v82
    %v165 = vpop.f32.mrb[0].mxu0
    %v166 = vadd.f32 0.0, %v165
    %v167 = vpop.f32.mrb[0].mxu0
    %168 = vmatprep.mubr.f32.mxu0 0.0
    %169 = vmatmul.mubr.f32.gmra.mrb[0].mxu0 %v85
    %v170 = vpop.f32.mrb[0].mxu0
    %v171 = vadd.f32 0.0, %v170
    %v172 = vpop.f32.mrb[0].mxu0
    %173 = vmatprep.mubr.f32.mxu0 0.0
    %174 = vmatmul.mubr.f32.gmra.mrb[0].mxu0 %v88
    %v175 = vpop.f32.mrb[0].mxu0
    %v176 = vadd.f32 0.0, %v175
    %v177 = vpop.f32.mrb[0].mxu0
    %178 = vdwg.mxu0
    %v179 = vld [vmem:[%s3] sm:$0xff]
    %v180 = vld [vmem:[%s3 + $0x8] sm:$0xff]
    %vm181 = vcmask 130048
    %v183 = vsel %vm181, %v161, 0
    %v186 = vsel %vm181, %v166, 0
    %v189 = vsel %vm181, %v171, 0
    %v192 = vsel %vm181, %v176, 0
    %194 = vmatprep.subr.mxu0 0.0
    %195 = vmatpush1.msra.mxu0 %v179
    %196 = vmatprep.subr.mxu0 0.0
    %197 = vmatpush1.msra.mxu0 %v180
    %198 = vmatprep.subr.mxu0 0.0
    %199 = vmatpush1.msra.mxu0 0.0
    %200 = vmatprep.subr.mxu0 0.0
    %201 = vmatpush1.msra.mxu0 0.0
    %202 = vmatprep.subr.mxu0 0.0
    %203 = vmatpush1.msra.mxu0 0.0
    %204 = vmatprep.subr.mxu0 0.0
    %205 = vmatpush1.msra.mxu0 0.0
    %206 = vmatprep.subr.mxu0 0.0
    %207 = vmatpush1.msra.mxu0 0.0
    %208 = vmatprep.subr.mxu0 0.0
    %209 = vmatpush1.msra.mxu0 0.0
    %210 = vmatprep.subr.mxu0 0.0
    %211 = vmatpush1.msra.mxu0 0.0
    %212 = vmatprep.subr.mxu0 0.0
    %213 = vmatpush1.msra.mxu0 0.0
    %214 = vmatprep.subr.mxu0 0.0
    %215 = vmatpush1.msra.mxu0 0.0
    %216 = vmatprep.subr.mxu0 0.0
    %217 = vmatpush1.msra.mxu0 0.0
    %218 = vmatprep.subr.mxu0 0.0
    %219 = vmatpush1.msra.mxu0 0.0
    %220 = vmatprep.subr.mxu0 0.0
    %221 = vmatpush1.msra.mxu0 0.0
    %222 = vmatprep.subr.mxu0 0.0
    %223 = vmatpush1.msra.mxu0 0.0
    %224 = vmatprep.subr.mxu0 0.0
    %225 = vmatpush1.msra.mxu0 0.0
    %226 = vmatprep.subr.mxu0 0.0
    %227 = vmatpush1.msra.mxu0 0.0
    %228 = vmatprep.subr.mxu0 0.0
    %229 = vmatpush1.msra.mxu0 0.0
    %230 = vmatprep.subr.mxu0 0.0
    %231 = vmatpush1.msra.mxu0 0.0
    %232 = vmatprep.subr.mxu0 0.0
    %233 = vmatpush1.msra.mxu0 0.0
    %234 = vmatprep.subr.mxu0 0.0
    %235 = vmatpush1.msra.mxu0 0.0
    %236 = vmatprep.subr.mxu0 0.0
    %237 = vmatpush1.msra.mxu0 0.0
    %238 = vmatprep.subr.mxu0 0.0
    %239 = vmatpush1.msra.mxu0 0.0
    %240 = vmatprep.subr.mxu0 0.0
    %241 = vmatpush1.msra.mxu0 0.0
    %242 = vmatprep.subr.mxu0 0.0
    %243 = vmatpush1.msra.mxu0 0.0
    %244 = vmatprep.subr.mxu0 0.0
    %245 = vmatpush1.msra.mxu0 0.0
    %246 = vmatprep.subr.mxu0 0.0
    %247 = vmatpush1.msra.mxu0 0.0
    %248 = vmatprep.subr.mxu0 0.0
    %249 = vmatpush1.msra.mxu0 0.0
    %250 = vmatprep.subr.mxu0 0.0
    %251 = vmatpush1.msra.mxu0 0.0
    %252 = vmatprep.subr.mxu0 0.0
    %253 = vmatpush1.msra.mxu0 0.0
    %254 = vmatprep.subr.mxu0 0.0
    %255 = vmatpush1.msra.mxu0 0.0
    %256 = vmatprep.subr.mxu0 0.0
    %257 = vmatpush1.msra.mxu0 0.0
    %258 = vmatprep.mubr.f32.mxu0 0.0
    %259 = vmatmul.mubr.f32.gmra.mrb[0].mxu0 %v183
    %v260 = vpop.f32.mrb[0].mxu0
    %v261 = vadd.f32 0.0, %v260
    %v262 = vpop.f32.mrb[0].mxu0
    %263 = vmatprep.mubr.f32.mxu0 0.0
    %264 = vmatmul.mubr.f32.gmra.mrb[0].mxu0 %v186
    %v265 = vpop.f32.mrb[0].mxu0
    %v266 = vadd.f32 0.0, %v265
    %v267 = vpop.f32.mrb[0].mxu0
    %268 = vmatprep.mubr.f32.mxu0 0.0
    %269 = vmatmul.mubr.f32.gmra.mrb[0].mxu0 %v189
    %v270 = vpop.f32.mrb[0].mxu0
    %v271 = vadd.f32 0.0, %v270
    %v272 = vpop.f32.mrb[0].mxu0
    %273 = vmatprep.mubr.f32.mxu0 0.0
    %274 = vmatmul.mubr.f32.gmra.mrb[0].mxu0 %v192
    %v275 = vpop.f32.mrb[0].mxu0
    %v276 = vadd.f32 0.0, %v275
    %v277 = vpop.f32.mrb[0].mxu0
    %278 = vdwg.mxu0
    %v279 = vld [vmem:[%s4] sm:$0xff]
    %v280 = vld [vmem:[%s4 + $0x8] sm:$0xff]
    %281 = vmatprep.subr.mxu0 0.0
    %282 = vmatpush1.msra.mxu0 %v279
    %283 = vmatprep.subr.mxu0 0.0
    %284 = vmatpush1.msra.mxu0 %v280
    %285 = vmatprep.subr.mxu0 0.0
    %286 = vmatpush1.msra.mxu0 0.0
    %287 = vmatprep.subr.mxu0 0.0
    %288 = vmatpush1.msra.mxu0 0.0
    %289 = vmatprep.subr.mxu0 0.0
    %290 = vmatpush1.msra.mxu0 0.0
    %291 = vmatprep.subr.mxu0 0.0
    %292 = vmatpush1.msra.mxu0 0.0
    %293 = vmatprep.subr.mxu0 0.0
    %294 = vmatpush1.msra.mxu0 0.0
    %295 = vmatprep.subr.mxu0 0.0
    %296 = vmatpush1.msra.mxu0 0.0
    %297 = vmatprep.subr.mxu0 0.0
    %298 = vmatpush1.msra.mxu0 0.0
    %299 = vmatprep.subr.mxu0 0.0
    %300 = vmatpush1.msra.mxu0 0.0
    %301 = vmatprep.subr.mxu0 0.0
    %302 = vmatpush1.msra.mxu0 0.0
    %303 = vmatprep.subr.mxu0 0.0
    %304 = vmatpush1.msra.mxu0 0.0
    %305 = vmatprep.subr.mxu0 0.0
    %306 = vmatpush1.msra.mxu0 0.0
    %307 = vmatprep.subr.mxu0 0.0
    %308 = vmatpush1.msra.mxu0 0.0
    %309 = vmatprep.subr.mxu0 0.0
    %310 = vmatpush1.msra.mxu0 0.0
    %311 = vmatprep.subr.mxu0 0.0
    %312 = vmatpush1.msra.mxu0 0.0
    %313 = vmatprep.subr.mxu0 0.0
    %314 = vmatpush1.msra.mxu0 0.0
    %315 = vmatprep.subr.mxu0 0.0
    %316 = vmatpush1.msra.mxu0 0.0
    %317 = vmatprep.subr.mxu0 0.0
    %318 = vmatpush1.msra.mxu0 0.0
    %319 = vmatprep.subr.mxu0 0.0
    %320 = vmatpush1.msra.mxu0 0.0
    %321 = vmatprep.subr.mxu0 0.0
    %322 = vmatpush1.msra.mxu0 0.0
    %323 = vmatprep.subr.mxu0 0.0
    %324 = vmatpush1.msra.mxu0 0.0
    %325 = vmatprep.subr.mxu0 0.0
    %326 = vmatpush1.msra.mxu0 0.0
    %327 = vmatprep.subr.mxu0 0.0
    %328 = vmatpush1.msra.mxu0 0.0
    %329 = vmatprep.subr.mxu0 0.0
    %330 = vmatpush1.msra.mxu0 0.0
    %331 = vmatprep.subr.mxu0 0.0
    %332 = vmatpush1.msra.mxu0 0.0
    %333 = vmatprep.subr.mxu0 0.0
    %334 = vmatpush1.msra.mxu0 0.0
    %335 = vmatprep.subr.mxu0 0.0
    %336 = vmatpush1.msra.mxu0 0.0
    %337 = vmatprep.subr.mxu0 0.0
    %338 = vmatpush1.msra.mxu0 0.0
    %339 = vmatprep.subr.mxu0 0.0
    %340 = vmatpush1.msra.mxu0 0.0
    %341 = vmatprep.subr.mxu0 0.0
    %342 = vmatpush1.msra.mxu0 0.0
    %343 = vmatprep.subr.mxu0 0.0
    %344 = vmatpush1.msra.mxu0 0.0
    %345 = vmatprep.mubr.f32.mxu0 0.0
    %346 = vmatmul.mubr.f32.gmra.mrb[0].mxu0 %v183
    %v347 = vpop.f32.mrb[0].mxu0
    %v348 = vadd.f32 0.0, %v347
    %v349 = vpop.f32.mrb[0].mxu0
    %350 = vmatprep.mubr.f32.mxu0 0.0
    %351 = vmatmul.mubr.f32.gmra.mrb[0].mxu0 %v186
    %v352 = vpop.f32.mrb[0].mxu0
    %v353 = vadd.f32 0.0, %v352
    %v354 = vpop.f32.mrb[0].mxu0
    %355 = vmatprep.mubr.f32.mxu0 0.0
    %356 = vmatmul.mubr.f32.gmra.mrb[0].mxu0 %v189
    %v357 = vpop.f32.mrb[0].mxu0
    %v358 = vadd.f32 0.0, %v357
    %v359 = vpop.f32.mrb[0].mxu0
    %360 = vmatprep.mubr.f32.mxu0 0.0
    %361 = vmatmul.mubr.f32.gmra.mrb[0].mxu0 %v192
    %v362 = vpop.f32.mrb[0].mxu0
    %v363 = vadd.f32 0.0, %v362
    %v364 = vpop.f32.mrb[0].mxu0
    %365 = vdwg.mxu0
    %366 = vxpose.xlu0.b32.start [1/16] %v261, 128
    %367 = vxpose.xlu0.b32.cont [2/16] %v266, 128
    %368 = vxpose.xlu0.b32.cont [3/16] %v271, 128
    %369 = vxpose.xlu0.b32.cont [4/16] %v276, 128
    %370 = vxpose.xlu0.b32.cont [5/16] 0.0, 128
    %371 = vxpose.xlu0.b32.cont [6/16] 0.0, 128
    %372 = vxpose.xlu0.b32.cont [7/16] 0.0, 128
    %373 = vxpose.xlu0.b32.cont [8/16] 0.0, 128
    %374 = vxpose.xlu0.b32.cont [9/16] 0.0, 128
    %375 = vxpose.xlu0.b32.cont [10/16] 0.0, 128
    %376 = vxpose.xlu0.b32.cont [11/16] 0.0, 128
    %377 = vxpose.xlu0.b32.cont [12/16] 0.0, 128
    %378 = vxpose.xlu0.b32.cont [13/16] 0.0, 128
    %379 = vxpose.xlu0.b32.cont [14/16] 0.0, 128
    %380 = vxpose.xlu0.b32.cont [15/16] 0.0, 128
    %381 = vxpose.xlu0.b32.end [16/16] 0.0, 128
    %v382 = vpop.trf.xlu0
    %v383 = vpop.trf.xlu0
    %v384 = vpop.trf.xlu0
    %v385 = vpop.trf.xlu0
    %v386 = vpop.trf.xlu0
    %v387 = vpop.trf.xlu0
    %v388 = vpop.trf.xlu0
    %v389 = vpop.trf.xlu0
    %v390 = vpop.trf.xlu0
    %v391 = vpop.trf.xlu0
    %v392 = vpop.trf.xlu0
    %v393 = vpop.trf.xlu0
    %v394 = vpop.trf.xlu0
    %v395 = vpop.trf.xlu0
    %v396 = vpop.trf.xlu0
    %v397 = vpop.trf.xlu0
    %v398 = vld [vmem:[#allocation3] sm:$0xff]
    %v399 = vld [vmem:[#allocation3 + $0x8] sm:$0xff]
    %v400 = vld [vmem:[#allocation3 + $0x10] sm:$0xff]
    %v401 = vld [vmem:[#allocation3 + $0x18] sm:$0xff]
    %vm402 = vcmp.gt.f32.partialorder %v398, 0.0
    %vm403 = vcmp.gt.f32.partialorder %v399, 0.0
    %vm404 = vcmp.gt.f32.partialorder %v400, 0.0
    %vm405 = vcmp.gt.f32.partialorder %v401, 0.0
    %407 = vset.pattern.permute.xlu0 0
    %408 = vperm.xlu0 %407, %v348
    %v409 = vpop.permute.xlu0 %408
    %412 = vset.pattern.permute.xlu0 0
    %413 = vperm.xlu0 %412, %v353
    %v414 = vpop.permute.xlu0 %413
    %417 = vset.pattern.permute.xlu0 0
    %418 = vperm.xlu0 %417, %v358
    %v419 = vpop.permute.xlu0 %418
    %422 = vset.pattern.permute.xlu0 0
    %423 = vperm.xlu0 %422, %v363
    %v424 = vpop.permute.xlu0 %423
    %v426 = vlaneseq
    %v427 = vshrl.u32 %v426, 7
    %v428 = vsub.s32 0, %v427
    %v429 = vrot.slane %v382, %v428
    %v430 = vadd.f32 %v409, %v429
    %v431 = vadd.f32 %v414, %v429
    %v432 = vadd.f32 %v419, %v429
    %v433 = vadd.f32 %v424, %v429
    %vm434 = vcmp.gt.f32.partialorder %v430, 0.0
    %vm435 = vcmp.gt.f32.partialorder %v431, 0.0
    %vm436 = vcmp.gt.f32.partialorder %v432, 0.0
    %vm437 = vcmp.gt.f32.partialorder %v433, 0.0
    %v438 = vmul.f32 %v430, 0.2
    %v439 = vmul.f32 %v431, 0.2
    %v440 = vmul.f32 %v432, 0.2
    %v441 = vmul.f32 %v433, 0.2
    %v442 = vsel %vm434, %v430, %v438
    %v443 = vsel %vm435, %v431, %v439
    %v444 = vsel %vm436, %v432, %v440
    %v445 = vsel %vm437, %v433, %v441
    %v446 = vsel %vm402, %v442, -1e+30
    %v447 = vsel %vm403, %v443, -1e+30
    %v448 = vsel %vm404, %v444, -1e+30
    %v449 = vsel %vm405, %v445, -1e+30
    %450 = vset.pattern.permute.xlu0 1
    %451 = vperm.xlu0 %450, %v348
    %v452 = vpop.permute.xlu0 %451
    %454 = vset.pattern.permute.xlu0 1
    %455 = vperm.xlu0 %454, %v353
    %v456 = vpop.permute.xlu0 %455
    %458 = vset.pattern.permute.xlu0 1
    %459 = vperm.xlu0 %458, %v358
    %v460 = vpop.permute.xlu0 %459
    %462 = vset.pattern.permute.xlu0 1
    %463 = vperm.xlu0 %462, %v363
    %v464 = vpop.permute.xlu0 %463
    %v466 = vlaneseq
    %v467 = vshrl.u32 %v466, 7
    %v468 = vsub.s32 1, %v467
    %v469 = vrot.slane %v382, %v468
    %v470 = vadd.f32 %v452, %v469
    %v471 = vadd.f32 %v456, %v469
    %v472 = vadd.f32 %v460, %v469
    %v473 = vadd.f32 %v464, %v469
    %vm474 = vcmp.gt.f32.partialorder %v470, 0.0
    %vm475 = vcmp.gt.f32.partialorder %v471, 0.0
    %vm476 = vcmp.gt.f32.partialorder %v472, 0.0
    %vm477 = vcmp.gt.f32.partialorder %v473, 0.0
    %v478 = vmul.f32 %v470, 0.2
    %v479 = vmul.f32 %v471, 0.2
    %v480 = vmul.f32 %v472, 0.2
    %v481 = vmul.f32 %v473, 0.2
    %v482 = vsel %vm474, %v470, %v478
    %v483 = vsel %vm475, %v471, %v479
    %v484 = vsel %vm476, %v472, %v480
    %v485 = vsel %vm477, %v473, %v481
    %v486 = vsel %vm402, %v482, -1e+30
    %v487 = vsel %vm403, %v483, -1e+30
    %v488 = vsel %vm404, %v484, -1e+30
    %v489 = vsel %vm405, %v485, -1e+30
    %vm490 = vcmask 261120
    %v491 = vsel %vm490, %v446, -inf
    %492 = vmax.xlane.f32.xlu0 %v491
    %v493 = vpop.xlane.xlu0 %492
    %v494 = vsel %vm490, %v447, -inf
    %495 = vmax.xlane.f32.xlu0 %v494
    %v496 = vpop.xlane.xlu0 %495
    %v497 = vsel %vm490, %v448, -inf
    %498 = vmax.xlane.f32.xlu0 %v497
    %v499 = vpop.xlane.xlu0 %498
    %v500 = vsel %vm490, %v449, -inf
    %501 = vmax.xlane.f32.xlu0 %v500
    %v502 = vpop.xlane.xlu0 %501
    %v503 = vsel %vm490, %v486, -inf
    %504 = vmax.xlane.f32.xlu0 %v503
    %v505 = vpop.xlane.xlu0 %504
    %v506 = vsel %vm490, %v487, -inf
    %507 = vmax.xlane.f32.xlu0 %v506
    %v508 = vpop.xlane.xlu0 %507
    %v509 = vsel %vm490, %v488, -inf
    %510 = vmax.xlane.f32.xlu0 %v509
    %v511 = vpop.xlane.xlu0 %510
    %v512 = vsel %vm490, %v489, -inf
    %513 = vmax.xlane.f32.xlu0 %v512
    %v514 = vpop.xlane.xlu0 %513
    %v515 = vsub.f32 %v446, %v493
    %v516 = vsub.f32 %v447, %v496
    %v517 = vsub.f32 %v448, %v499
    %v518 = vsub.f32 %v449, %v502
    %v519 = vsub.f32 %v486, %v505
    %v520 = vsub.f32 %v487, %v508
    %v521 = vsub.f32 %v488, %v511
    %v522 = vsub.f32 %v489, %v514
    %v523 = vmul.f32 %v515, 1.442695
    %v524 = vpow.pop %v523
    %v525 = vmul.f32 %v516, 1.442695
    %v526 = vpow.pop %v525
    %v527 = vmul.f32 %v517, 1.442695
    %v528 = vpow.pop %v527
    %v529 = vmul.f32 %v518, 1.442695
    %v530 = vpow.pop %v529
    %v531 = vmul.f32 %v519, 1.442695
    %v532 = vpow.pop %v531
    %v533 = vmul.f32 %v520, 1.442695
    %v534 = vpow.pop %v533
    %v535 = vmul.f32 %v521, 1.442695
    %v536 = vpow.pop %v535
    %v537 = vmul.f32 %v522, 1.442695
    %v538 = vpow.pop %v537
    %v539 = vsel %vm490, %v524, 0.0
    %540 = vadd.xlane.f32.xlu0 %v539
    %v541 = vpop.xlane.xlu0 %540
    %v542 = vsel %vm490, %v526, 0.0
    %543 = vadd.xlane.f32.xlu0 %v542
    %v544 = vpop.xlane.xlu0 %543
    %v545 = vsel %vm490, %v528, 0.0
    %546 = vadd.xlane.f32.xlu0 %v545
    %v547 = vpop.xlane.xlu0 %546
    %v548 = vsel %vm490, %v530, 0.0
    %549 = vadd.xlane.f32.xlu0 %v548
    %v550 = vpop.xlane.xlu0 %549
    %v551 = vsel %vm490, %v532, 0.0
    %552 = vadd.xlane.f32.xlu0 %v551
    %v553 = vpop.xlane.xlu0 %552
    %v554 = vsel %vm490, %v534, 0.0
    %555 = vadd.xlane.f32.xlu0 %v554
    %v556 = vpop.xlane.xlu0 %555
    %v557 = vsel %vm490, %v536, 0.0
    %558 = vadd.xlane.f32.xlu0 %v557
    %v559 = vpop.xlane.xlu0 %558
    %v560 = vsel %vm490, %v538, 0.0
    %561 = vadd.xlane.f32.xlu0 %v560
    %v562 = vpop.xlane.xlu0 %561
    %v563 = vrcp.pop %v541
    %v564 = vmul.f32 %v524, %v563
    %v565 = vrcp.pop %v544
    %v566 = vmul.f32 %v526, %v565
    %v567 = vrcp.pop %v547
    %v568 = vmul.f32 %v528, %v567
    %v569 = vrcp.pop %v550
    %v570 = vmul.f32 %v530, %v569
    %v571 = vrcp.pop %v553
    %v572 = vmul.f32 %v532, %v571
    %v573 = vrcp.pop %v556
    %v574 = vmul.f32 %v534, %v573
    %v575 = vrcp.pop %v559
    %v576 = vmul.f32 %v536, %v575
    %v577 = vrcp.pop %v562
    %v578 = vmul.f32 %v538, %v577
    %v580 = vsel %vm490, %v564, 0
    %v583 = vsel %vm490, %v566, 0
    %v586 = vsel %vm490, %v568, 0
    %v589 = vsel %vm490, %v570, 0
    %v592 = vsel %vm490, %v572, 0
    %v595 = vsel %vm490, %v574, 0
    %v598 = vsel %vm490, %v576, 0
    %v601 = vsel %vm490, %v578, 0
    %603 = vmatprep.subr.mxu0 0.0
    %604 = vmatpush1.msra.mxu0 %v161
    %605 = vmatprep.subr.mxu0 0.0
    %606 = vmatpush1.msra.mxu0 %v166
    %607 = vmatprep.subr.mxu0 0.0
    %608 = vmatpush1.msra.mxu0 %v171
    %609 = vmatprep.subr.mxu0 0.0
    %610 = vmatpush1.msra.mxu0 %v176
    %611 = vmatprep.subr.mxu0 0.0
    %612 = vmatpush1.msra.mxu0 0.0
    %613 = vmatprep.subr.mxu0 0.0
    %614 = vmatpush1.msra.mxu0 0.0
    %615 = vmatprep.subr.mxu0 0.0
    %616 = vmatpush1.msra.mxu0 0.0
    %617 = vmatprep.subr.mxu0 0.0
    %618 = vmatpush1.msra.mxu0 0.0
    %619 = vmatprep.subr.mxu0 0.0
    %620 = vmatpush1.msra.mxu0 0.0
    %621 = vmatprep.subr.mxu0 0.0
    %622 = vmatpush1.msra.mxu0 0.0
    %623 = vmatprep.subr.mxu0 0.0
    %624 = vmatpush1.msra.mxu0 0.0
    %625 = vmatprep.subr.mxu0 0.0
    %626 = vmatpush1.msra.mxu0 0.0
    %627 = vmatprep.subr.mxu0 0.0
    %628 = vmatpush1.msra.mxu0 0.0
    %629 = vmatprep.subr.mxu0 0.0
    %630 = vmatpush1.msra.mxu0 0.0
    %631 = vmatprep.subr.mxu0 0.0
    %632 = vmatpush1.msra.mxu0 0.0
    %633 = vmatprep.subr.mxu0 0.0
    %634 = vmatpush1.msra.mxu0 0.0
    %635 = vmatprep.subr.mxu0 0.0
    %636 = vmatpush1.msra.mxu0 0.0
    %637 = vmatprep.subr.mxu0 0.0
    %638 = vmatpush1.msra.mxu0 0.0
    %639 = vmatprep.subr.mxu0 0.0
    %640 = vmatpush1.msra.mxu0 0.0
    %641 = vmatprep.subr.mxu0 0.0
    %642 = vmatpush1.msra.mxu0 0.0
    %643 = vmatprep.subr.mxu0 0.0
    %644 = vmatpush1.msra.mxu0 0.0
    %645 = vmatprep.subr.mxu0 0.0
    %646 = vmatpush1.msra.mxu0 0.0
    %647 = vmatprep.subr.mxu0 0.0
    %648 = vmatpush1.msra.mxu0 0.0
    %649 = vmatprep.subr.mxu0 0.0
    %650 = vmatpush1.msra.mxu0 0.0
    %651 = vmatprep.subr.mxu0 0.0
    %652 = vmatpush1.msra.mxu0 0.0
    %653 = vmatprep.subr.mxu0 0.0
    %654 = vmatpush1.msra.mxu0 0.0
    %655 = vmatprep.subr.mxu0 0.0
    %656 = vmatpush1.msra.mxu0 0.0
    %657 = vmatprep.subr.mxu0 0.0
    %658 = vmatpush1.msra.mxu0 0.0
    %659 = vmatprep.subr.mxu0 0.0
    %660 = vmatpush1.msra.mxu0 0.0
    %661 = vmatprep.subr.mxu0 0.0
    %662 = vmatpush1.msra.mxu0 0.0
    %663 = vmatprep.subr.mxu0 0.0
    %664 = vmatpush1.msra.mxu0 0.0
    %665 = vmatprep.subr.mxu0 0.0
    %666 = vmatpush1.msra.mxu0 0.0
    %667 = vmatprep.mubr.f32.mxu0 0.0
    %668 = vmatmul.mubr.f32.gmra.mrb[0].mxu0 %v580
    %v669 = vpop.f32.mrb[0].mxu0
    %v670 = vadd.f32 0.0, %v669
    %v671 = vpop.f32.mrb[0].mxu0
    %672 = vmatprep.mubr.f32.mxu0 0.0
    %673 = vmatmul.mubr.f32.gmra.mrb[0].mxu0 %v583
    %v674 = vpop.f32.mrb[0].mxu0
    %v675 = vadd.f32 0.0, %v674
    %v676 = vpop.f32.mrb[0].mxu0
    %677 = vmatprep.mubr.f32.mxu0 0.0
    %678 = vmatmul.mubr.f32.gmra.mrb[0].mxu0 %v586
    %v679 = vpop.f32.mrb[0].mxu0
    %v680 = vadd.f32 0.0, %v679
    %v681 = vpop.f32.mrb[0].mxu0
    %682 = vmatprep.mubr.f32.mxu0 0.0
    %683 = vmatmul.mubr.f32.gmra.mrb[0].mxu0 %v589
    %v684 = vpop.f32.mrb[0].mxu0
    %v685 = vadd.f32 0.0, %v684
    %v686 = vpop.f32.mrb[0].mxu0
    %687 = vmatprep.mubr.f32.mxu0 0.0
    %688 = vmatmul.mubr.f32.gmra.mrb[0].mxu0 %v592
    %v689 = vpop.f32.mrb[0].mxu0
    %v690 = vadd.f32 0.0, %v689
    %v691 = vpop.f32.mrb[0].mxu0
    %692 = vmatprep.mubr.f32.mxu0 0.0
    %693 = vmatmul.mubr.f32.gmra.mrb[0].mxu0 %v595
    %v694 = vpop.f32.mrb[0].mxu0
    %v695 = vadd.f32 0.0, %v694
    %v696 = vpop.f32.mrb[0].mxu0
    %697 = vmatprep.mubr.f32.mxu0 0.0
    %698 = vmatmul.mubr.f32.gmra.mrb[0].mxu0 %v598
    %v699 = vpop.f32.mrb[0].mxu0
    %v700 = vadd.f32 0.0, %v699
    %v701 = vpop.f32.mrb[0].mxu0
    %702 = vmatprep.mubr.f32.mxu0 0.0
    %703 = vmatmul.mubr.f32.gmra.mrb[0].mxu0 %v601
    %v704 = vpop.f32.mrb[0].mxu0
    %v705 = vadd.f32 0.0, %v704
    %v706 = vpop.f32.mrb[0].mxu0
    %707 = vdwg.mxu0
    %v708 = vld [vmem:[%s5] sm:$0x1]
    %v709 = vld [vmem:[%s6] sm:$0x1]
    %v710 = vlaneseq
    %v711 = vshrl.u32 %v710, 7
    %v712 = vsub.s32 0, %v711
    %v713 = vrot.slane %v709, %v712
    %v714 = vmul.f32 %v670, %v713
    %v715 = vmul.f32 %v675, %v713
    %v716 = vmul.f32 %v680, %v713
    %v717 = vmul.f32 %v685, %v713
    %v719 = vlaneseq
    %v720 = vshrl.u32 %v719, 7
    %v721 = vsub.s32 0, %v720
    %v722 = vrot.slane %v708, %v721
    %v724 = vadd.f32 %v722, %v714
    %v725 = vadd.f32 %v722, %v715
    %v726 = vadd.f32 %v722, %v716
    %v727 = vadd.f32 %v722, %v717
    %v728 = vld [vmem:[%s6 + $0x1] sm:$0x1]
    %v729 = vlaneseq
    %v730 = vshrl.u32 %v729, 7
    %v731 = vsub.s32 0, %v730
    %v732 = vrot.slane %v728, %v731
    %v733 = vmul.f32 %v690, %v732
    %v734 = vmul.f32 %v695, %v732
    %v735 = vmul.f32 %v700, %v732
    %v736 = vmul.f32 %v705, %v732
    %v737 = vadd.f32 %v724, %v733
    %v738 = vadd.f32 %v725, %v734
    %v739 = vadd.f32 %v726, %v735
    %v740 = vadd.f32 %v727, %v736
    %v741 = vld [vmem:[#allocation6] sm:$0xff]
    %v742 = vld [vmem:[#allocation6 + $0x8] sm:$0xff]
    %v743 = vld [vmem:[%s9] sm:$0x1]
    %v745 = vlaneseq
    %v746 = vshrl.u32 %v745, 7
    %v747 = vsub.s32 0, %v746
    %v748 = vrot.slane %v743, %v747
    %v751 = vsel %vm181, %v737, 0
    %v754 = vsel %vm181, %v738, 0
    %v757 = vsel %vm181, %v739, 0
    %v760 = vsel %vm181, %v740, 0
    %762 = vmatprep.subr.mxu0 0.0
    %763 = vmatpush1.msra.mxu0 %v741
    %764 = vmatprep.subr.mxu0 0.0
    %765 = vmatpush1.msra.mxu0 %v742
    %766 = vmatprep.subr.mxu0 0.0
    %767 = vmatpush1.msra.mxu0 0.0
    %768 = vmatprep.subr.mxu0 0.0
    %769 = vmatpush1.msra.mxu0 0.0
    %770 = vmatprep.subr.mxu0 0.0
    %771 = vmatpush1.msra.mxu0 0.0
    %772 = vmatprep.subr.mxu0 0.0
    %773 = vmatpush1.msra.mxu0 0.0
    %774 = vmatprep.subr.mxu0 0.0
    %775 = vmatpush1.msra.mxu0 0.0
    %776 = vmatprep.subr.mxu0 0.0
    %777 = vmatpush1.msra.mxu0 0.0
    %778 = vmatprep.subr.mxu0 0.0
    %779 = vmatpush1.msra.mxu0 0.0
    %780 = vmatprep.subr.mxu0 0.0
    %781 = vmatpush1.msra.mxu0 0.0
    %782 = vmatprep.subr.mxu0 0.0
    %783 = vmatpush1.msra.mxu0 0.0
    %784 = vmatprep.subr.mxu0 0.0
    %785 = vmatpush1.msra.mxu0 0.0
    %786 = vmatprep.subr.mxu0 0.0
    %787 = vmatpush1.msra.mxu0 0.0
    %788 = vmatprep.subr.mxu0 0.0
    %789 = vmatpush1.msra.mxu0 0.0
    %790 = vmatprep.subr.mxu0 0.0
    %791 = vmatpush1.msra.mxu0 0.0
    %792 = vmatprep.subr.mxu0 0.0
    %793 = vmatpush1.msra.mxu0 0.0
    %794 = vmatprep.subr.mxu0 0.0
    %795 = vmatpush1.msra.mxu0 0.0
    %796 = vmatprep.subr.mxu0 0.0
    %797 = vmatpush1.msra.mxu0 0.0
    %798 = vmatprep.subr.mxu0 0.0
    %799 = vmatpush1.msra.mxu0 0.0
    %800 = vmatprep.subr.mxu0 0.0
    %801 = vmatpush1.msra.mxu0 0.0
    %802 = vmatprep.subr.mxu0 0.0
    %803 = vmatpush1.msra.mxu0 0.0
    %804 = vmatprep.subr.mxu0 0.0
    %805 = vmatpush1.msra.mxu0 0.0
    %806 = vmatprep.subr.mxu0 0.0
    %807 = vmatpush1.msra.mxu0 0.0
    %808 = vmatprep.subr.mxu0 0.0
    %809 = vmatpush1.msra.mxu0 0.0
    %810 = vmatprep.subr.mxu0 0.0
    %811 = vmatpush1.msra.mxu0 0.0
    %812 = vmatprep.subr.mxu0 0.0
    %813 = vmatpush1.msra.mxu0 0.0
    %814 = vmatprep.subr.mxu0 0.0
    %815 = vmatpush1.msra.mxu0 0.0
    %816 = vmatprep.subr.mxu0 0.0
    %817 = vmatpush1.msra.mxu0 0.0
    %818 = vmatprep.subr.mxu0 0.0
    %819 = vmatpush1.msra.mxu0 0.0
    %820 = vmatprep.subr.mxu0 0.0
    %821 = vmatpush1.msra.mxu0 0.0
    %822 = vmatprep.subr.mxu0 0.0
    %823 = vmatpush1.msra.mxu0 0.0
    %824 = vmatprep.subr.mxu0 0.0
    %825 = vmatpush1.msra.mxu0 0.0
    %826 = vmatprep.mubr.f32.mxu0 0.0
    %827 = vmatmul.mubr.f32.gmra.mrb[0].mxu0 %v751
    %v828 = vpop.f32.mrb[0].mxu0
    %v829 = vadd.f32 %v748, %v828
    %v830 = vpop.f32.mrb[0].mxu0
    %831 = vmatprep.mubr.f32.mxu0 0.0
    %832 = vmatmul.mubr.f32.gmra.mrb[0].mxu0 %v754
    %v833 = vpop.f32.mrb[0].mxu0
    %v834 = vadd.f32 %v748, %v833
    %v835 = vpop.f32.mrb[0].mxu0
    %836 = vmatprep.mubr.f32.mxu0 0.0
    %837 = vmatmul.mubr.f32.gmra.mrb[0].mxu0 %v757
    %v838 = vpop.f32.mrb[0].mxu0
    %v839 = vadd.f32 %v748, %v838
    %v840 = vpop.f32.mrb[0].mxu0
    %841 = vmatprep.mubr.f32.mxu0 0.0
    %842 = vmatmul.mubr.f32.gmra.mrb[0].mxu0 %v760
    %v843 = vpop.f32.mrb[0].mxu0
    %v844 = vadd.f32 %v748, %v843
    %v845 = vpop.f32.mrb[0].mxu0
    %846 = vdwg.mxu0
    %s847 = scalar_lea.vmem [#allocation6], 16
    %v848 = vld [vmem:[%s847] sm:$0xff]
    %v849 = vld [vmem:[%s847 + $0x8] sm:$0xff]
    %s850 = scalar_lea.vmem %s9, 1
    %v851 = vld [vmem:[%s850] sm:$0x1]
    %v853 = vlaneseq
    %v854 = vshrl.u32 %v853, 7
    %v855 = vsub.s32 0, %v854
    %v856 = vrot.slane %v851, %v855
    %858 = vmatprep.subr.mxu0 0.0
    %859 = vmatpush1.msra.mxu0 %v848
    %860 = vmatprep.subr.mxu0 0.0
    %861 = vmatpush1.msra.mxu0 %v849
    %862 = vmatprep.subr.mxu0 0.0
    %863 = vmatpush1.msra.mxu0 0.0
    %864 = vmatprep.subr.mxu0 0.0
    %865 = vmatpush1.msra.mxu0 0.0
    %866 = vmatprep.subr.mxu0 0.0
    %867 = vmatpush1.msra.mxu0 0.0
    %868 = vmatprep.subr.mxu0 0.0
    %869 = vmatpush1.msra.mxu0 0.0
    %870 = vmatprep.subr.mxu0 0.0
    %871 = vmatpush1.msra.mxu0 0.0
    %872 = vmatprep.subr.mxu0 0.0
    %873 = vmatpush1.msra.mxu0 0.0
    %874 = vmatprep.subr.mxu0 0.0
    %875 = vmatpush1.msra.mxu0 0.0
    %876 = vmatprep.subr.mxu0 0.0
    %877 = vmatpush1.msra.mxu0 0.0
    %878 = vmatprep.subr.mxu0 0.0
    %879 = vmatpush1.msra.mxu0 0.0
    %880 = vmatprep.subr.mxu0 0.0
    %881 = vmatpush1.msra.mxu0 0.0
    %882 = vmatprep.subr.mxu0 0.0
    %883 = vmatpush1.msra.mxu0 0.0
    %884 = vmatprep.subr.mxu0 0.0
    %885 = vmatpush1.msra.mxu0 0.0
    %886 = vmatprep.subr.mxu0 0.0
    %887 = vmatpush1.msra.mxu0 0.0
    %888 = vmatprep.subr.mxu0 0.0
    %889 = vmatpush1.msra.mxu0 0.0
    %890 = vmatprep.subr.mxu0 0.0
    %891 = vmatpush1.msra.mxu0 0.0
    %892 = vmatprep.subr.mxu0 0.0
    %893 = vmatpush1.msra.mxu0 0.0
    %894 = vmatprep.subr.mxu0 0.0
    %895 = vmatpush1.msra.mxu0 0.0
    %896 = vmatprep.subr.mxu0 0.0
    %897 = vmatpush1.msra.mxu0 0.0
    %898 = vmatprep.subr.mxu0 0.0
    %899 = vmatpush1.msra.mxu0 0.0
    %900 = vmatprep.subr.mxu0 0.0
    %901 = vmatpush1.msra.mxu0 0.0
    %902 = vmatprep.subr.mxu0 0.0
    %903 = vmatpush1.msra.mxu0 0.0
    %904 = vmatprep.subr.mxu0 0.0
    %905 = vmatpush1.msra.mxu0 0.0
    %906 = vmatprep.subr.mxu0 0.0
    %907 = vmatpush1.msra.mxu0 0.0
    %908 = vmatprep.subr.mxu0 0.0
    %909 = vmatpush1.msra.mxu0 0.0
    %910 = vmatprep.subr.mxu0 0.0
    %911 = vmatpush1.msra.mxu0 0.0
    %912 = vmatprep.subr.mxu0 0.0
    %913 = vmatpush1.msra.mxu0 0.0
    %914 = vmatprep.subr.mxu0 0.0
    %915 = vmatpush1.msra.mxu0 0.0
    %916 = vmatprep.subr.mxu0 0.0
    %917 = vmatpush1.msra.mxu0 0.0
    %918 = vmatprep.subr.mxu0 0.0
    %919 = vmatpush1.msra.mxu0 0.0
    %920 = vmatprep.subr.mxu0 0.0
    %921 = vmatpush1.msra.mxu0 0.0
    %922 = vmatprep.mubr.f32.mxu0 0.0
    %923 = vmatmul.mubr.f32.gmra.mrb[0].mxu0 %v751
    %v924 = vpop.f32.mrb[0].mxu0
    %v925 = vadd.f32 %v856, %v924
    %v926 = vpop.f32.mrb[0].mxu0
    %927 = vmatprep.mubr.f32.mxu0 0.0
    %928 = vmatmul.mubr.f32.gmra.mrb[0].mxu0 %v754
    %v929 = vpop.f32.mrb[0].mxu0
    %v930 = vadd.f32 %v856, %v929
    %v931 = vpop.f32.mrb[0].mxu0
    %932 = vmatprep.mubr.f32.mxu0 0.0
    %933 = vmatmul.mubr.f32.gmra.mrb[0].mxu0 %v757
    %v934 = vpop.f32.mrb[0].mxu0
    %v935 = vadd.f32 %v856, %v934
    %v936 = vpop.f32.mrb[0].mxu0
    %937 = vmatprep.mubr.f32.mxu0 0.0
    %938 = vmatmul.mubr.f32.gmra.mrb[0].mxu0 %v760
    %v939 = vpop.f32.mrb[0].mxu0
    %v940 = vadd.f32 %v856, %v939
    %v941 = vpop.f32.mrb[0].mxu0
    %942 = vdwg.mxu0
    %s943 = scalar_lea.vmem [#allocation6], 32
    %v944 = vld [vmem:[%s943] sm:$0xff]
    %v945 = vld [vmem:[%s943 + $0x8] sm:$0xff]
    %s946 = scalar_lea.vmem %s9, 2
    %v947 = vld [vmem:[%s946] sm:$0x1]
    %v949 = vlaneseq
    %v950 = vshrl.u32 %v949, 7
    %v951 = vsub.s32 0, %v950
    %v952 = vrot.slane %v947, %v951
    %954 = vmatprep.subr.mxu0 0.0
    %955 = vmatpush1.msra.mxu0 %v944
    %956 = vmatprep.subr.mxu0 0.0
    %957 = vmatpush1.msra.mxu0 %v945
    %958 = vmatprep.subr.mxu0 0.0
    %959 = vmatpush1.msra.mxu0 0.0
    %960 = vmatprep.subr.mxu0 0.0
    %961 = vmatpush1.msra.mxu0 0.0
    %962 = vmatprep.subr.mxu0 0.0
    %963 = vmatpush1.msra.mxu0 0.0
    %964 = vmatprep.subr.mxu0 0.0
    %965 = vmatpush1.msra.mxu0 0.0
    %966 = vmatprep.subr.mxu0 0.0
    %967 = vmatpush1.msra.mxu0 0.0
    %968 = vmatprep.subr.mxu0 0.0
    %969 = vmatpush1.msra.mxu0 0.0
    %970 = vmatprep.subr.mxu0 0.0
    %971 = vmatpush1.msra.mxu0 0.0
    %972 = vmatprep.subr.mxu0 0.0
    %973 = vmatpush1.msra.mxu0 0.0
    %974 = vmatprep.subr.mxu0 0.0
    %975 = vmatpush1.msra.mxu0 0.0
    %976 = vmatprep.subr.mxu0 0.0
    %977 = vmatpush1.msra.mxu0 0.0
    %978 = vmatprep.subr.mxu0 0.0
    %979 = vmatpush1.msra.mxu0 0.0
    %980 = vmatprep.subr.mxu0 0.0
    %981 = vmatpush1.msra.mxu0 0.0
    %982 = vmatprep.subr.mxu0 0.0
    %983 = vmatpush1.msra.mxu0 0.0
    %984 = vmatprep.subr.mxu0 0.0
    %985 = vmatpush1.msra.mxu0 0.0
    %986 = vmatprep.subr.mxu0 0.0
    %987 = vmatpush1.msra.mxu0 0.0
    %988 = vmatprep.subr.mxu0 0.0
    %989 = vmatpush1.msra.mxu0 0.0
    %990 = vmatprep.subr.mxu0 0.0
    %991 = vmatpush1.msra.mxu0 0.0
    %992 = vmatprep.subr.mxu0 0.0
    %993 = vmatpush1.msra.mxu0 0.0
    %994 = vmatprep.subr.mxu0 0.0
    %995 = vmatpush1.msra.mxu0 0.0
    %996 = vmatprep.subr.mxu0 0.0
    %997 = vmatpush1.msra.mxu0 0.0
    %998 = vmatprep.subr.mxu0 0.0
    %999 = vmatpush1.msra.mxu0 0.0
    %1000 = vmatprep.subr.mxu0 0.0
    %1001 = vmatpush1.msra.mxu0 0.0
    %1002 = vmatprep.subr.mxu0 0.0
    %1003 = vmatpush1.msra.mxu0 0.0
    %1004 = vmatprep.subr.mxu0 0.0
    %1005 = vmatpush1.msra.mxu0 0.0
    %1006 = vmatprep.subr.mxu0 0.0
    %1007 = vmatpush1.msra.mxu0 0.0
    %1008 = vmatprep.subr.mxu0 0.0
    %1009 = vmatpush1.msra.mxu0 0.0
    %1010 = vmatprep.subr.mxu0 0.0
    %1011 = vmatpush1.msra.mxu0 0.0
    %1012 = vmatprep.subr.mxu0 0.0
    %1013 = vmatpush1.msra.mxu0 0.0
    %1014 = vmatprep.subr.mxu0 0.0
    %1015 = vmatpush1.msra.mxu0 0.0
    %1016 = vmatprep.subr.mxu0 0.0
    %1017 = vmatpush1.msra.mxu0 0.0
    %1018 = vmatprep.mubr.f32.mxu0 0.0
    %1019 = vmatmul.mubr.f32.gmra.mrb[0].mxu0 %v751
    %v1020 = vpop.f32.mrb[0].mxu0
    %v1021 = vadd.f32 %v952, %v1020
    %v1022 = vpop.f32.mrb[0].mxu0
    %1023 = vmatprep.mubr.f32.mxu0 0.0
    %1024 = vmatmul.mubr.f32.gmra.mrb[0].mxu0 %v754
    %v1025 = vpop.f32.mrb[0].mxu0
    %v1026 = vadd.f32 %v952, %v1025
    %v1027 = vpop.f32.mrb[0].mxu0
    %1028 = vmatprep.mubr.f32.mxu0 0.0
    %1029 = vmatmul.mubr.f32.gmra.mrb[0].mxu0 %v757
    %v1030 = vpop.f32.mrb[0].mxu0
    %v1031 = vadd.f32 %v952, %v1030
    %v1032 = vpop.f32.mrb[0].mxu0
    %1033 = vmatprep.mubr.f32.mxu0 0.0
    %1034 = vmatmul.mubr.f32.gmra.mrb[0].mxu0 %v760
    %v1035 = vpop.f32.mrb[0].mxu0
    %v1036 = vadd.f32 %v952, %v1035
    %v1037 = vpop.f32.mrb[0].mxu0
    %1038 = vdwg.mxu0
    %s1039 = scalar_lea.vmem [#allocation6], 48
    %v1040 = vld [vmem:[%s1039] sm:$0xff]
    %v1041 = vld [vmem:[%s1039 + $0x8] sm:$0xff]
    %s1042 = scalar_lea.vmem %s9, 3
    %v1043 = vld [vmem:[%s1042] sm:$0x1]
    %v1045 = vlaneseq
    %v1046 = vshrl.u32 %v1045, 7
    %v1047 = vsub.s32 0, %v1046
    %v1048 = vrot.slane %v1043, %v1047
    %1050 = vmatprep.subr.mxu0 0.0
    %1051 = vmatpush1.msra.mxu0 %v1040
    %1052 = vmatprep.subr.mxu0 0.0
    %1053 = vmatpush1.msra.mxu0 %v1041
    %1054 = vmatprep.subr.mxu0 0.0
    %1055 = vmatpush1.msra.mxu0 0.0
    %1056 = vmatprep.subr.mxu0 0.0
    %1057 = vmatpush1.msra.mxu0 0.0
    %1058 = vmatprep.subr.mxu0 0.0
    %1059 = vmatpush1.msra.mxu0 0.0
    %1060 = vmatprep.subr.mxu0 0.0
    %1061 = vmatpush1.msra.mxu0 0.0
    %1062 = vmatprep.subr.mxu0 0.0
    %1063 = vmatpush1.msra.mxu0 0.0
    %1064 = vmatprep.subr.mxu0 0.0
    %1065 = vmatpush1.msra.mxu0 0.0
    %1066 = vmatprep.subr.mxu0 0.0
    %1067 = vmatpush1.msra.mxu0 0.0
    %1068 = vmatprep.subr.mxu0 0.0
    %1069 = vmatpush1.msra.mxu0 0.0
    %1070 = vmatprep.subr.mxu0 0.0
    %1071 = vmatpush1.msra.mxu0 0.0
    %1072 = vmatprep.subr.mxu0 0.0
    %1073 = vmatpush1.msra.mxu0 0.0
    %1074 = vmatprep.subr.mxu0 0.0
    %1075 = vmatpush1.msra.mxu0 0.0
    %1076 = vmatprep.subr.mxu0 0.0
    %1077 = vmatpush1.msra.mxu0 0.0
    %1078 = vmatprep.subr.mxu0 0.0
    %1079 = vmatpush1.msra.mxu0 0.0
    %1080 = vmatprep.subr.mxu0 0.0
    %1081 = vmatpush1.msra.mxu0 0.0
    %1082 = vmatprep.subr.mxu0 0.0
    %1083 = vmatpush1.msra.mxu0 0.0
    %1084 = vmatprep.subr.mxu0 0.0
    %1085 = vmatpush1.msra.mxu0 0.0
    %1086 = vmatprep.subr.mxu0 0.0
    %1087 = vmatpush1.msra.mxu0 0.0
    %1088 = vmatprep.subr.mxu0 0.0
    %1089 = vmatpush1.msra.mxu0 0.0
    %1090 = vmatprep.subr.mxu0 0.0
    %1091 = vmatpush1.msra.mxu0 0.0
    %1092 = vmatprep.subr.mxu0 0.0
    %1093 = vmatpush1.msra.mxu0 0.0
    %1094 = vmatprep.subr.mxu0 0.0
    %1095 = vmatpush1.msra.mxu0 0.0
    %1096 = vmatprep.subr.mxu0 0.0
    %1097 = vmatpush1.msra.mxu0 0.0
    %1098 = vmatprep.subr.mxu0 0.0
    %1099 = vmatpush1.msra.mxu0 0.0
    %1100 = vmatprep.subr.mxu0 0.0
    %1101 = vmatpush1.msra.mxu0 0.0
    %1102 = vmatprep.subr.mxu0 0.0
    %1103 = vmatpush1.msra.mxu0 0.0
    %1104 = vmatprep.subr.mxu0 0.0
    %1105 = vmatpush1.msra.mxu0 0.0
    %1106 = vmatprep.subr.mxu0 0.0
    %1107 = vmatpush1.msra.mxu0 0.0
    %1108 = vmatprep.subr.mxu0 0.0
    %1109 = vmatpush1.msra.mxu0 0.0
    %1110 = vmatprep.subr.mxu0 0.0
    %1111 = vmatpush1.msra.mxu0 0.0
    %1112 = vmatprep.subr.mxu0 0.0
    %1113 = vmatpush1.msra.mxu0 0.0
    %1114 = vmatprep.mubr.f32.mxu0 0.0
    %1115 = vmatmul.mubr.f32.gmra.mrb[0].mxu0 %v751
    %v1116 = vpop.f32.mrb[0].mxu0
    %v1117 = vadd.f32 %v1048, %v1116
    %v1118 = vpop.f32.mrb[0].mxu0
    %1119 = vmatprep.mubr.f32.mxu0 0.0
    %1120 = vmatmul.mubr.f32.gmra.mrb[0].mxu0 %v754
    %v1121 = vpop.f32.mrb[0].mxu0
    %v1122 = vadd.f32 %v1048, %v1121
    %v1123 = vpop.f32.mrb[0].mxu0
    %1124 = vmatprep.mubr.f32.mxu0 0.0
    %1125 = vmatmul.mubr.f32.gmra.mrb[0].mxu0 %v757
    %v1126 = vpop.f32.mrb[0].mxu0
    %v1127 = vadd.f32 %v1048, %v1126
    %v1128 = vpop.f32.mrb[0].mxu0
    %1129 = vmatprep.mubr.f32.mxu0 0.0
    %1130 = vmatmul.mubr.f32.gmra.mrb[0].mxu0 %v760
    %v1131 = vpop.f32.mrb[0].mxu0
    %v1132 = vadd.f32 %v1048, %v1131
    %v1133 = vpop.f32.mrb[0].mxu0
    %1134 = vdwg.mxu0
    %v1135 = vld [vmem:[%s8] sm:$0xff]
    %v1136 = vld [vmem:[%s8 + $0x8] sm:$0xff]
    %v1137 = vld [vmem:[%s8 + $0x10] sm:$0xff]
    %v1138 = vld [vmem:[%s8 + $0x18] sm:$0xff]
    %s1139 = scalar_lea.vmem %s8, 32
    %v1140 = vld [vmem:[%s1139] sm:$0xff]
    %v1141 = vld [vmem:[%s1139 + $0x8] sm:$0xff]
    %v1142 = vld [vmem:[%s1139 + $0x10] sm:$0xff]
    %v1143 = vld [vmem:[%s1139 + $0x18] sm:$0xff]
    %s1144 = scalar_lea.vmem %s8, 64
    %v1145 = vld [vmem:[%s1144] sm:$0xff]
    %v1146 = vld [vmem:[%s1144 + $0x8] sm:$0xff]
    %v1147 = vld [vmem:[%s1144 + $0x10] sm:$0xff]
    %v1148 = vld [vmem:[%s1144 + $0x18] sm:$0xff]
    %s1149 = scalar_lea.vmem %s8, 96
    %v1150 = vld [vmem:[%s1149] sm:$0xff]
    %v1151 = vld [vmem:[%s1149 + $0x8] sm:$0xff]
    %v1152 = vld [vmem:[%s1149 + $0x10] sm:$0xff]
    %v1153 = vld [vmem:[%s1149 + $0x18] sm:$0xff]
    %v1154 = vxor.u32 %v829, 2147483648
    %v1155 = vxor.u32 %v834, 2147483648
    %v1156 = vxor.u32 %v839, 2147483648
    %v1157 = vxor.u32 %v844, 2147483648
    %v1158 = vmul.f32 %v1154, 1.442695
    %v1159 = vpow.pop %v1158
    %v1160 = vmul.f32 %v1155, 1.442695
    %v1161 = vpow.pop %v1160
    %v1162 = vmul.f32 %v1156, 1.442695
    %v1163 = vpow.pop %v1162
    %v1164 = vmul.f32 %v1157, 1.442695
    %v1165 = vpow.pop %v1164
    %v1166 = vadd.f32 %v1159, 1.0
    %v1167 = vadd.f32 %v1161, 1.0
    %v1168 = vadd.f32 %v1163, 1.0
    %v1169 = vadd.f32 %v1165, 1.0
    %v1170 = vrcp.pop %v1166
    %v1171 = vmul.f32 1.0, %v1170
    %v1172 = vrcp.pop %v1167
    %v1173 = vmul.f32 1.0, %v1172
    %v1174 = vrcp.pop %v1168
    %v1175 = vmul.f32 1.0, %v1174
    %v1176 = vrcp.pop %v1169
    %v1177 = vmul.f32 1.0, %v1176
    %v1178 = vtanh.pop %v1021
    %v1179 = vtanh.pop %v1026
    %v1180 = vtanh.pop %v1031
    %v1181 = vtanh.pop %v1036
    %v1182 = vxor.u32 %v1117, 2147483648
    %v1183 = vxor.u32 %v1122, 2147483648
    %v1184 = vxor.u32 %v1127, 2147483648
    %v1185 = vxor.u32 %v1132, 2147483648
    %v1186 = vmul.f32 %v1182, 1.442695
    %v1187 = vpow.pop %v1186
    %v1188 = vmul.f32 %v1183, 1.442695
    %v1189 = vpow.pop %v1188
    %v1190 = vmul.f32 %v1184, 1.442695
    %v1191 = vpow.pop %v1190
    %v1192 = vmul.f32 %v1185, 1.442695
    %v1193 = vpow.pop %v1192
    %v1194 = vadd.f32 %v1187, 1.0
    %v1195 = vadd.f32 %v1189, 1.0
    %v1196 = vadd.f32 %v1191, 1.0
    %v1197 = vadd.f32 %v1193, 1.0
    %v1198 = vrcp.pop %v1194
    %v1199 = vmul.f32 1.0, %v1198
    %v1200 = vrcp.pop %v1195
    %v1201 = vmul.f32 1.0, %v1200
    %v1202 = vrcp.pop %v1196
    %v1203 = vmul.f32 1.0, %v1202
    %v1204 = vrcp.pop %v1197
    %v1205 = vmul.f32 1.0, %v1204
    %v1206 = vmul.f32 %v1171, %v1178
    %v1207 = vmul.f32 %v1173, %v1179
    %v1208 = vmul.f32 %v1175, %v1180
    %v1209 = vmul.f32 %v1177, %v1181
    %v1210 = vtanh.pop %v1206
    %v1211 = vtanh.pop %v1207
    %v1212 = vtanh.pop %v1208
    %v1213 = vtanh.pop %v1209
    %v1214 = vmul.f32 %v1199, %v1210
    %v1215 = vmul.f32 %v1201, %v1211
    %v1216 = vmul.f32 %v1203, %v1212
    %v1217 = vmul.f32 %v1205, %v1213
    %v1219 = vsel %vm490, %v1214, 0
    %v1222 = vsel %vm490, %v1215, 0
    %v1225 = vsel %vm490, %v1216, 0
    %v1228 = vsel %vm490, %v1217, 0
    %1230 = vmatprep.subr.mxu0 0.0
    %1231 = vmatpush1.msra.mxu0 %v1135
    %1232 = vmatprep.subr.mxu0 0.0
    %1233 = vmatpush1.msra.mxu0 %v1136
    %1234 = vmatprep.subr.mxu0 0.0
    %1235 = vmatpush1.msra.mxu0 %v1137
    %1236 = vmatprep.subr.mxu0 0.0
    %1237 = vmatpush1.msra.mxu0 %v1138
    %1238 = vmatprep.subr.mxu0 0.0
    %1239 = vmatpush1.msra.mxu0 0.0
    %1240 = vmatprep.subr.mxu0 0.0
    %1241 = vmatpush1.msra.mxu0 0.0
    %1242 = vmatprep.subr.mxu0 0.0
    %1243 = vmatpush1.msra.mxu0 0.0
    %1244 = vmatprep.subr.mxu0 0.0
    %1245 = vmatpush1.msra.mxu0 0.0
    %1246 = vmatprep.subr.mxu0 0.0
    %1247 = vmatpush1.msra.mxu0 0.0
    %1248 = vmatprep.subr.mxu0 0.0
    %1249 = vmatpush1.msra.mxu0 0.0
    %1250 = vmatprep.subr.mxu0 0.0
    %1251 = vmatpush1.msra.mxu0 0.0
    %1252 = vmatprep.subr.mxu0 0.0
    %1253 = vmatpush1.msra.mxu0 0.0
    %1254 = vmatprep.subr.mxu0 0.0
    %1255 = vmatpush1.msra.mxu0 0.0
    %1256 = vmatprep.subr.mxu0 0.0
    %1257 = vmatpush1.msra.mxu0 0.0
    %1258 = vmatprep.subr.mxu0 0.0
    %1259 = vmatpush1.msra.mxu0 0.0
    %1260 = vmatprep.subr.mxu0 0.0
    %1261 = vmatpush1.msra.mxu0 0.0
    %1262 = vmatprep.subr.mxu0 0.0
    %1263 = vmatpush1.msra.mxu0 0.0
    %1264 = vmatprep.subr.mxu0 0.0
    %1265 = vmatpush1.msra.mxu0 0.0
    %1266 = vmatprep.subr.mxu0 0.0
    %1267 = vmatpush1.msra.mxu0 0.0
    %1268 = vmatprep.subr.mxu0 0.0
    %1269 = vmatpush1.msra.mxu0 0.0
    %1270 = vmatprep.subr.mxu0 0.0
    %1271 = vmatpush1.msra.mxu0 0.0
    %1272 = vmatprep.subr.mxu0 0.0
    %1273 = vmatpush1.msra.mxu0 0.0
    %1274 = vmatprep.subr.mxu0 0.0
    %1275 = vmatpush1.msra.mxu0 0.0
    %1276 = vmatprep.subr.mxu0 0.0
    %1277 = vmatpush1.msra.mxu0 0.0
    %1278 = vmatprep.subr.mxu0 0.0
    %1279 = vmatpush1.msra.mxu0 0.0
    %1280 = vmatprep.subr.mxu0 0.0
    %1281 = vmatpush1.msra.mxu0 0.0
    %1282 = vmatprep.subr.mxu0 0.0
    %1283 = vmatpush1.msra.mxu0 0.0
    %1284 = vmatprep.subr.mxu0 0.0
    %1285 = vmatpush1.msra.mxu0 0.0
    %1286 = vmatprep.subr.mxu0 0.0
    %1287 = vmatpush1.msra.mxu0 0.0
    %1288 = vmatprep.subr.mxu0 0.0
    %1289 = vmatpush1.msra.mxu0 0.0
    %1290 = vmatprep.subr.mxu0 0.0
    %1291 = vmatpush1.msra.mxu0 0.0
    %1292 = vmatprep.subr.mxu0 0.0
    %1293 = vmatpush1.msra.mxu0 0.0
    %1294 = vmatprep.mubr.f32.mxu0 0.0
    %1295 = vmatmul.mubr.f32.gmra.mrb[0].mxu0 %v1219
    %v1296 = vpop.f32.mrb[0].mxu0
    %v1297 = vadd.f32 0.0, %v1296
    %v1298 = vpop.f32.mrb[0].mxu0
    %1299 = vmatprep.mubr.f32.mxu0 0.0
    %1300 = vmatmul.mubr.f32.gmra.mrb[0].mxu0 %v1222
    %v1301 = vpop.f32.mrb[0].mxu0
    %v1302 = vadd.f32 0.0, %v1301
    %v1303 = vpop.f32.mrb[0].mxu0
    %1304 = vmatprep.mubr.f32.mxu0 0.0
    %1305 = vmatmul.mubr.f32.gmra.mrb[0].mxu0 %v1225
    %v1306 = vpop.f32.mrb[0].mxu0
    %v1307 = vadd.f32 0.0, %v1306
    %v1308 = vpop.f32.mrb[0].mxu0
    %1309 = vmatprep.mubr.f32.mxu0 0.0
    %1310 = vmatmul.mubr.f32.gmra.mrb[0].mxu0 %v1228
    %v1311 = vpop.f32.mrb[0].mxu0
    %v1312 = vadd.f32 0.0, %v1311
    %v1313 = vpop.f32.mrb[0].mxu0
    %1314 = vdwg.mxu0
    %v1315 = vadd.f32 %v829, %v1297
    %v1316 = vadd.f32 %v834, %v1302
    %v1317 = vadd.f32 %v839, %v1307
    %v1318 = vadd.f32 %v844, %v1312
    %v1319 = vxor.u32 %v1315, 2147483648
    %v1320 = vxor.u32 %v1316, 2147483648
    %v1321 = vxor.u32 %v1317, 2147483648
    %v1322 = vxor.u32 %v1318, 2147483648
    %v1323 = vmul.f32 %v1319, 1.442695
    %v1324 = vpow.pop %v1323
    %v1325 = vmul.f32 %v1320, 1.442695
    %v1326 = vpow.pop %v1325
    %v1327 = vmul.f32 %v1321, 1.442695
    %v1328 = vpow.pop %v1327
    %v1329 = vmul.f32 %v1322, 1.442695
    %v1330 = vpow.pop %v1329
    %v1331 = vadd.f32 %v1324, 1.0
    %v1332 = vadd.f32 %v1326, 1.0
    %v1333 = vadd.f32 %v1328, 1.0
    %v1334 = vadd.f32 %v1330, 1.0
    %v1335 = vrcp.pop %v1331
    %v1336 = vmul.f32 1.0, %v1335
    %v1337 = vrcp.pop %v1332
    %v1338 = vmul.f32 1.0, %v1337
    %v1339 = vrcp.pop %v1333
    %v1340 = vmul.f32 1.0, %v1339
    %v1341 = vrcp.pop %v1334
    %v1342 = vmul.f32 1.0, %v1341
    %1343 = vmatprep.subr.mxu0 0.0
    %1344 = vmatpush1.msra.mxu0 %v1140
    %1345 = vmatprep.subr.mxu0 0.0
    %1346 = vmatpush1.msra.mxu0 %v1141
    %1347 = vmatprep.subr.mxu0 0.0
    %1348 = vmatpush1.msra.mxu0 %v1142
    %1349 = vmatprep.subr.mxu0 0.0
    %1350 = vmatpush1.msra.mxu0 %v1143
    %1351 = vmatprep.subr.mxu0 0.0
    %1352 = vmatpush1.msra.mxu0 0.0
    %1353 = vmatprep.subr.mxu0 0.0
    %1354 = vmatpush1.msra.mxu0 0.0
    %1355 = vmatprep.subr.mxu0 0.0
    %1356 = vmatpush1.msra.mxu0 0.0
    %1357 = vmatprep.subr.mxu0 0.0
    %1358 = vmatpush1.msra.mxu0 0.0
    %1359 = vmatprep.subr.mxu0 0.0
    %1360 = vmatpush1.msra.mxu0 0.0
    %1361 = vmatprep.subr.mxu0 0.0
    %1362 = vmatpush1.msra.mxu0 0.0
    %1363 = vmatprep.subr.mxu0 0.0
    %1364 = vmatpush1.msra.mxu0 0.0
    %1365 = vmatprep.subr.mxu0 0.0
    %1366 = vmatpush1.msra.mxu0 0.0
    %1367 = vmatprep.subr.mxu0 0.0
    %1368 = vmatpush1.msra.mxu0 0.0
    %1369 = vmatprep.subr.mxu0 0.0
    %1370 = vmatpush1.msra.mxu0 0.0
    %1371 = vmatprep.subr.mxu0 0.0
    %1372 = vmatpush1.msra.mxu0 0.0
    %1373 = vmatprep.subr.mxu0 0.0
    %1374 = vmatpush1.msra.mxu0 0.0
    %1375 = vmatprep.subr.mxu0 0.0
    %1376 = vmatpush1.msra.mxu0 0.0
    %1377 = vmatprep.subr.mxu0 0.0
    %1378 = vmatpush1.msra.mxu0 0.0
    %1379 = vmatprep.subr.mxu0 0.0
    %1380 = vmatpush1.msra.mxu0 0.0
    %1381 = vmatprep.subr.mxu0 0.0
    %1382 = vmatpush1.msra.mxu0 0.0
    %1383 = vmatprep.subr.mxu0 0.0
    %1384 = vmatpush1.msra.mxu0 0.0
    %1385 = vmatprep.subr.mxu0 0.0
    %1386 = vmatpush1.msra.mxu0 0.0
    %1387 = vmatprep.subr.mxu0 0.0
    %1388 = vmatpush1.msra.mxu0 0.0
    %1389 = vmatprep.subr.mxu0 0.0
    %1390 = vmatpush1.msra.mxu0 0.0
    %1391 = vmatprep.subr.mxu0 0.0
    %1392 = vmatpush1.msra.mxu0 0.0
    %1393 = vmatprep.subr.mxu0 0.0
    %1394 = vmatpush1.msra.mxu0 0.0
    %1395 = vmatprep.subr.mxu0 0.0
    %1396 = vmatpush1.msra.mxu0 0.0
    %1397 = vmatprep.subr.mxu0 0.0
    %1398 = vmatpush1.msra.mxu0 0.0
    %1399 = vmatprep.subr.mxu0 0.0
    %1400 = vmatpush1.msra.mxu0 0.0
    %1401 = vmatprep.subr.mxu0 0.0
    %1402 = vmatpush1.msra.mxu0 0.0
    %1403 = vmatprep.subr.mxu0 0.0
    %1404 = vmatpush1.msra.mxu0 0.0
    %1405 = vmatprep.subr.mxu0 0.0
    %1406 = vmatpush1.msra.mxu0 0.0
    %1407 = vmatprep.mubr.f32.mxu0 0.0
    %1408 = vmatmul.mubr.f32.gmra.mrb[0].mxu0 %v1219
    %v1409 = vpop.f32.mrb[0].mxu0
    %v1410 = vadd.f32 0.0, %v1409
    %v1411 = vpop.f32.mrb[0].mxu0
    %1412 = vmatprep.mubr.f32.mxu0 0.0
    %1413 = vmatmul.mubr.f32.gmra.mrb[0].mxu0 %v1222
    %v1414 = vpop.f32.mrb[0].mxu0
    %v1415 = vadd.f32 0.0, %v1414
    %v1416 = vpop.f32.mrb[0].mxu0
    %1417 = vmatprep.mubr.f32.mxu0 0.0
    %1418 = vmatmul.mubr.f32.gmra.mrb[0].mxu0 %v1225
    %v1419 = vpop.f32.mrb[0].mxu0
    %v1420 = vadd.f32 0.0, %v1419
    %v1421 = vpop.f32.mrb[0].mxu0
    %1422 = vmatprep.mubr.f32.mxu0 0.0
    %1423 = vmatmul.mubr.f32.gmra.mrb[0].mxu0 %v1228
    %v1424 = vpop.f32.mrb[0].mxu0
    %v1425 = vadd.f32 0.0, %v1424
    %v1426 = vpop.f32.mrb[0].mxu0
    %1427 = vdwg.mxu0
    %v1428 = vadd.f32 %v925, %v1410
    %v1429 = vadd.f32 %v930, %v1415
    %v1430 = vadd.f32 %v935, %v1420
    %v1431 = vadd.f32 %v940, %v1425
    %v1432 = vxor.u32 %v1428, 2147483648
    %v1433 = vxor.u32 %v1429, 2147483648
    %v1434 = vxor.u32 %v1430, 2147483648
    %v1435 = vxor.u32 %v1431, 2147483648
    %v1436 = vmul.f32 %v1432, 1.442695
    %v1437 = vpow.pop %v1436
    %v1438 = vmul.f32 %v1433, 1.442695
    %v1439 = vpow.pop %v1438
    %v1440 = vmul.f32 %v1434, 1.442695
    %v1441 = vpow.pop %v1440
    %v1442 = vmul.f32 %v1435, 1.442695
    %v1443 = vpow.pop %v1442
    %v1444 = vadd.f32 %v1437, 1.0
    %v1445 = vadd.f32 %v1439, 1.0
    %v1446 = vadd.f32 %v1441, 1.0
    %v1447 = vadd.f32 %v1443, 1.0
    %v1448 = vrcp.pop %v1444
    %v1449 = vmul.f32 1.0, %v1448
    %v1450 = vrcp.pop %v1445
    %v1451 = vmul.f32 1.0, %v1450
    %v1452 = vrcp.pop %v1446
    %v1453 = vmul.f32 1.0, %v1452
    %v1454 = vrcp.pop %v1447
    %v1455 = vmul.f32 1.0, %v1454
    %1456 = vmatprep.subr.mxu0 0.0
    %1457 = vmatpush1.msra.mxu0 %v1145
    %1458 = vmatprep.subr.mxu0 0.0
    %1459 = vmatpush1.msra.mxu0 %v1146
    %1460 = vmatprep.subr.mxu0 0.0
    %1461 = vmatpush1.msra.mxu0 %v1147
    %1462 = vmatprep.subr.mxu0 0.0
    %1463 = vmatpush1.msra.mxu0 %v1148
    %1464 = vmatprep.subr.mxu0 0.0
    %1465 = vmatpush1.msra.mxu0 0.0
    %1466 = vmatprep.subr.mxu0 0.0
    %1467 = vmatpush1.msra.mxu0 0.0
    %1468 = vmatprep.subr.mxu0 0.0
    %1469 = vmatpush1.msra.mxu0 0.0
    %1470 = vmatprep.subr.mxu0 0.0
    %1471 = vmatpush1.msra.mxu0 0.0
    %1472 = vmatprep.subr.mxu0 0.0
    %1473 = vmatpush1.msra.mxu0 0.0
    %1474 = vmatprep.subr.mxu0 0.0
    %1475 = vmatpush1.msra.mxu0 0.0
    %1476 = vmatprep.subr.mxu0 0.0
    %1477 = vmatpush1.msra.mxu0 0.0
    %1478 = vmatprep.subr.mxu0 0.0
    %1479 = vmatpush1.msra.mxu0 0.0
    %1480 = vmatprep.subr.mxu0 0.0
    %1481 = vmatpush1.msra.mxu0 0.0
    %1482 = vmatprep.subr.mxu0 0.0
    %1483 = vmatpush1.msra.mxu0 0.0
    %1484 = vmatprep.subr.mxu0 0.0
    %1485 = vmatpush1.msra.mxu0 0.0
    %1486 = vmatprep.subr.mxu0 0.0
    %1487 = vmatpush1.msra.mxu0 0.0
    %1488 = vmatprep.subr.mxu0 0.0
    %1489 = vmatpush1.msra.mxu0 0.0
    %1490 = vmatprep.subr.mxu0 0.0
    %1491 = vmatpush1.msra.mxu0 0.0
    %1492 = vmatprep.subr.mxu0 0.0
    %1493 = vmatpush1.msra.mxu0 0.0
    %1494 = vmatprep.subr.mxu0 0.0
    %1495 = vmatpush1.msra.mxu0 0.0
    %1496 = vmatprep.subr.mxu0 0.0
    %1497 = vmatpush1.msra.mxu0 0.0
    %1498 = vmatprep.subr.mxu0 0.0
    %1499 = vmatpush1.msra.mxu0 0.0
    %1500 = vmatprep.subr.mxu0 0.0
    %1501 = vmatpush1.msra.mxu0 0.0
    %1502 = vmatprep.subr.mxu0 0.0
    %1503 = vmatpush1.msra.mxu0 0.0
    %1504 = vmatprep.subr.mxu0 0.0
    %1505 = vmatpush1.msra.mxu0 0.0
    %1506 = vmatprep.subr.mxu0 0.0
    %1507 = vmatpush1.msra.mxu0 0.0
    %1508 = vmatprep.subr.mxu0 0.0
    %1509 = vmatpush1.msra.mxu0 0.0
    %1510 = vmatprep.subr.mxu0 0.0
    %1511 = vmatpush1.msra.mxu0 0.0
    %1512 = vmatprep.subr.mxu0 0.0
    %1513 = vmatpush1.msra.mxu0 0.0
    %1514 = vmatprep.subr.mxu0 0.0
    %1515 = vmatpush1.msra.mxu0 0.0
    %1516 = vmatprep.subr.mxu0 0.0
    %1517 = vmatpush1.msra.mxu0 0.0
    %1518 = vmatprep.subr.mxu0 0.0
    %1519 = vmatpush1.msra.mxu0 0.0
    %1520 = vmatprep.mubr.f32.mxu0 0.0
    %1521 = vmatmul.mubr.f32.gmra.mrb[0].mxu0 %v1219
    %v1522 = vpop.f32.mrb[0].mxu0
    %v1523 = vadd.f32 0.0, %v1522
    %v1524 = vpop.f32.mrb[0].mxu0
    %1525 = vmatprep.mubr.f32.mxu0 0.0
    %1526 = vmatmul.mubr.f32.gmra.mrb[0].mxu0 %v1222
    %v1527 = vpop.f32.mrb[0].mxu0
    %v1528 = vadd.f32 0.0, %v1527
    %v1529 = vpop.f32.mrb[0].mxu0
    %1530 = vmatprep.mubr.f32.mxu0 0.0
    %1531 = vmatmul.mubr.f32.gmra.mrb[0].mxu0 %v1225
    %v1532 = vpop.f32.mrb[0].mxu0
    %v1533 = vadd.f32 0.0, %v1532
    %v1534 = vpop.f32.mrb[0].mxu0
    %1535 = vmatprep.mubr.f32.mxu0 0.0
    %1536 = vmatmul.mubr.f32.gmra.mrb[0].mxu0 %v1228
    %v1537 = vpop.f32.mrb[0].mxu0
    %v1538 = vadd.f32 0.0, %v1537
    %v1539 = vpop.f32.mrb[0].mxu0
    %1540 = vdwg.mxu0
    %v1541 = vadd.f32 %v1021, %v1523
    %v1542 = vadd.f32 %v1026, %v1528
    %v1543 = vadd.f32 %v1031, %v1533
    %v1544 = vadd.f32 %v1036, %v1538
    %v1545 = vtanh.pop %v1541
    %v1546 = vtanh.pop %v1542
    %v1547 = vtanh.pop %v1543
    %v1548 = vtanh.pop %v1544
    %1549 = vmatprep.subr.mxu0 0.0
    %1550 = vmatpush1.msra.mxu0 %v1150
    %1551 = vmatprep.subr.mxu0 0.0
    %1552 = vmatpush1.msra.mxu0 %v1151
    %1553 = vmatprep.subr.mxu0 0.0
    %1554 = vmatpush1.msra.mxu0 %v1152
    %1555 = vmatprep.subr.mxu0 0.0
    %1556 = vmatpush1.msra.mxu0 %v1153
    %1557 = vmatprep.subr.mxu0 0.0
    %1558 = vmatpush1.msra.mxu0 0.0
    %1559 = vmatprep.subr.mxu0 0.0
    %1560 = vmatpush1.msra.mxu0 0.0
    %1561 = vmatprep.subr.mxu0 0.0
    %1562 = vmatpush1.msra.mxu0 0.0
    %1563 = vmatprep.subr.mxu0 0.0
    %1564 = vmatpush1.msra.mxu0 0.0
    %1565 = vmatprep.subr.mxu0 0.0
    %1566 = vmatpush1.msra.mxu0 0.0
    %1567 = vmatprep.subr.mxu0 0.0
    %1568 = vmatpush1.msra.mxu0 0.0
    %1569 = vmatprep.subr.mxu0 0.0
    %1570 = vmatpush1.msra.mxu0 0.0
    %1571 = vmatprep.subr.mxu0 0.0
    %1572 = vmatpush1.msra.mxu0 0.0
    %1573 = vmatprep.subr.mxu0 0.0
    %1574 = vmatpush1.msra.mxu0 0.0
    %1575 = vmatprep.subr.mxu0 0.0
    %1576 = vmatpush1.msra.mxu0 0.0
    %1577 = vmatprep.subr.mxu0 0.0
    %1578 = vmatpush1.msra.mxu0 0.0
    %1579 = vmatprep.subr.mxu0 0.0
    %1580 = vmatpush1.msra.mxu0 0.0
    %1581 = vmatprep.subr.mxu0 0.0
    %1582 = vmatpush1.msra.mxu0 0.0
    %1583 = vmatprep.subr.mxu0 0.0
    %1584 = vmatpush1.msra.mxu0 0.0
    %1585 = vmatprep.subr.mxu0 0.0
    %1586 = vmatpush1.msra.mxu0 0.0
    %1587 = vmatprep.subr.mxu0 0.0
    %1588 = vmatpush1.msra.mxu0 0.0
    %1589 = vmatprep.subr.mxu0 0.0
    %1590 = vmatpush1.msra.mxu0 0.0
    %1591 = vmatprep.subr.mxu0 0.0
    %1592 = vmatpush1.msra.mxu0 0.0
    %1593 = vmatprep.subr.mxu0 0.0
    %1594 = vmatpush1.msra.mxu0 0.0
    %1595 = vmatprep.subr.mxu0 0.0
    %1596 = vmatpush1.msra.mxu0 0.0
    %1597 = vmatprep.subr.mxu0 0.0
    %1598 = vmatpush1.msra.mxu0 0.0
    %1599 = vmatprep.subr.mxu0 0.0
    %1600 = vmatpush1.msra.mxu0 0.0
    %1601 = vmatprep.subr.mxu0 0.0
    %1602 = vmatpush1.msra.mxu0 0.0
    %1603 = vmatprep.subr.mxu0 0.0
    %1604 = vmatpush1.msra.mxu0 0.0
    %1605 = vmatprep.subr.mxu0 0.0
    %1606 = vmatpush1.msra.mxu0 0.0
    %1607 = vmatprep.subr.mxu0 0.0
    %1608 = vmatpush1.msra.mxu0 0.0
    %1609 = vmatprep.subr.mxu0 0.0
    %1610 = vmatpush1.msra.mxu0 0.0
    %1611 = vmatprep.subr.mxu0 0.0
    %1612 = vmatpush1.msra.mxu0 0.0
    %1613 = vmatprep.mubr.f32.mxu0 0.0
    %1614 = vmatmul.mubr.f32.gmra.mrb[0].mxu0 %v1219
    %v1615 = vpop.f32.mrb[0].mxu0
    %v1616 = vadd.f32 0.0, %v1615
    %v1617 = vpop.f32.mrb[0].mxu0
    %1618 = vmatprep.mubr.f32.mxu0 0.0
    %1619 = vmatmul.mubr.f32.gmra.mrb[0].mxu0 %v1222
    %v1620 = vpop.f32.mrb[0].mxu0
    %v1621 = vadd.f32 0.0, %v1620
    %v1622 = vpop.f32.mrb[0].mxu0
    %1623 = vmatprep.mubr.f32.mxu0 0.0
    %1624 = vmatmul.mubr.f32.gmra.mrb[0].mxu0 %v1225
    %v1625 = vpop.f32.mrb[0].mxu0
    %v1626 = vadd.f32 0.0, %v1625
    %v1627 = vpop.f32.mrb[0].mxu0
    %1628 = vmatprep.mubr.f32.mxu0 0.0
    %1629 = vmatmul.mubr.f32.gmra.mrb[0].mxu0 %v1228
    %v1630 = vpop.f32.mrb[0].mxu0
    %v1631 = vadd.f32 0.0, %v1630
    %v1632 = vpop.f32.mrb[0].mxu0
    %1633 = vdwg.mxu0
    %v1634 = vadd.f32 %v1117, %v1616
    %v1635 = vadd.f32 %v1122, %v1621
    %v1636 = vadd.f32 %v1127, %v1626
    %v1637 = vadd.f32 %v1132, %v1631
    %v1638 = vxor.u32 %v1634, 2147483648
    %v1639 = vxor.u32 %v1635, 2147483648
    %v1640 = vxor.u32 %v1636, 2147483648
    %v1641 = vxor.u32 %v1637, 2147483648
    %v1642 = vmul.f32 %v1638, 1.442695
    %v1643 = vpow.pop %v1642
    %v1644 = vmul.f32 %v1639, 1.442695
    %v1645 = vpow.pop %v1644
    %v1646 = vmul.f32 %v1640, 1.442695
    %v1647 = vpow.pop %v1646
    %v1648 = vmul.f32 %v1641, 1.442695
    %v1649 = vpow.pop %v1648
    %v1650 = vadd.f32 %v1643, 1.0
    %v1651 = vadd.f32 %v1645, 1.0
    %v1652 = vadd.f32 %v1647, 1.0
    %v1653 = vadd.f32 %v1649, 1.0
    %v1654 = vrcp.pop %v1650
    %v1655 = vmul.f32 1.0, %v1654
    %v1656 = vrcp.pop %v1651
    %v1657 = vmul.f32 1.0, %v1656
    %v1658 = vrcp.pop %v1652
    %v1659 = vmul.f32 1.0, %v1658
    %v1660 = vrcp.pop %v1653
    %v1661 = vmul.f32 1.0, %v1660
    %v1662 = vmul.f32 %v1449, %v1206
    %v1663 = vmul.f32 %v1451, %v1207
    %v1664 = vmul.f32 %v1453, %v1208
    %v1665 = vmul.f32 %v1455, %v1209
    %v1666 = vmul.f32 %v1336, %v1545
    %v1667 = vmul.f32 %v1338, %v1546
    %v1668 = vmul.f32 %v1340, %v1547
    %v1669 = vmul.f32 %v1342, %v1548
    %v1670 = vadd.f32 %v1662, %v1666
    %v1671 = vadd.f32 %v1663, %v1667
    %v1672 = vadd.f32 %v1664, %v1668
    %v1673 = vadd.f32 %v1665, %v1669
    %v1674 = vtanh.pop %v1670
    %v1675 = vtanh.pop %v1671
    %v1676 = vtanh.pop %v1672
    %v1677 = vtanh.pop %v1673
    %v1678 = vmul.f32 %v1655, %v1674
    %v1679 = vmul.f32 %v1657, %v1675
    %v1680 = vmul.f32 %v1659, %v1676
    %v1681 = vmul.f32 %v1661, %v1677
    %v1683 = vsel %vm490, %v1678, 0
    %v1686 = vsel %vm490, %v1679, 0
    %v1689 = vsel %vm490, %v1680, 0
    %v1692 = vsel %vm490, %v1681, 0
    %1694 = vmatprep.subr.mxu0 0.0
    %1695 = vmatpush1.msra.mxu0 %v1135
    %1696 = vmatprep.subr.mxu0 0.0
    %1697 = vmatpush1.msra.mxu0 %v1136
    %1698 = vmatprep.subr.mxu0 0.0
    %1699 = vmatpush1.msra.mxu0 %v1137
    %1700 = vmatprep.subr.mxu0 0.0
    %1701 = vmatpush1.msra.mxu0 %v1138
    %1702 = vmatprep.subr.mxu0 0.0
    %1703 = vmatpush1.msra.mxu0 0.0
    %1704 = vmatprep.subr.mxu0 0.0
    %1705 = vmatpush1.msra.mxu0 0.0
    %1706 = vmatprep.subr.mxu0 0.0
    %1707 = vmatpush1.msra.mxu0 0.0
    %1708 = vmatprep.subr.mxu0 0.0
    %1709 = vmatpush1.msra.mxu0 0.0
    %1710 = vmatprep.subr.mxu0 0.0
    %1711 = vmatpush1.msra.mxu0 0.0
    %1712 = vmatprep.subr.mxu0 0.0
    %1713 = vmatpush1.msra.mxu0 0.0
    %1714 = vmatprep.subr.mxu0 0.0
    %1715 = vmatpush1.msra.mxu0 0.0
    %1716 = vmatprep.subr.mxu0 0.0
    %1717 = vmatpush1.msra.mxu0 0.0
    %1718 = vmatprep.subr.mxu0 0.0
    %1719 = vmatpush1.msra.mxu0 0.0
    %1720 = vmatprep.subr.mxu0 0.0
    %1721 = vmatpush1.msra.mxu0 0.0
    %1722 = vmatprep.subr.mxu0 0.0
    %1723 = vmatpush1.msra.mxu0 0.0
    %1724 = vmatprep.subr.mxu0 0.0
    %1725 = vmatpush1.msra.mxu0 0.0
    %1726 = vmatprep.subr.mxu0 0.0
    %1727 = vmatpush1.msra.mxu0 0.0
    %1728 = vmatprep.subr.mxu0 0.0
    %1729 = vmatpush1.msra.mxu0 0.0
    %1730 = vmatprep.subr.mxu0 0.0
    %1731 = vmatpush1.msra.mxu0 0.0
    %1732 = vmatprep.subr.mxu0 0.0
    %1733 = vmatpush1.msra.mxu0 0.0
    %1734 = vmatprep.subr.mxu0 0.0
    %1735 = vmatpush1.msra.mxu0 0.0
    %1736 = vmatprep.subr.mxu0 0.0
    %1737 = vmatpush1.msra.mxu0 0.0
    %1738 = vmatprep.subr.mxu0 0.0
    %1739 = vmatpush1.msra.mxu0 0.0
    %1740 = vmatprep.subr.mxu0 0.0
    %1741 = vmatpush1.msra.mxu0 0.0
    %1742 = vmatprep.subr.mxu0 0.0
    %1743 = vmatpush1.msra.mxu0 0.0
    %1744 = vmatprep.subr.mxu0 0.0
    %1745 = vmatpush1.msra.mxu0 0.0
    %1746 = vmatprep.subr.mxu0 0.0
    %1747 = vmatpush1.msra.mxu0 0.0
    %1748 = vmatprep.subr.mxu0 0.0
    %1749 = vmatpush1.msra.mxu0 0.0
    %1750 = vmatprep.subr.mxu0 0.0
    %1751 = vmatpush1.msra.mxu0 0.0
    %1752 = vmatprep.subr.mxu0 0.0
    %1753 = vmatpush1.msra.mxu0 0.0
    %1754 = vmatprep.subr.mxu0 0.0
    %1755 = vmatpush1.msra.mxu0 0.0
    %1756 = vmatprep.subr.mxu0 0.0
    %1757 = vmatpush1.msra.mxu0 0.0
    %1758 = vmatprep.mubr.f32.mxu0 0.0
    %1759 = vmatmul.mubr.f32.gmra.mrb[0].mxu0 %v1683
    %v1760 = vpop.f32.mrb[0].mxu0
    %v1761 = vadd.f32 0.0, %v1760
    %v1762 = vpop.f32.mrb[0].mxu0
    %1763 = vmatprep.mubr.f32.mxu0 0.0
    %1764 = vmatmul.mubr.f32.gmra.mrb[0].mxu0 %v1686
    %v1765 = vpop.f32.mrb[0].mxu0
    %v1766 = vadd.f32 0.0, %v1765
    %v1767 = vpop.f32.mrb[0].mxu0
    %1768 = vmatprep.mubr.f32.mxu0 0.0
    %1769 = vmatmul.mubr.f32.gmra.mrb[0].mxu0 %v1689
    %v1770 = vpop.f32.mrb[0].mxu0
    %v1771 = vadd.f32 0.0, %v1770
    %v1772 = vpop.f32.mrb[0].mxu0
    %1773 = vmatprep.mubr.f32.mxu0 0.0
    %1774 = vmatmul.mubr.f32.gmra.mrb[0].mxu0 %v1692
    %v1775 = vpop.f32.mrb[0].mxu0
    %v1776 = vadd.f32 0.0, %v1775
    %v1777 = vpop.f32.mrb[0].mxu0
    %1778 = vdwg.mxu0
    %v1779 = vadd.f32 %v829, %v1761
    %v1780 = vadd.f32 %v834, %v1766
    %v1781 = vadd.f32 %v839, %v1771
    %v1782 = vadd.f32 %v844, %v1776
    %v1783 = vxor.u32 %v1779, 2147483648
    %v1784 = vxor.u32 %v1780, 2147483648
    %v1785 = vxor.u32 %v1781, 2147483648
    %v1786 = vxor.u32 %v1782, 2147483648
    %v1787 = vmul.f32 %v1783, 1.442695
    %v1788 = vpow.pop %v1787
    %v1789 = vmul.f32 %v1784, 1.442695
    %v1790 = vpow.pop %v1789
    %v1791 = vmul.f32 %v1785, 1.442695
    %v1792 = vpow.pop %v1791
    %v1793 = vmul.f32 %v1786, 1.442695
    %v1794 = vpow.pop %v1793
    %v1795 = vadd.f32 %v1788, 1.0
    %v1796 = vadd.f32 %v1790, 1.0
    %v1797 = vadd.f32 %v1792, 1.0
    %v1798 = vadd.f32 %v1794, 1.0
    %v1799 = vrcp.pop %v1795
    %v1800 = vmul.f32 1.0, %v1799
    %v1801 = vrcp.pop %v1796
    %v1802 = vmul.f32 1.0, %v1801
    %v1803 = vrcp.pop %v1797
    %v1804 = vmul.f32 1.0, %v1803
    %v1805 = vrcp.pop %v1798
    %v1806 = vmul.f32 1.0, %v1805
    %1807 = vmatprep.subr.mxu0 0.0
    %1808 = vmatpush1.msra.mxu0 %v1140
    %1809 = vmatprep.subr.mxu0 0.0
    %1810 = vmatpush1.msra.mxu0 %v1141
    %1811 = vmatprep.subr.mxu0 0.0
    %1812 = vmatpush1.msra.mxu0 %v1142
    %1813 = vmatprep.subr.mxu0 0.0
    %1814 = vmatpush1.msra.mxu0 %v1143
    %1815 = vmatprep.subr.mxu0 0.0
    %1816 = vmatpush1.msra.mxu0 0.0
    %1817 = vmatprep.subr.mxu0 0.0
    %1818 = vmatpush1.msra.mxu0 0.0
    %1819 = vmatprep.subr.mxu0 0.0
    %1820 = vmatpush1.msra.mxu0 0.0
    %1821 = vmatprep.subr.mxu0 0.0
    %1822 = vmatpush1.msra.mxu0 0.0
    %1823 = vmatprep.subr.mxu0 0.0
    %1824 = vmatpush1.msra.mxu0 0.0
    %1825 = vmatprep.subr.mxu0 0.0
    %1826 = vmatpush1.msra.mxu0 0.0
    %1827 = vmatprep.subr.mxu0 0.0
    %1828 = vmatpush1.msra.mxu0 0.0
    %1829 = vmatprep.subr.mxu0 0.0
    %1830 = vmatpush1.msra.mxu0 0.0
    %1831 = vmatprep.subr.mxu0 0.0
    %1832 = vmatpush1.msra.mxu0 0.0
    %1833 = vmatprep.subr.mxu0 0.0
    %1834 = vmatpush1.msra.mxu0 0.0
    %1835 = vmatprep.subr.mxu0 0.0
    %1836 = vmatpush1.msra.mxu0 0.0
    %1837 = vmatprep.subr.mxu0 0.0
    %1838 = vmatpush1.msra.mxu0 0.0
    %1839 = vmatprep.subr.mxu0 0.0
    %1840 = vmatpush1.msra.mxu0 0.0
    %1841 = vmatprep.subr.mxu0 0.0
    %1842 = vmatpush1.msra.mxu0 0.0
    %1843 = vmatprep.subr.mxu0 0.0
    %1844 = vmatpush1.msra.mxu0 0.0
    %1845 = vmatprep.subr.mxu0 0.0
    %1846 = vmatpush1.msra.mxu0 0.0
    %1847 = vmatprep.subr.mxu0 0.0
    %1848 = vmatpush1.msra.mxu0 0.0
    %1849 = vmatprep.subr.mxu0 0.0
    %1850 = vmatpush1.msra.mxu0 0.0
    %1851 = vmatprep.subr.mxu0 0.0
    %1852 = vmatpush1.msra.mxu0 0.0
    %1853 = vmatprep.subr.mxu0 0.0
    %1854 = vmatpush1.msra.mxu0 0.0
    %1855 = vmatprep.subr.mxu0 0.0
    %1856 = vmatpush1.msra.mxu0 0.0
    %1857 = vmatprep.subr.mxu0 0.0
    %1858 = vmatpush1.msra.mxu0 0.0
    %1859 = vmatprep.subr.mxu0 0.0
    %1860 = vmatpush1.msra.mxu0 0.0
    %1861 = vmatprep.subr.mxu0 0.0
    %1862 = vmatpush1.msra.mxu0 0.0
    %1863 = vmatprep.subr.mxu0 0.0
    %1864 = vmatpush1.msra.mxu0 0.0
    %1865 = vmatprep.subr.mxu0 0.0
    %1866 = vmatpush1.msra.mxu0 0.0
    %1867 = vmatprep.subr.mxu0 0.0
    %1868 = vmatpush1.msra.mxu0 0.0
    %1869 = vmatprep.subr.mxu0 0.0
    %1870 = vmatpush1.msra.mxu0 0.0
    %1871 = vmatprep.mubr.f32.mxu0 0.0
    %1872 = vmatmul.mubr.f32.gmra.mrb[0].mxu0 %v1683
    %v1873 = vpop.f32.mrb[0].mxu0
    %v1874 = vadd.f32 0.0, %v1873
    %v1875 = vpop.f32.mrb[0].mxu0
    %1876 = vmatprep.mubr.f32.mxu0 0.0
    %1877 = vmatmul.mubr.f32.gmra.mrb[0].mxu0 %v1686
    %v1878 = vpop.f32.mrb[0].mxu0
    %v1879 = vadd.f32 0.0, %v1878
    %v1880 = vpop.f32.mrb[0].mxu0
    %1881 = vmatprep.mubr.f32.mxu0 0.0
    %1882 = vmatmul.mubr.f32.gmra.mrb[0].mxu0 %v1689
    %v1883 = vpop.f32.mrb[0].mxu0
    %v1884 = vadd.f32 0.0, %v1883
    %v1885 = vpop.f32.mrb[0].mxu0
    %1886 = vmatprep.mubr.f32.mxu0 0.0
    %1887 = vmatmul.mubr.f32.gmra.mrb[0].mxu0 %v1692
    %v1888 = vpop.f32.mrb[0].mxu0
    %v1889 = vadd.f32 0.0, %v1888
    %v1890 = vpop.f32.mrb[0].mxu0
    %1891 = vdwg.mxu0
    %v1892 = vadd.f32 %v925, %v1874
    %v1893 = vadd.f32 %v930, %v1879
    %v1894 = vadd.f32 %v935, %v1884
    %v1895 = vadd.f32 %v940, %v1889
    %v1896 = vxor.u32 %v1892, 2147483648
    %v1897 = vxor.u32 %v1893, 2147483648
    %v1898 = vxor.u32 %v1894, 2147483648
    %v1899 = vxor.u32 %v1895, 2147483648
    %v1900 = vmul.f32 %v1896, 1.442695
    %v1901 = vpow.pop %v1900
    %v1902 = vmul.f32 %v1897, 1.442695
    %v1903 = vpow.pop %v1902
    %v1904 = vmul.f32 %v1898, 1.442695
    %v1905 = vpow.pop %v1904
    %v1906 = vmul.f32 %v1899, 1.442695
    %v1907 = vpow.pop %v1906
    %v1908 = vadd.f32 %v1901, 1.0
    %v1909 = vadd.f32 %v1903, 1.0
    %v1910 = vadd.f32 %v1905, 1.0
    %v1911 = vadd.f32 %v1907, 1.0
    %v1912 = vrcp.pop %v1908
    %v1913 = vmul.f32 1.0, %v1912
    %v1914 = vrcp.pop %v1909
    %v1915 = vmul.f32 1.0, %v1914
    %v1916 = vrcp.pop %v1910
    %v1917 = vmul.f32 1.0, %v1916
    %v1918 = vrcp.pop %v1911
    %v1919 = vmul.f32 1.0, %v1918
    %1920 = vmatprep.subr.mxu0 0.0
    %1921 = vmatpush1.msra.mxu0 %v1145
    %1922 = vmatprep.subr.mxu0 0.0
    %1923 = vmatpush1.msra.mxu0 %v1146
    %1924 = vmatprep.subr.mxu0 0.0
    %1925 = vmatpush1.msra.mxu0 %v1147
    %1926 = vmatprep.subr.mxu0 0.0
    %1927 = vmatpush1.msra.mxu0 %v1148
    %1928 = vmatprep.subr.mxu0 0.0
    %1929 = vmatpush1.msra.mxu0 0.0
    %1930 = vmatprep.subr.mxu0 0.0
    %1931 = vmatpush1.msra.mxu0 0.0
    %1932 = vmatprep.subr.mxu0 0.0
    %1933 = vmatpush1.msra.mxu0 0.0
    %1934 = vmatprep.subr.mxu0 0.0
    %1935 = vmatpush1.msra.mxu0 0.0
    %1936 = vmatprep.subr.mxu0 0.0
    %1937 = vmatpush1.msra.mxu0 0.0
    %1938 = vmatprep.subr.mxu0 0.0
    %1939 = vmatpush1.msra.mxu0 0.0
    %1940 = vmatprep.subr.mxu0 0.0
    %1941 = vmatpush1.msra.mxu0 0.0
    %1942 = vmatprep.subr.mxu0 0.0
    %1943 = vmatpush1.msra.mxu0 0.0
    %1944 = vmatprep.subr.mxu0 0.0
    %1945 = vmatpush1.msra.mxu0 0.0
    %1946 = vmatprep.subr.mxu0 0.0
    %1947 = vmatpush1.msra.mxu0 0.0
    %1948 = vmatprep.subr.mxu0 0.0
    %1949 = vmatpush1.msra.mxu0 0.0
    %1950 = vmatprep.subr.mxu0 0.0
    %1951 = vmatpush1.msra.mxu0 0.0
    %1952 = vmatprep.subr.mxu0 0.0
    %1953 = vmatpush1.msra.mxu0 0.0
    %1954 = vmatprep.subr.mxu0 0.0
    %1955 = vmatpush1.msra.mxu0 0.0
    %1956 = vmatprep.subr.mxu0 0.0
    %1957 = vmatpush1.msra.mxu0 0.0
    %1958 = vmatprep.subr.mxu0 0.0
    %1959 = vmatpush1.msra.mxu0 0.0
    %1960 = vmatprep.subr.mxu0 0.0
    %1961 = vmatpush1.msra.mxu0 0.0
    %1962 = vmatprep.subr.mxu0 0.0
    %1963 = vmatpush1.msra.mxu0 0.0
    %1964 = vmatprep.subr.mxu0 0.0
    %1965 = vmatpush1.msra.mxu0 0.0
    %1966 = vmatprep.subr.mxu0 0.0
    %1967 = vmatpush1.msra.mxu0 0.0
    %1968 = vmatprep.subr.mxu0 0.0
    %1969 = vmatpush1.msra.mxu0 0.0
    %1970 = vmatprep.subr.mxu0 0.0
    %1971 = vmatpush1.msra.mxu0 0.0
    %1972 = vmatprep.subr.mxu0 0.0
    %1973 = vmatpush1.msra.mxu0 0.0
    %1974 = vmatprep.subr.mxu0 0.0
    %1975 = vmatpush1.msra.mxu0 0.0
    %1976 = vmatprep.subr.mxu0 0.0
    %1977 = vmatpush1.msra.mxu0 0.0
    %1978 = vmatprep.subr.mxu0 0.0
    %1979 = vmatpush1.msra.mxu0 0.0
    %1980 = vmatprep.subr.mxu0 0.0
    %1981 = vmatpush1.msra.mxu0 0.0
    %1982 = vmatprep.subr.mxu0 0.0
    %1983 = vmatpush1.msra.mxu0 0.0
    %1984 = vmatprep.mubr.f32.mxu0 0.0
    %1985 = vmatmul.mubr.f32.gmra.mrb[0].mxu0 %v1683
    %v1986 = vpop.f32.mrb[0].mxu0
    %v1987 = vadd.f32 0.0, %v1986
    %v1988 = vpop.f32.mrb[0].mxu0
    %1989 = vmatprep.mubr.f32.mxu0 0.0
    %1990 = vmatmul.mubr.f32.gmra.mrb[0].mxu0 %v1686
    %v1991 = vpop.f32.mrb[0].mxu0
    %v1992 = vadd.f32 0.0, %v1991
    %v1993 = vpop.f32.mrb[0].mxu0
    %1994 = vmatprep.mubr.f32.mxu0 0.0
    %1995 = vmatmul.mubr.f32.gmra.mrb[0].mxu0 %v1689
    %v1996 = vpop.f32.mrb[0].mxu0
    %v1997 = vadd.f32 0.0, %v1996
    %v1998 = vpop.f32.mrb[0].mxu0
    %1999 = vmatprep.mubr.f32.mxu0 0.0
    %2000 = vmatmul.mubr.f32.gmra.mrb[0].mxu0 %v1692
    %v2001 = vpop.f32.mrb[0].mxu0
    %v2002 = vadd.f32 0.0, %v2001
    %v2003 = vpop.f32.mrb[0].mxu0
    %2004 = vdwg.mxu0
    %v2005 = vadd.f32 %v1021, %v1987
    %v2006 = vadd.f32 %v1026, %v1992
    %v2007 = vadd.f32 %v1031, %v1997
    %v2008 = vadd.f32 %v1036, %v2002
    %v2009 = vtanh.pop %v2005
    %v2010 = vtanh.pop %v2006
    %v2011 = vtanh.pop %v2007
    %v2012 = vtanh.pop %v2008
    %2013 = vmatprep.subr.mxu0 0.0
    %2014 = vmatpush1.msra.mxu0 %v1150
    %2015 = vmatprep.subr.mxu0 0.0
    %2016 = vmatpush1.msra.mxu0 %v1151
    %2017 = vmatprep.subr.mxu0 0.0
    %2018 = vmatpush1.msra.mxu0 %v1152
    %2019 = vmatprep.subr.mxu0 0.0
    %2020 = vmatpush1.msra.mxu0 %v1153
    %2021 = vmatprep.subr.mxu0 0.0
    %2022 = vmatpush1.msra.mxu0 0.0
    %2023 = vmatprep.subr.mxu0 0.0
    %2024 = vmatpush1.msra.mxu0 0.0
    %2025 = vmatprep.subr.mxu0 0.0
    %2026 = vmatpush1.msra.mxu0 0.0
    %2027 = vmatprep.subr.mxu0 0.0
    %2028 = vmatpush1.msra.mxu0 0.0
    %2029 = vmatprep.subr.mxu0 0.0
    %2030 = vmatpush1.msra.mxu0 0.0
    %2031 = vmatprep.subr.mxu0 0.0
    %2032 = vmatpush1.msra.mxu0 0.0
    %2033 = vmatprep.subr.mxu0 0.0
    %2034 = vmatpush1.msra.mxu0 0.0
    %2035 = vmatprep.subr.mxu0 0.0
    %2036 = vmatpush1.msra.mxu0 0.0
    %2037 = vmatprep.subr.mxu0 0.0
    %2038 = vmatpush1.msra.mxu0 0.0
    %2039 = vmatprep.subr.mxu0 0.0
    %2040 = vmatpush1.msra.mxu0 0.0
    %2041 = vmatprep.subr.mxu0 0.0
    %2042 = vmatpush1.msra.mxu0 0.0
    %2043 = vmatprep.subr.mxu0 0.0
    %2044 = vmatpush1.msra.mxu0 0.0
    %2045 = vmatprep.subr.mxu0 0.0
    %2046 = vmatpush1.msra.mxu0 0.0
    %2047 = vmatprep.subr.mxu0 0.0
    %2048 = vmatpush1.msra.mxu0 0.0
    %2049 = vmatprep.subr.mxu0 0.0
    %2050 = vmatpush1.msra.mxu0 0.0
    %2051 = vmatprep.subr.mxu0 0.0
    %2052 = vmatpush1.msra.mxu0 0.0
    %2053 = vmatprep.subr.mxu0 0.0
    %2054 = vmatpush1.msra.mxu0 0.0
    %2055 = vmatprep.subr.mxu0 0.0
    %2056 = vmatpush1.msra.mxu0 0.0
    %2057 = vmatprep.subr.mxu0 0.0
    %2058 = vmatpush1.msra.mxu0 0.0
    %2059 = vmatprep.subr.mxu0 0.0
    %2060 = vmatpush1.msra.mxu0 0.0
    %2061 = vmatprep.subr.mxu0 0.0
    %2062 = vmatpush1.msra.mxu0 0.0
    %2063 = vmatprep.subr.mxu0 0.0
    %2064 = vmatpush1.msra.mxu0 0.0
    %2065 = vmatprep.subr.mxu0 0.0
    %2066 = vmatpush1.msra.mxu0 0.0
    %2067 = vmatprep.subr.mxu0 0.0
    %2068 = vmatpush1.msra.mxu0 0.0
    %2069 = vmatprep.subr.mxu0 0.0
    %2070 = vmatpush1.msra.mxu0 0.0
    %2071 = vmatprep.subr.mxu0 0.0
    %2072 = vmatpush1.msra.mxu0 0.0
    %2073 = vmatprep.subr.mxu0 0.0
    %2074 = vmatpush1.msra.mxu0 0.0
    %2075 = vmatprep.subr.mxu0 0.0
    %2076 = vmatpush1.msra.mxu0 0.0
    %2077 = vmatprep.mubr.f32.mxu0 0.0
    %2078 = vmatmul.mubr.f32.gmra.mrb[0].mxu0 %v1683
    %v2079 = vpop.f32.mrb[0].mxu0
    %v2080 = vadd.f32 0.0, %v2079
    %v2081 = vpop.f32.mrb[0].mxu0
    %2082 = vmatprep.mubr.f32.mxu0 0.0
    %2083 = vmatmul.mubr.f32.gmra.mrb[0].mxu0 %v1686
    %v2084 = vpop.f32.mrb[0].mxu0
    %v2085 = vadd.f32 0.0, %v2084
    %v2086 = vpop.f32.mrb[0].mxu0
    %2087 = vmatprep.mubr.f32.mxu0 0.0
    %2088 = vmatmul.mubr.f32.gmra.mrb[0].mxu0 %v1689
    %v2089 = vpop.f32.mrb[0].mxu0
    %v2090 = vadd.f32 0.0, %v2089
    %v2091 = vpop.f32.mrb[0].mxu0
    %2092 = vmatprep.mubr.f32.mxu0 0.0
    %2093 = vmatmul.mubr.f32.gmra.mrb[0].mxu0 %v1692
    %v2094 = vpop.f32.mrb[0].mxu0
    %v2095 = vadd.f32 0.0, %v2094
    %v2096 = vpop.f32.mrb[0].mxu0
    %2097 = vdwg.mxu0
    %v2098 = vadd.f32 %v1117, %v2080
    %v2099 = vadd.f32 %v1122, %v2085
    %v2100 = vadd.f32 %v1127, %v2090
    %v2101 = vadd.f32 %v1132, %v2095
    %v2102 = vxor.u32 %v2098, 2147483648
    %v2103 = vxor.u32 %v2099, 2147483648
    %v2104 = vxor.u32 %v2100, 2147483648
    %v2105 = vxor.u32 %v2101, 2147483648
    %v2106 = vmul.f32 %v2102, 1.442695
    %v2107 = vpow.pop %v2106
    %v2108 = vmul.f32 %v2103, 1.442695
    %v2109 = vpow.pop %v2108
    %v2110 = vmul.f32 %v2104, 1.442695
    %v2111 = vpow.pop %v2110
    %v2112 = vmul.f32 %v2105, 1.442695
    %v2113 = vpow.pop %v2112
    %v2114 = vadd.f32 %v2107, 1.0
    %v2115 = vadd.f32 %v2109, 1.0
    %v2116 = vadd.f32 %v2111, 1.0
    %v2117 = vadd.f32 %v2113, 1.0
    %v2118 = vrcp.pop %v2114
    %v2119 = vmul.f32 1.0, %v2118
    %v2120 = vrcp.pop %v2115
    %v2121 = vmul.f32 1.0, %v2120
    %v2122 = vrcp.pop %v2116
    %v2123 = vmul.f32 1.0, %v2122
    %v2124 = vrcp.pop %v2117
    %v2125 = vmul.f32 1.0, %v2124
    %v2126 = vmul.f32 %v1913, %v1670
    %v2127 = vmul.f32 %v1915, %v1671
    %v2128 = vmul.f32 %v1917, %v1672
    %v2129 = vmul.f32 %v1919, %v1673
    %v2130 = vmul.f32 %v1800, %v2009
    %v2131 = vmul.f32 %v1802, %v2010
    %v2132 = vmul.f32 %v1804, %v2011
    %v2133 = vmul.f32 %v1806, %v2012
    %v2134 = vadd.f32 %v2126, %v2130
    %v2135 = vadd.f32 %v2127, %v2131
    %v2136 = vadd.f32 %v2128, %v2132
    %v2137 = vadd.f32 %v2129, %v2133
    %v2138 = vtanh.pop %v2134
    %v2139 = vtanh.pop %v2135
    %v2140 = vtanh.pop %v2136
    %v2141 = vtanh.pop %v2137
    %v2142 = vmul.f32 %v2119, %v2138
    %v2143 = vmul.f32 %v2121, %v2139
    %v2144 = vmul.f32 %v2123, %v2140
    %v2145 = vmul.f32 %v2125, %v2141
    %v2147 = vsel %vm490, %v2142, 0
    %v2150 = vsel %vm490, %v2143, 0
    %v2153 = vsel %vm490, %v2144, 0
    %v2156 = vsel %vm490, %v2145, 0
    %2158 = vmatprep.subr.mxu0 0.0
    %2159 = vmatpush1.msra.mxu0 %v1135
    %2160 = vmatprep.subr.mxu0 0.0
    %2161 = vmatpush1.msra.mxu0 %v1136
    %2162 = vmatprep.subr.mxu0 0.0
    %2163 = vmatpush1.msra.mxu0 %v1137
    %2164 = vmatprep.subr.mxu0 0.0
    %2165 = vmatpush1.msra.mxu0 %v1138
    %2166 = vmatprep.subr.mxu0 0.0
    %2167 = vmatpush1.msra.mxu0 0.0
    %2168 = vmatprep.subr.mxu0 0.0
    %2169 = vmatpush1.msra.mxu0 0.0
    %2170 = vmatprep.subr.mxu0 0.0
    %2171 = vmatpush1.msra.mxu0 0.0
    %2172 = vmatprep.subr.mxu0 0.0
    %2173 = vmatpush1.msra.mxu0 0.0
    %2174 = vmatprep.subr.mxu0 0.0
    %2175 = vmatpush1.msra.mxu0 0.0
    %2176 = vmatprep.subr.mxu0 0.0
    %2177 = vmatpush1.msra.mxu0 0.0
    %2178 = vmatprep.subr.mxu0 0.0
    %2179 = vmatpush1.msra.mxu0 0.0
    %2180 = vmatprep.subr.mxu0 0.0
    %2181 = vmatpush1.msra.mxu0 0.0
    %2182 = vmatprep.subr.mxu0 0.0
    %2183 = vmatpush1.msra.mxu0 0.0
    %2184 = vmatprep.subr.mxu0 0.0
    %2185 = vmatpush1.msra.mxu0 0.0
    %2186 = vmatprep.subr.mxu0 0.0
    %2187 = vmatpush1.msra.mxu0 0.0
    %2188 = vmatprep.subr.mxu0 0.0
    %2189 = vmatpush1.msra.mxu0 0.0
    %2190 = vmatprep.subr.mxu0 0.0
    %2191 = vmatpush1.msra.mxu0 0.0
    %2192 = vmatprep.subr.mxu0 0.0
    %2193 = vmatpush1.msra.mxu0 0.0
    %2194 = vmatprep.subr.mxu0 0.0
    %2195 = vmatpush1.msra.mxu0 0.0
    %2196 = vmatprep.subr.mxu0 0.0
    %2197 = vmatpush1.msra.mxu0 0.0
    %2198 = vmatprep.subr.mxu0 0.0
    %2199 = vmatpush1.msra.mxu0 0.0
    %2200 = vmatprep.subr.mxu0 0.0
    %2201 = vmatpush1.msra.mxu0 0.0
    %2202 = vmatprep.subr.mxu0 0.0
    %2203 = vmatpush1.msra.mxu0 0.0
    %2204 = vmatprep.subr.mxu0 0.0
    %2205 = vmatpush1.msra.mxu0 0.0
    %2206 = vmatprep.subr.mxu0 0.0
    %2207 = vmatpush1.msra.mxu0 0.0
    %2208 = vmatprep.subr.mxu0 0.0
    %2209 = vmatpush1.msra.mxu0 0.0
    %2210 = vmatprep.subr.mxu0 0.0
    %2211 = vmatpush1.msra.mxu0 0.0
    %2212 = vmatprep.subr.mxu0 0.0
    %2213 = vmatpush1.msra.mxu0 0.0
    %2214 = vmatprep.subr.mxu0 0.0
    %2215 = vmatpush1.msra.mxu0 0.0
    %2216 = vmatprep.subr.mxu0 0.0
    %2217 = vmatpush1.msra.mxu0 0.0
    %2218 = vmatprep.subr.mxu0 0.0
    %2219 = vmatpush1.msra.mxu0 0.0
    %2220 = vmatprep.subr.mxu0 0.0
    %2221 = vmatpush1.msra.mxu0 0.0
    %2222 = vmatprep.mubr.f32.mxu0 0.0
    %2223 = vmatmul.mubr.f32.gmra.mrb[0].mxu0 %v2147
    %v2224 = vpop.f32.mrb[0].mxu0
    %v2225 = vadd.f32 0.0, %v2224
    %v2226 = vpop.f32.mrb[0].mxu0
    %2227 = vmatprep.mubr.f32.mxu0 0.0
    %2228 = vmatmul.mubr.f32.gmra.mrb[0].mxu0 %v2150
    %v2229 = vpop.f32.mrb[0].mxu0
    %v2230 = vadd.f32 0.0, %v2229
    %v2231 = vpop.f32.mrb[0].mxu0
    %2232 = vmatprep.mubr.f32.mxu0 0.0
    %2233 = vmatmul.mubr.f32.gmra.mrb[0].mxu0 %v2153
    %v2234 = vpop.f32.mrb[0].mxu0
    %v2235 = vadd.f32 0.0, %v2234
    %v2236 = vpop.f32.mrb[0].mxu0
    %2237 = vmatprep.mubr.f32.mxu0 0.0
    %2238 = vmatmul.mubr.f32.gmra.mrb[0].mxu0 %v2156
    %v2239 = vpop.f32.mrb[0].mxu0
    %v2240 = vadd.f32 0.0, %v2239
    %v2241 = vpop.f32.mrb[0].mxu0
    %2242 = vdwg.mxu0
    %v2243 = vadd.f32 %v829, %v2225
    %v2244 = vadd.f32 %v834, %v2230
    %v2245 = vadd.f32 %v839, %v2235
    %v2246 = vadd.f32 %v844, %v2240
    %v2247 = vxor.u32 %v2243, 2147483648
    %v2248 = vxor.u32 %v2244, 2147483648
    %v2249 = vxor.u32 %v2245, 2147483648
    %v2250 = vxor.u32 %v2246, 2147483648
    %v2251 = vmul.f32 %v2247, 1.442695
    %v2252 = vpow.pop %v2251
    %v2253 = vmul.f32 %v2248, 1.442695
    %v2254 = vpow.pop %v2253
    %v2255 = vmul.f32 %v2249, 1.442695
    %v2256 = vpow.pop %v2255
    %v2257 = vmul.f32 %v2250, 1.442695
    %v2258 = vpow.pop %v2257
    %v2259 = vadd.f32 %v2252, 1.0
    %v2260 = vadd.f32 %v2254, 1.0
    %v2261 = vadd.f32 %v2256, 1.0
    %v2262 = vadd.f32 %v2258, 1.0
    %v2263 = vrcp.pop %v2259
    %v2264 = vmul.f32 1.0, %v2263
    %v2265 = vrcp.pop %v2260
    %v2266 = vmul.f32 1.0, %v2265
    %v2267 = vrcp.pop %v2261
    %v2268 = vmul.f32 1.0, %v2267
    %v2269 = vrcp.pop %v2262
    %v2270 = vmul.f32 1.0, %v2269
    %2271 = vmatprep.subr.mxu0 0.0
    %2272 = vmatpush1.msra.mxu0 %v1140
    %2273 = vmatprep.subr.mxu0 0.0
    %2274 = vmatpush1.msra.mxu0 %v1141
    %2275 = vmatprep.subr.mxu0 0.0
    %2276 = vmatpush1.msra.mxu0 %v1142
    %2277 = vmatprep.subr.mxu0 0.0
    %2278 = vmatpush1.msra.mxu0 %v1143
    %2279 = vmatprep.subr.mxu0 0.0
    %2280 = vmatpush1.msra.mxu0 0.0
    %2281 = vmatprep.subr.mxu0 0.0
    %2282 = vmatpush1.msra.mxu0 0.0
    %2283 = vmatprep.subr.mxu0 0.0
    %2284 = vmatpush1.msra.mxu0 0.0
    %2285 = vmatprep.subr.mxu0 0.0
    %2286 = vmatpush1.msra.mxu0 0.0
    %2287 = vmatprep.subr.mxu0 0.0
    %2288 = vmatpush1.msra.mxu0 0.0
    %2289 = vmatprep.subr.mxu0 0.0
    %2290 = vmatpush1.msra.mxu0 0.0
    %2291 = vmatprep.subr.mxu0 0.0
    %2292 = vmatpush1.msra.mxu0 0.0
    %2293 = vmatprep.subr.mxu0 0.0
    %2294 = vmatpush1.msra.mxu0 0.0
    %2295 = vmatprep.subr.mxu0 0.0
    %2296 = vmatpush1.msra.mxu0 0.0
    %2297 = vmatprep.subr.mxu0 0.0
    %2298 = vmatpush1.msra.mxu0 0.0
    %2299 = vmatprep.subr.mxu0 0.0
    %2300 = vmatpush1.msra.mxu0 0.0
    %2301 = vmatprep.subr.mxu0 0.0
    %2302 = vmatpush1.msra.mxu0 0.0
    %2303 = vmatprep.subr.mxu0 0.0
    %2304 = vmatpush1.msra.mxu0 0.0
    %2305 = vmatprep.subr.mxu0 0.0
    %2306 = vmatpush1.msra.mxu0 0.0
    %2307 = vmatprep.subr.mxu0 0.0
    %2308 = vmatpush1.msra.mxu0 0.0
    %2309 = vmatprep.subr.mxu0 0.0
    %2310 = vmatpush1.msra.mxu0 0.0
    %2311 = vmatprep.subr.mxu0 0.0
    %2312 = vmatpush1.msra.mxu0 0.0
    %2313 = vmatprep.subr.mxu0 0.0
    %2314 = vmatpush1.msra.mxu0 0.0
    %2315 = vmatprep.subr.mxu0 0.0
    %2316 = vmatpush1.msra.mxu0 0.0
    %2317 = vmatprep.subr.mxu0 0.0
    %2318 = vmatpush1.msra.mxu0 0.0
    %2319 = vmatprep.subr.mxu0 0.0
    %2320 = vmatpush1.msra.mxu0 0.0
    %2321 = vmatprep.subr.mxu0 0.0
    %2322 = vmatpush1.msra.mxu0 0.0
    %2323 = vmatprep.subr.mxu0 0.0
    %2324 = vmatpush1.msra.mxu0 0.0
    %2325 = vmatprep.subr.mxu0 0.0
    %2326 = vmatpush1.msra.mxu0 0.0
    %2327 = vmatprep.subr.mxu0 0.0
    %2328 = vmatpush1.msra.mxu0 0.0
    %2329 = vmatprep.subr.mxu0 0.0
    %2330 = vmatpush1.msra.mxu0 0.0
    %2331 = vmatprep.subr.mxu0 0.0
    %2332 = vmatpush1.msra.mxu0 0.0
    %2333 = vmatprep.subr.mxu0 0.0
    %2334 = vmatpush1.msra.mxu0 0.0
    %2335 = vmatprep.mubr.f32.mxu0 0.0
    %2336 = vmatmul.mubr.f32.gmra.mrb[0].mxu0 %v2147
    %v2337 = vpop.f32.mrb[0].mxu0
    %v2338 = vadd.f32 0.0, %v2337
    %v2339 = vpop.f32.mrb[0].mxu0
    %2340 = vmatprep.mubr.f32.mxu0 0.0
    %2341 = vmatmul.mubr.f32.gmra.mrb[0].mxu0 %v2150
    %v2342 = vpop.f32.mrb[0].mxu0
    %v2343 = vadd.f32 0.0, %v2342
    %v2344 = vpop.f32.mrb[0].mxu0
    %2345 = vmatprep.mubr.f32.mxu0 0.0
    %2346 = vmatmul.mubr.f32.gmra.mrb[0].mxu0 %v2153
    %v2347 = vpop.f32.mrb[0].mxu0
    %v2348 = vadd.f32 0.0, %v2347
    %v2349 = vpop.f32.mrb[0].mxu0
    %2350 = vmatprep.mubr.f32.mxu0 0.0
    %2351 = vmatmul.mubr.f32.gmra.mrb[0].mxu0 %v2156
    %v2352 = vpop.f32.mrb[0].mxu0
    %v2353 = vadd.f32 0.0, %v2352
    %v2354 = vpop.f32.mrb[0].mxu0
    %2355 = vdwg.mxu0
    %v2356 = vadd.f32 %v925, %v2338
    %v2357 = vadd.f32 %v930, %v2343
    %v2358 = vadd.f32 %v935, %v2348
    %v2359 = vadd.f32 %v940, %v2353
    %v2360 = vxor.u32 %v2356, 2147483648
    %v2361 = vxor.u32 %v2357, 2147483648
    %v2362 = vxor.u32 %v2358, 2147483648
    %v2363 = vxor.u32 %v2359, 2147483648
    %v2364 = vmul.f32 %v2360, 1.442695
    %v2365 = vpow.pop %v2364
    %v2366 = vmul.f32 %v2361, 1.442695
    %v2367 = vpow.pop %v2366
    %v2368 = vmul.f32 %v2362, 1.442695
    %v2369 = vpow.pop %v2368
    %v2370 = vmul.f32 %v2363, 1.442695
    %v2371 = vpow.pop %v2370
    %v2372 = vadd.f32 %v2365, 1.0
    %v2373 = vadd.f32 %v2367, 1.0
    %v2374 = vadd.f32 %v2369, 1.0
    %v2375 = vadd.f32 %v2371, 1.0
    %v2376 = vrcp.pop %v2372
    %v2377 = vmul.f32 1.0, %v2376
    %v2378 = vrcp.pop %v2373
    %v2379 = vmul.f32 1.0, %v2378
    %v2380 = vrcp.pop %v2374
    %v2381 = vmul.f32 1.0, %v2380
    %v2382 = vrcp.pop %v2375
    %v2383 = vmul.f32 1.0, %v2382
    %2384 = vmatprep.subr.mxu0 0.0
    %2385 = vmatpush1.msra.mxu0 %v1145
    %2386 = vmatprep.subr.mxu0 0.0
    %2387 = vmatpush1.msra.mxu0 %v1146
    %2388 = vmatprep.subr.mxu0 0.0
    %2389 = vmatpush1.msra.mxu0 %v1147
    %2390 = vmatprep.subr.mxu0 0.0
    %2391 = vmatpush1.msra.mxu0 %v1148
    %2392 = vmatprep.subr.mxu0 0.0
    %2393 = vmatpush1.msra.mxu0 0.0
    %2394 = vmatprep.subr.mxu0 0.0
    %2395 = vmatpush1.msra.mxu0 0.0
    %2396 = vmatprep.subr.mxu0 0.0
    %2397 = vmatpush1.msra.mxu0 0.0
    %2398 = vmatprep.subr.mxu0 0.0
    %2399 = vmatpush1.msra.mxu0 0.0
    %2400 = vmatprep.subr.mxu0 0.0
    %2401 = vmatpush1.msra.mxu0 0.0
    %2402 = vmatprep.subr.mxu0 0.0
    %2403 = vmatpush1.msra.mxu0 0.0
    %2404 = vmatprep.subr.mxu0 0.0
    %2405 = vmatpush1.msra.mxu0 0.0
    %2406 = vmatprep.subr.mxu0 0.0
    %2407 = vmatpush1.msra.mxu0 0.0
    %2408 = vmatprep.subr.mxu0 0.0
    %2409 = vmatpush1.msra.mxu0 0.0
    %2410 = vmatprep.subr.mxu0 0.0
    %2411 = vmatpush1.msra.mxu0 0.0
    %2412 = vmatprep.subr.mxu0 0.0
    %2413 = vmatpush1.msra.mxu0 0.0
    %2414 = vmatprep.subr.mxu0 0.0
    %2415 = vmatpush1.msra.mxu0 0.0
    %2416 = vmatprep.subr.mxu0 0.0
    %2417 = vmatpush1.msra.mxu0 0.0
    %2418 = vmatprep.subr.mxu0 0.0
    %2419 = vmatpush1.msra.mxu0 0.0
    %2420 = vmatprep.subr.mxu0 0.0
    %2421 = vmatpush1.msra.mxu0 0.0
    %2422 = vmatprep.subr.mxu0 0.0
    %2423 = vmatpush1.msra.mxu0 0.0
    %2424 = vmatprep.subr.mxu0 0.0
    %2425 = vmatpush1.msra.mxu0 0.0
    %2426 = vmatprep.subr.mxu0 0.0
    %2427 = vmatpush1.msra.mxu0 0.0
    %2428 = vmatprep.subr.mxu0 0.0
    %2429 = vmatpush1.msra.mxu0 0.0
    %2430 = vmatprep.subr.mxu0 0.0
    %2431 = vmatpush1.msra.mxu0 0.0
    %2432 = vmatprep.subr.mxu0 0.0
    %2433 = vmatpush1.msra.mxu0 0.0
    %2434 = vmatprep.subr.mxu0 0.0
    %2435 = vmatpush1.msra.mxu0 0.0
    %2436 = vmatprep.subr.mxu0 0.0
    %2437 = vmatpush1.msra.mxu0 0.0
    %2438 = vmatprep.subr.mxu0 0.0
    %2439 = vmatpush1.msra.mxu0 0.0
    %2440 = vmatprep.subr.mxu0 0.0
    %2441 = vmatpush1.msra.mxu0 0.0
    %2442 = vmatprep.subr.mxu0 0.0
    %2443 = vmatpush1.msra.mxu0 0.0
    %2444 = vmatprep.subr.mxu0 0.0
    %2445 = vmatpush1.msra.mxu0 0.0
    %2446 = vmatprep.subr.mxu0 0.0
    %2447 = vmatpush1.msra.mxu0 0.0
    %2448 = vmatprep.mubr.f32.mxu0 0.0
    %2449 = vmatmul.mubr.f32.gmra.mrb[0].mxu0 %v2147
    %v2450 = vpop.f32.mrb[0].mxu0
    %v2451 = vadd.f32 0.0, %v2450
    %v2452 = vpop.f32.mrb[0].mxu0
    %2453 = vmatprep.mubr.f32.mxu0 0.0
    %2454 = vmatmul.mubr.f32.gmra.mrb[0].mxu0 %v2150
    %v2455 = vpop.f32.mrb[0].mxu0
    %v2456 = vadd.f32 0.0, %v2455
    %v2457 = vpop.f32.mrb[0].mxu0
    %2458 = vmatprep.mubr.f32.mxu0 0.0
    %2459 = vmatmul.mubr.f32.gmra.mrb[0].mxu0 %v2153
    %v2460 = vpop.f32.mrb[0].mxu0
    %v2461 = vadd.f32 0.0, %v2460
    %v2462 = vpop.f32.mrb[0].mxu0
    %2463 = vmatprep.mubr.f32.mxu0 0.0
    %2464 = vmatmul.mubr.f32.gmra.mrb[0].mxu0 %v2156
    %v2465 = vpop.f32.mrb[0].mxu0
    %v2466 = vadd.f32 0.0, %v2465
    %v2467 = vpop.f32.mrb[0].mxu0
    %2468 = vdwg.mxu0
    %v2469 = vadd.f32 %v1021, %v2451
    %v2470 = vadd.f32 %v1026, %v2456
    %v2471 = vadd.f32 %v1031, %v2461
    %v2472 = vadd.f32 %v1036, %v2466
    %v2473 = vtanh.pop %v2469
    %v2474 = vtanh.pop %v2470
    %v2475 = vtanh.pop %v2471
    %v2476 = vtanh.pop %v2472
    %2477 = vmatprep.subr.mxu0 0.0
    %2478 = vmatpush1.msra.mxu0 %v1150
    %2479 = vmatprep.subr.mxu0 0.0
    %2480 = vmatpush1.msra.mxu0 %v1151
    %2481 = vmatprep.subr.mxu0 0.0
    %2482 = vmatpush1.msra.mxu0 %v1152
    %2483 = vmatprep.subr.mxu0 0.0
    %2484 = vmatpush1.msra.mxu0 %v1153
    %2485 = vmatprep.subr.mxu0 0.0
    %2486 = vmatpush1.msra.mxu0 0.0
    %2487 = vmatprep.subr.mxu0 0.0
    %2488 = vmatpush1.msra.mxu0 0.0
    %2489 = vmatprep.subr.mxu0 0.0
    %2490 = vmatpush1.msra.mxu0 0.0
    %2491 = vmatprep.subr.mxu0 0.0
    %2492 = vmatpush1.msra.mxu0 0.0
    %2493 = vmatprep.subr.mxu0 0.0
    %2494 = vmatpush1.msra.mxu0 0.0
    %2495 = vmatprep.subr.mxu0 0.0
    %2496 = vmatpush1.msra.mxu0 0.0
    %2497 = vmatprep.subr.mxu0 0.0
    %2498 = vmatpush1.msra.mxu0 0.0
    %2499 = vmatprep.subr.mxu0 0.0
    %2500 = vmatpush1.msra.mxu0 0.0
    %2501 = vmatprep.subr.mxu0 0.0
    %2502 = vmatpush1.msra.mxu0 0.0
    %2503 = vmatprep.subr.mxu0 0.0
    %2504 = vmatpush1.msra.mxu0 0.0
    %2505 = vmatprep.subr.mxu0 0.0
    %2506 = vmatpush1.msra.mxu0 0.0
    %2507 = vmatprep.subr.mxu0 0.0
    %2508 = vmatpush1.msra.mxu0 0.0
    %2509 = vmatprep.subr.mxu0 0.0
    %2510 = vmatpush1.msra.mxu0 0.0
    %2511 = vmatprep.subr.mxu0 0.0
    %2512 = vmatpush1.msra.mxu0 0.0
    %2513 = vmatprep.subr.mxu0 0.0
    %2514 = vmatpush1.msra.mxu0 0.0
    %2515 = vmatprep.subr.mxu0 0.0
    %2516 = vmatpush1.msra.mxu0 0.0
    %2517 = vmatprep.subr.mxu0 0.0
    %2518 = vmatpush1.msra.mxu0 0.0
    %2519 = vmatprep.subr.mxu0 0.0
    %2520 = vmatpush1.msra.mxu0 0.0
    %2521 = vmatprep.subr.mxu0 0.0
    %2522 = vmatpush1.msra.mxu0 0.0
    %2523 = vmatprep.subr.mxu0 0.0
    %2524 = vmatpush1.msra.mxu0 0.0
    %2525 = vmatprep.subr.mxu0 0.0
    %2526 = vmatpush1.msra.mxu0 0.0
    %2527 = vmatprep.subr.mxu0 0.0
    %2528 = vmatpush1.msra.mxu0 0.0
    %2529 = vmatprep.subr.mxu0 0.0
    %2530 = vmatpush1.msra.mxu0 0.0
    %2531 = vmatprep.subr.mxu0 0.0
    %2532 = vmatpush1.msra.mxu0 0.0
    %2533 = vmatprep.subr.mxu0 0.0
    %2534 = vmatpush1.msra.mxu0 0.0
    %2535 = vmatprep.subr.mxu0 0.0
    %2536 = vmatpush1.msra.mxu0 0.0
    %2537 = vmatprep.subr.mxu0 0.0
    %2538 = vmatpush1.msra.mxu0 0.0
    %2539 = vmatprep.subr.mxu0 0.0
    %2540 = vmatpush1.msra.mxu0 0.0
    %2541 = vmatprep.mubr.f32.mxu0 0.0
    %2542 = vmatmul.mubr.f32.gmra.mrb[0].mxu0 %v2147
    %v2543 = vpop.f32.mrb[0].mxu0
    %v2544 = vadd.f32 0.0, %v2543
    %v2545 = vpop.f32.mrb[0].mxu0
    %2546 = vmatprep.mubr.f32.mxu0 0.0
    %2547 = vmatmul.mubr.f32.gmra.mrb[0].mxu0 %v2150
    %v2548 = vpop.f32.mrb[0].mxu0
    %v2549 = vadd.f32 0.0, %v2548
    %v2550 = vpop.f32.mrb[0].mxu0
    %2551 = vmatprep.mubr.f32.mxu0 0.0
    %2552 = vmatmul.mubr.f32.gmra.mrb[0].mxu0 %v2153
    %v2553 = vpop.f32.mrb[0].mxu0
    %v2554 = vadd.f32 0.0, %v2553
    %v2555 = vpop.f32.mrb[0].mxu0
    %2556 = vmatprep.mubr.f32.mxu0 0.0
    %2557 = vmatmul.mubr.f32.gmra.mrb[0].mxu0 %v2156
    %v2558 = vpop.f32.mrb[0].mxu0
    %v2559 = vadd.f32 0.0, %v2558
    %v2560 = vpop.f32.mrb[0].mxu0
    %2561 = vdwg.mxu0
    %v2562 = vadd.f32 %v1117, %v2544
    %v2563 = vadd.f32 %v1122, %v2549
    %v2564 = vadd.f32 %v1127, %v2554
    %v2565 = vadd.f32 %v1132, %v2559
    %v2566 = vxor.u32 %v2562, 2147483648
    %v2567 = vxor.u32 %v2563, 2147483648
    %v2568 = vxor.u32 %v2564, 2147483648
    %v2569 = vxor.u32 %v2565, 2147483648
    %v2570 = vmul.f32 %v2566, 1.442695
    %v2571 = vpow.pop %v2570
    %v2572 = vmul.f32 %v2567, 1.442695
    %v2573 = vpow.pop %v2572
    %v2574 = vmul.f32 %v2568, 1.442695
    %v2575 = vpow.pop %v2574
    %v2576 = vmul.f32 %v2569, 1.442695
    %v2577 = vpow.pop %v2576
    %v2578 = vadd.f32 %v2571, 1.0
    %v2579 = vadd.f32 %v2573, 1.0
    %v2580 = vadd.f32 %v2575, 1.0
    %v2581 = vadd.f32 %v2577, 1.0
    %v2582 = vrcp.pop %v2578
    %v2583 = vmul.f32 1.0, %v2582
    %v2584 = vrcp.pop %v2579
    %v2585 = vmul.f32 1.0, %v2584
    %v2586 = vrcp.pop %v2580
    %v2587 = vmul.f32 1.0, %v2586
    %v2588 = vrcp.pop %v2581
    %v2589 = vmul.f32 1.0, %v2588
    %v2590 = vmul.f32 %v2377, %v2134
    %v2591 = vmul.f32 %v2379, %v2135
    %v2592 = vmul.f32 %v2381, %v2136
    %v2593 = vmul.f32 %v2383, %v2137
    %v2594 = vmul.f32 %v2264, %v2473
    %v2595 = vmul.f32 %v2266, %v2474
    %v2596 = vmul.f32 %v2268, %v2475
    %v2597 = vmul.f32 %v2270, %v2476
    %v2598 = vadd.f32 %v2590, %v2594
    %v2599 = vadd.f32 %v2591, %v2595
    %v2600 = vadd.f32 %v2592, %v2596
    %v2601 = vadd.f32 %v2593, %v2597
    %v2602 = vtanh.pop %v2598
    %v2603 = vtanh.pop %v2599
    %v2604 = vtanh.pop %v2600
    %v2605 = vtanh.pop %v2601
    %v2606 = vmul.f32 %v2583, %v2602
    %v2607 = vmul.f32 %v2585, %v2603
    %v2608 = vmul.f32 %v2587, %v2604
    %v2609 = vmul.f32 %v2589, %v2605
    %v2611 = vsel %vm490, %v2606, 0
    %v2614 = vsel %vm490, %v2607, 0
    %v2617 = vsel %vm490, %v2608, 0
    %v2620 = vsel %vm490, %v2609, 0
    %2622 = vmatprep.subr.mxu0 0.0
    %2623 = vmatpush1.msra.mxu0 %v1135
    %2624 = vmatprep.subr.mxu0 0.0
    %2625 = vmatpush1.msra.mxu0 %v1136
    %2626 = vmatprep.subr.mxu0 0.0
    %2627 = vmatpush1.msra.mxu0 %v1137
    %2628 = vmatprep.subr.mxu0 0.0
    %2629 = vmatpush1.msra.mxu0 %v1138
    %2630 = vmatprep.subr.mxu0 0.0
    %2631 = vmatpush1.msra.mxu0 0.0
    %2632 = vmatprep.subr.mxu0 0.0
    %2633 = vmatpush1.msra.mxu0 0.0
    %2634 = vmatprep.subr.mxu0 0.0
    %2635 = vmatpush1.msra.mxu0 0.0
    %2636 = vmatprep.subr.mxu0 0.0
    %2637 = vmatpush1.msra.mxu0 0.0
    %2638 = vmatprep.subr.mxu0 0.0
    %2639 = vmatpush1.msra.mxu0 0.0
    %2640 = vmatprep.subr.mxu0 0.0
    %2641 = vmatpush1.msra.mxu0 0.0
    %2642 = vmatprep.subr.mxu0 0.0
    %2643 = vmatpush1.msra.mxu0 0.0
    %2644 = vmatprep.subr.mxu0 0.0
    %2645 = vmatpush1.msra.mxu0 0.0
    %2646 = vmatprep.subr.mxu0 0.0
    %2647 = vmatpush1.msra.mxu0 0.0
    %2648 = vmatprep.subr.mxu0 0.0
    %2649 = vmatpush1.msra.mxu0 0.0
    %2650 = vmatprep.subr.mxu0 0.0
    %2651 = vmatpush1.msra.mxu0 0.0
    %2652 = vmatprep.subr.mxu0 0.0
    %2653 = vmatpush1.msra.mxu0 0.0
    %2654 = vmatprep.subr.mxu0 0.0
    %2655 = vmatpush1.msra.mxu0 0.0
    %2656 = vmatprep.subr.mxu0 0.0
    %2657 = vmatpush1.msra.mxu0 0.0
    %2658 = vmatprep.subr.mxu0 0.0
    %2659 = vmatpush1.msra.mxu0 0.0
    %2660 = vmatprep.subr.mxu0 0.0
    %2661 = vmatpush1.msra.mxu0 0.0
    %2662 = vmatprep.subr.mxu0 0.0
    %2663 = vmatpush1.msra.mxu0 0.0
    %2664 = vmatprep.subr.mxu0 0.0
    %2665 = vmatpush1.msra.mxu0 0.0
    %2666 = vmatprep.subr.mxu0 0.0
    %2667 = vmatpush1.msra.mxu0 0.0
    %2668 = vmatprep.subr.mxu0 0.0
    %2669 = vmatpush1.msra.mxu0 0.0
    %2670 = vmatprep.subr.mxu0 0.0
    %2671 = vmatpush1.msra.mxu0 0.0
    %2672 = vmatprep.subr.mxu0 0.0
    %2673 = vmatpush1.msra.mxu0 0.0
    %2674 = vmatprep.subr.mxu0 0.0
    %2675 = vmatpush1.msra.mxu0 0.0
    %2676 = vmatprep.subr.mxu0 0.0
    %2677 = vmatpush1.msra.mxu0 0.0
    %2678 = vmatprep.subr.mxu0 0.0
    %2679 = vmatpush1.msra.mxu0 0.0
    %2680 = vmatprep.subr.mxu0 0.0
    %2681 = vmatpush1.msra.mxu0 0.0
    %2682 = vmatprep.subr.mxu0 0.0
    %2683 = vmatpush1.msra.mxu0 0.0
    %2684 = vmatprep.subr.mxu0 0.0
    %2685 = vmatpush1.msra.mxu0 0.0
    %2686 = vmatprep.mubr.f32.mxu0 0.0
    %2687 = vmatmul.mubr.f32.gmra.mrb[0].mxu0 %v2611
    %v2688 = vpop.f32.mrb[0].mxu0
    %v2689 = vadd.f32 0.0, %v2688
    %v2690 = vpop.f32.mrb[0].mxu0
    %2691 = vmatprep.mubr.f32.mxu0 0.0
    %2692 = vmatmul.mubr.f32.gmra.mrb[0].mxu0 %v2614
    %v2693 = vpop.f32.mrb[0].mxu0
    %v2694 = vadd.f32 0.0, %v2693
    %v2695 = vpop.f32.mrb[0].mxu0
    %2696 = vmatprep.mubr.f32.mxu0 0.0
    %2697 = vmatmul.mubr.f32.gmra.mrb[0].mxu0 %v2617
    %v2698 = vpop.f32.mrb[0].mxu0
    %v2699 = vadd.f32 0.0, %v2698
    %v2700 = vpop.f32.mrb[0].mxu0
    %2701 = vmatprep.mubr.f32.mxu0 0.0
    %2702 = vmatmul.mubr.f32.gmra.mrb[0].mxu0 %v2620
    %v2703 = vpop.f32.mrb[0].mxu0
    %v2704 = vadd.f32 0.0, %v2703
    %v2705 = vpop.f32.mrb[0].mxu0
    %2706 = vdwg.mxu0
    %v2707 = vadd.f32 %v829, %v2689
    %v2708 = vadd.f32 %v834, %v2694
    %v2709 = vadd.f32 %v839, %v2699
    %v2710 = vadd.f32 %v844, %v2704
    %v2711 = vxor.u32 %v2707, 2147483648
    %v2712 = vxor.u32 %v2708, 2147483648
    %v2713 = vxor.u32 %v2709, 2147483648
    %v2714 = vxor.u32 %v2710, 2147483648
    %v2715 = vmul.f32 %v2711, 1.442695
    %v2716 = vpow.pop %v2715
    %v2717 = vmul.f32 %v2712, 1.442695
    %v2718 = vpow.pop %v2717
    %v2719 = vmul.f32 %v2713, 1.442695
    %v2720 = vpow.pop %v2719
    %v2721 = vmul.f32 %v2714, 1.442695
    %v2722 = vpow.pop %v2721
    %v2723 = vadd.f32 %v2716, 1.0
    %v2724 = vadd.f32 %v2718, 1.0
    %v2725 = vadd.f32 %v2720, 1.0
    %v2726 = vadd.f32 %v2722, 1.0
    %v2727 = vrcp.pop %v2723
    %v2728 = vmul.f32 1.0, %v2727
    %v2729 = vrcp.pop %v2724
    %v2730 = vmul.f32 1.0, %v2729
    %v2731 = vrcp.pop %v2725
    %v2732 = vmul.f32 1.0, %v2731
    %v2733 = vrcp.pop %v2726
    %v2734 = vmul.f32 1.0, %v2733
    %2735 = vmatprep.subr.mxu0 0.0
    %2736 = vmatpush1.msra.mxu0 %v1140
    %2737 = vmatprep.subr.mxu0 0.0
    %2738 = vmatpush1.msra.mxu0 %v1141
    %2739 = vmatprep.subr.mxu0 0.0
    %2740 = vmatpush1.msra.mxu0 %v1142
    %2741 = vmatprep.subr.mxu0 0.0
    %2742 = vmatpush1.msra.mxu0 %v1143
    %2743 = vmatprep.subr.mxu0 0.0
    %2744 = vmatpush1.msra.mxu0 0.0
    %2745 = vmatprep.subr.mxu0 0.0
    %2746 = vmatpush1.msra.mxu0 0.0
    %2747 = vmatprep.subr.mxu0 0.0
    %2748 = vmatpush1.msra.mxu0 0.0
    %2749 = vmatprep.subr.mxu0 0.0
    %2750 = vmatpush1.msra.mxu0 0.0
    %2751 = vmatprep.subr.mxu0 0.0
    %2752 = vmatpush1.msra.mxu0 0.0
    %2753 = vmatprep.subr.mxu0 0.0
    %2754 = vmatpush1.msra.mxu0 0.0
    %2755 = vmatprep.subr.mxu0 0.0
    %2756 = vmatpush1.msra.mxu0 0.0
    %2757 = vmatprep.subr.mxu0 0.0
    %2758 = vmatpush1.msra.mxu0 0.0
    %2759 = vmatprep.subr.mxu0 0.0
    %2760 = vmatpush1.msra.mxu0 0.0
    %2761 = vmatprep.subr.mxu0 0.0
    %2762 = vmatpush1.msra.mxu0 0.0
    %2763 = vmatprep.subr.mxu0 0.0
    %2764 = vmatpush1.msra.mxu0 0.0
    %2765 = vmatprep.subr.mxu0 0.0
    %2766 = vmatpush1.msra.mxu0 0.0
    %2767 = vmatprep.subr.mxu0 0.0
    %2768 = vmatpush1.msra.mxu0 0.0
    %2769 = vmatprep.subr.mxu0 0.0
    %2770 = vmatpush1.msra.mxu0 0.0
    %2771 = vmatprep.subr.mxu0 0.0
    %2772 = vmatpush1.msra.mxu0 0.0
    %2773 = vmatprep.subr.mxu0 0.0
    %2774 = vmatpush1.msra.mxu0 0.0
    %2775 = vmatprep.subr.mxu0 0.0
    %2776 = vmatpush1.msra.mxu0 0.0
    %2777 = vmatprep.subr.mxu0 0.0
    %2778 = vmatpush1.msra.mxu0 0.0
    %2779 = vmatprep.subr.mxu0 0.0
    %2780 = vmatpush1.msra.mxu0 0.0
    %2781 = vmatprep.subr.mxu0 0.0
    %2782 = vmatpush1.msra.mxu0 0.0
    %2783 = vmatprep.subr.mxu0 0.0
    %2784 = vmatpush1.msra.mxu0 0.0
    %2785 = vmatprep.subr.mxu0 0.0
    %2786 = vmatpush1.msra.mxu0 0.0
    %2787 = vmatprep.subr.mxu0 0.0
    %2788 = vmatpush1.msra.mxu0 0.0
    %2789 = vmatprep.subr.mxu0 0.0
    %2790 = vmatpush1.msra.mxu0 0.0
    %2791 = vmatprep.subr.mxu0 0.0
    %2792 = vmatpush1.msra.mxu0 0.0
    %2793 = vmatprep.subr.mxu0 0.0
    %2794 = vmatpush1.msra.mxu0 0.0
    %2795 = vmatprep.subr.mxu0 0.0
    %2796 = vmatpush1.msra.mxu0 0.0
    %2797 = vmatprep.subr.mxu0 0.0
    %2798 = vmatpush1.msra.mxu0 0.0
    %2799 = vmatprep.mubr.f32.mxu0 0.0
    %2800 = vmatmul.mubr.f32.gmra.mrb[0].mxu0 %v2611
    %v2801 = vpop.f32.mrb[0].mxu0
    %v2802 = vadd.f32 0.0, %v2801
    %v2803 = vpop.f32.mrb[0].mxu0
    %2804 = vmatprep.mubr.f32.mxu0 0.0
    %2805 = vmatmul.mubr.f32.gmra.mrb[0].mxu0 %v2614
    %v2806 = vpop.f32.mrb[0].mxu0
    %v2807 = vadd.f32 0.0, %v2806
    %v2808 = vpop.f32.mrb[0].mxu0
    %2809 = vmatprep.mubr.f32.mxu0 0.0
    %2810 = vmatmul.mubr.f32.gmra.mrb[0].mxu0 %v2617
    %v2811 = vpop.f32.mrb[0].mxu0
    %v2812 = vadd.f32 0.0, %v2811
    %v2813 = vpop.f32.mrb[0].mxu0
    %2814 = vmatprep.mubr.f32.mxu0 0.0
    %2815 = vmatmul.mubr.f32.gmra.mrb[0].mxu0 %v2620
    %v2816 = vpop.f32.mrb[0].mxu0
    %v2817 = vadd.f32 0.0, %v2816
    %v2818 = vpop.f32.mrb[0].mxu0
    %2819 = vdwg.mxu0
    %v2820 = vadd.f32 %v925, %v2802
    %v2821 = vadd.f32 %v930, %v2807
    %v2822 = vadd.f32 %v935, %v2812
    %v2823 = vadd.f32 %v940, %v2817
    %v2824 = vxor.u32 %v2820, 2147483648
    %v2825 = vxor.u32 %v2821, 2147483648
    %v2826 = vxor.u32 %v2822, 2147483648
    %v2827 = vxor.u32 %v2823, 2147483648
    %v2828 = vmul.f32 %v2824, 1.442695
    %v2829 = vpow.pop %v2828
    %v2830 = vmul.f32 %v2825, 1.442695
    %v2831 = vpow.pop %v2830
    %v2832 = vmul.f32 %v2826, 1.442695
    %v2833 = vpow.pop %v2832
    %v2834 = vmul.f32 %v2827, 1.442695
    %v2835 = vpow.pop %v2834
    %v2836 = vadd.f32 %v2829, 1.0
    %v2837 = vadd.f32 %v2831, 1.0
    %v2838 = vadd.f32 %v2833, 1.0
    %v2839 = vadd.f32 %v2835, 1.0
    %v2840 = vrcp.pop %v2836
    %v2841 = vmul.f32 1.0, %v2840
    %v2842 = vrcp.pop %v2837
    %v2843 = vmul.f32 1.0, %v2842
    %v2844 = vrcp.pop %v2838
    %v2845 = vmul.f32 1.0, %v2844
    %v2846 = vrcp.pop %v2839
    %v2847 = vmul.f32 1.0, %v2846
    %2848 = vmatprep.subr.mxu0 0.0
    %2849 = vmatpush1.msra.mxu0 %v1145
    %2850 = vmatprep.subr.mxu0 0.0
    %2851 = vmatpush1.msra.mxu0 %v1146
    %2852 = vmatprep.subr.mxu0 0.0
    %2853 = vmatpush1.msra.mxu0 %v1147
    %2854 = vmatprep.subr.mxu0 0.0
    %2855 = vmatpush1.msra.mxu0 %v1148
    %2856 = vmatprep.subr.mxu0 0.0
    %2857 = vmatpush1.msra.mxu0 0.0
    %2858 = vmatprep.subr.mxu0 0.0
    %2859 = vmatpush1.msra.mxu0 0.0
    %2860 = vmatprep.subr.mxu0 0.0
    %2861 = vmatpush1.msra.mxu0 0.0
    %2862 = vmatprep.subr.mxu0 0.0
    %2863 = vmatpush1.msra.mxu0 0.0
    %2864 = vmatprep.subr.mxu0 0.0
    %2865 = vmatpush1.msra.mxu0 0.0
    %2866 = vmatprep.subr.mxu0 0.0
    %2867 = vmatpush1.msra.mxu0 0.0
    %2868 = vmatprep.subr.mxu0 0.0
    %2869 = vmatpush1.msra.mxu0 0.0
    %2870 = vmatprep.subr.mxu0 0.0
    %2871 = vmatpush1.msra.mxu0 0.0
    %2872 = vmatprep.subr.mxu0 0.0
    %2873 = vmatpush1.msra.mxu0 0.0
    %2874 = vmatprep.subr.mxu0 0.0
    %2875 = vmatpush1.msra.mxu0 0.0
    %2876 = vmatprep.subr.mxu0 0.0
    %2877 = vmatpush1.msra.mxu0 0.0
    %2878 = vmatprep.subr.mxu0 0.0
    %2879 = vmatpush1.msra.mxu0 0.0
    %2880 = vmatprep.subr.mxu0 0.0
    %2881 = vmatpush1.msra.mxu0 0.0
    %2882 = vmatprep.subr.mxu0 0.0
    %2883 = vmatpush1.msra.mxu0 0.0
    %2884 = vmatprep.subr.mxu0 0.0
    %2885 = vmatpush1.msra.mxu0 0.0
    %2886 = vmatprep.subr.mxu0 0.0
    %2887 = vmatpush1.msra.mxu0 0.0
    %2888 = vmatprep.subr.mxu0 0.0
    %2889 = vmatpush1.msra.mxu0 0.0
    %2890 = vmatprep.subr.mxu0 0.0
    %2891 = vmatpush1.msra.mxu0 0.0
    %2892 = vmatprep.subr.mxu0 0.0
    %2893 = vmatpush1.msra.mxu0 0.0
    %2894 = vmatprep.subr.mxu0 0.0
    %2895 = vmatpush1.msra.mxu0 0.0
    %2896 = vmatprep.subr.mxu0 0.0
    %2897 = vmatpush1.msra.mxu0 0.0
    %2898 = vmatprep.subr.mxu0 0.0
    %2899 = vmatpush1.msra.mxu0 0.0
    %2900 = vmatprep.subr.mxu0 0.0
    %2901 = vmatpush1.msra.mxu0 0.0
    %2902 = vmatprep.subr.mxu0 0.0
    %2903 = vmatpush1.msra.mxu0 0.0
    %2904 = vmatprep.subr.mxu0 0.0
    %2905 = vmatpush1.msra.mxu0 0.0
    %2906 = vmatprep.subr.mxu0 0.0
    %2907 = vmatpush1.msra.mxu0 0.0
    %2908 = vmatprep.subr.mxu0 0.0
    %2909 = vmatpush1.msra.mxu0 0.0
    %2910 = vmatprep.subr.mxu0 0.0
    %2911 = vmatpush1.msra.mxu0 0.0
    %2912 = vmatprep.mubr.f32.mxu0 0.0
    %2913 = vmatmul.mubr.f32.gmra.mrb[0].mxu0 %v2611
    %v2914 = vpop.f32.mrb[0].mxu0
    %v2915 = vadd.f32 0.0, %v2914
    %v2916 = vpop.f32.mrb[0].mxu0
    %2917 = vmatprep.mubr.f32.mxu0 0.0
    %2918 = vmatmul.mubr.f32.gmra.mrb[0].mxu0 %v2614
    %v2919 = vpop.f32.mrb[0].mxu0
    %v2920 = vadd.f32 0.0, %v2919
    %v2921 = vpop.f32.mrb[0].mxu0
    %2922 = vmatprep.mubr.f32.mxu0 0.0
    %2923 = vmatmul.mubr.f32.gmra.mrb[0].mxu0 %v2617
    %v2924 = vpop.f32.mrb[0].mxu0
    %v2925 = vadd.f32 0.0, %v2924
    %v2926 = vpop.f32.mrb[0].mxu0
    %2927 = vmatprep.mubr.f32.mxu0 0.0
    %2928 = vmatmul.mubr.f32.gmra.mrb[0].mxu0 %v2620
    %v2929 = vpop.f32.mrb[0].mxu0
    %v2930 = vadd.f32 0.0, %v2929
    %v2931 = vpop.f32.mrb[0].mxu0
    %2932 = vdwg.mxu0
    %v2933 = vadd.f32 %v1021, %v2915
    %v2934 = vadd.f32 %v1026, %v2920
    %v2935 = vadd.f32 %v1031, %v2925
    %v2936 = vadd.f32 %v1036, %v2930
    %v2937 = vtanh.pop %v2933
    %v2938 = vtanh.pop %v2934
    %v2939 = vtanh.pop %v2935
    %v2940 = vtanh.pop %v2936
    %2941 = vmatprep.subr.mxu0 0.0
    %2942 = vmatpush1.msra.mxu0 %v1150
    %2943 = vmatprep.subr.mxu0 0.0
    %2944 = vmatpush1.msra.mxu0 %v1151
    %2945 = vmatprep.subr.mxu0 0.0
    %2946 = vmatpush1.msra.mxu0 %v1152
    %2947 = vmatprep.subr.mxu0 0.0
    %2948 = vmatpush1.msra.mxu0 %v1153
    %2949 = vmatprep.subr.mxu0 0.0
    %2950 = vmatpush1.msra.mxu0 0.0
    %2951 = vmatprep.subr.mxu0 0.0
    %2952 = vmatpush1.msra.mxu0 0.0
    %2953 = vmatprep.subr.mxu0 0.0
    %2954 = vmatpush1.msra.mxu0 0.0
    %2955 = vmatprep.subr.mxu0 0.0
    %2956 = vmatpush1.msra.mxu0 0.0
    %2957 = vmatprep.subr.mxu0 0.0
    %2958 = vmatpush1.msra.mxu0 0.0
    %2959 = vmatprep.subr.mxu0 0.0
    %2960 = vmatpush1.msra.mxu0 0.0
    %2961 = vmatprep.subr.mxu0 0.0
    %2962 = vmatpush1.msra.mxu0 0.0
    %2963 = vmatprep.subr.mxu0 0.0
    %2964 = vmatpush1.msra.mxu0 0.0
    %2965 = vmatprep.subr.mxu0 0.0
    %2966 = vmatpush1.msra.mxu0 0.0
    %2967 = vmatprep.subr.mxu0 0.0
    %2968 = vmatpush1.msra.mxu0 0.0
    %2969 = vmatprep.subr.mxu0 0.0
    %2970 = vmatpush1.msra.mxu0 0.0
    %2971 = vmatprep.subr.mxu0 0.0
    %2972 = vmatpush1.msra.mxu0 0.0
    %2973 = vmatprep.subr.mxu0 0.0
    %2974 = vmatpush1.msra.mxu0 0.0
    %2975 = vmatprep.subr.mxu0 0.0
    %2976 = vmatpush1.msra.mxu0 0.0
    %2977 = vmatprep.subr.mxu0 0.0
    %2978 = vmatpush1.msra.mxu0 0.0
    %2979 = vmatprep.subr.mxu0 0.0
    %2980 = vmatpush1.msra.mxu0 0.0
    %2981 = vmatprep.subr.mxu0 0.0
    %2982 = vmatpush1.msra.mxu0 0.0
    %2983 = vmatprep.subr.mxu0 0.0
    %2984 = vmatpush1.msra.mxu0 0.0
    %2985 = vmatprep.subr.mxu0 0.0
    %2986 = vmatpush1.msra.mxu0 0.0
    %2987 = vmatprep.subr.mxu0 0.0
    %2988 = vmatpush1.msra.mxu0 0.0
    %2989 = vmatprep.subr.mxu0 0.0
    %2990 = vmatpush1.msra.mxu0 0.0
    %2991 = vmatprep.subr.mxu0 0.0
    %2992 = vmatpush1.msra.mxu0 0.0
    %2993 = vmatprep.subr.mxu0 0.0
    %2994 = vmatpush1.msra.mxu0 0.0
    %2995 = vmatprep.subr.mxu0 0.0
    %2996 = vmatpush1.msra.mxu0 0.0
    %2997 = vmatprep.subr.mxu0 0.0
    %2998 = vmatpush1.msra.mxu0 0.0
    %2999 = vmatprep.subr.mxu0 0.0
    %3000 = vmatpush1.msra.mxu0 0.0
    %3001 = vmatprep.subr.mxu0 0.0
    %3002 = vmatpush1.msra.mxu0 0.0
    %3003 = vmatprep.subr.mxu0 0.0
    %3004 = vmatpush1.msra.mxu0 0.0
    %3005 = vmatprep.mubr.f32.mxu0 0.0
    %3006 = vmatmul.mubr.f32.gmra.mrb[0].mxu0 %v2611
    %v3007 = vpop.f32.mrb[0].mxu0
    %v3008 = vadd.f32 0.0, %v3007
    %v3009 = vpop.f32.mrb[0].mxu0
    %3010 = vmatprep.mubr.f32.mxu0 0.0
    %3011 = vmatmul.mubr.f32.gmra.mrb[0].mxu0 %v2614
    %v3012 = vpop.f32.mrb[0].mxu0
    %v3013 = vadd.f32 0.0, %v3012
    %v3014 = vpop.f32.mrb[0].mxu0
    %3015 = vmatprep.mubr.f32.mxu0 0.0
    %3016 = vmatmul.mubr.f32.gmra.mrb[0].mxu0 %v2617
    %v3017 = vpop.f32.mrb[0].mxu0
    %v3018 = vadd.f32 0.0, %v3017
    %v3019 = vpop.f32.mrb[0].mxu0
    %3020 = vmatprep.mubr.f32.mxu0 0.0
    %3021 = vmatmul.mubr.f32.gmra.mrb[0].mxu0 %v2620
    %v3022 = vpop.f32.mrb[0].mxu0
    %v3023 = vadd.f32 0.0, %v3022
    %v3024 = vpop.f32.mrb[0].mxu0
    %3025 = vdwg.mxu0
    %v3026 = vadd.f32 %v1117, %v3008
    %v3027 = vadd.f32 %v1122, %v3013
    %v3028 = vadd.f32 %v1127, %v3018
    %v3029 = vadd.f32 %v1132, %v3023
    %v3030 = vxor.u32 %v3026, 2147483648
    %v3031 = vxor.u32 %v3027, 2147483648
    %v3032 = vxor.u32 %v3028, 2147483648
    %v3033 = vxor.u32 %v3029, 2147483648
    %v3034 = vmul.f32 %v3030, 1.442695
    %v3035 = vpow.pop %v3034
    %v3036 = vmul.f32 %v3031, 1.442695
    %v3037 = vpow.pop %v3036
    %v3038 = vmul.f32 %v3032, 1.442695
    %v3039 = vpow.pop %v3038
    %v3040 = vmul.f32 %v3033, 1.442695
    %v3041 = vpow.pop %v3040
    %v3042 = vadd.f32 %v3035, 1.0
    %v3043 = vadd.f32 %v3037, 1.0
    %v3044 = vadd.f32 %v3039, 1.0
    %v3045 = vadd.f32 %v3041, 1.0
    %v3046 = vrcp.pop %v3042
    %v3047 = vmul.f32 1.0, %v3046
    %v3048 = vrcp.pop %v3043
    %v3049 = vmul.f32 1.0, %v3048
    %v3050 = vrcp.pop %v3044
    %v3051 = vmul.f32 1.0, %v3050
    %v3052 = vrcp.pop %v3045
    %v3053 = vmul.f32 1.0, %v3052
    %v3054 = vmul.f32 %v2841, %v2598
    %v3055 = vmul.f32 %v2843, %v2599
    %v3056 = vmul.f32 %v2845, %v2600
    %v3057 = vmul.f32 %v2847, %v2601
    %v3058 = vmul.f32 %v2728, %v2937
    %v3059 = vmul.f32 %v2730, %v2938
    %v3060 = vmul.f32 %v2732, %v2939
    %v3061 = vmul.f32 %v2734, %v2940
    %v3062 = vadd.f32 %v3054, %v3058
    %v3063 = vadd.f32 %v3055, %v3059
    %v3064 = vadd.f32 %v3056, %v3060
    %v3065 = vadd.f32 %v3057, %v3061
    %v3066 = vtanh.pop %v3062
    %v3067 = vtanh.pop %v3063
    %v3068 = vtanh.pop %v3064
    %v3069 = vtanh.pop %v3065
    %v3070 = vmul.f32 %v3047, %v3066
    %v3071 = vmul.f32 %v3049, %v3067
    %v3072 = vmul.f32 %v3051, %v3068
    %v3073 = vmul.f32 %v3053, %v3069
    %v3075 = vsel %vm490, %v3070, 0
    %v3078 = vsel %vm490, %v3071, 0
    %v3081 = vsel %vm490, %v3072, 0
    %v3084 = vsel %vm490, %v3073, 0
    %3086 = vmatprep.subr.mxu0 0.0
    %3087 = vmatpush1.msra.mxu0 %v1135
    %3088 = vmatprep.subr.mxu0 0.0
    %3089 = vmatpush1.msra.mxu0 %v1136
    %3090 = vmatprep.subr.mxu0 0.0
    %3091 = vmatpush1.msra.mxu0 %v1137
    %3092 = vmatprep.subr.mxu0 0.0
    %3093 = vmatpush1.msra.mxu0 %v1138
    %3094 = vmatprep.subr.mxu0 0.0
    %3095 = vmatpush1.msra.mxu0 0.0
    %3096 = vmatprep.subr.mxu0 0.0
    %3097 = vmatpush1.msra.mxu0 0.0
    %3098 = vmatprep.subr.mxu0 0.0
    %3099 = vmatpush1.msra.mxu0 0.0
    %3100 = vmatprep.subr.mxu0 0.0
    %3101 = vmatpush1.msra.mxu0 0.0
    %3102 = vmatprep.subr.mxu0 0.0
    %3103 = vmatpush1.msra.mxu0 0.0
    %3104 = vmatprep.subr.mxu0 0.0
    %3105 = vmatpush1.msra.mxu0 0.0
    %3106 = vmatprep.subr.mxu0 0.0
    %3107 = vmatpush1.msra.mxu0 0.0
    %3108 = vmatprep.subr.mxu0 0.0
    %3109 = vmatpush1.msra.mxu0 0.0
    %3110 = vmatprep.subr.mxu0 0.0
    %3111 = vmatpush1.msra.mxu0 0.0
    %3112 = vmatprep.subr.mxu0 0.0
    %3113 = vmatpush1.msra.mxu0 0.0
    %3114 = vmatprep.subr.mxu0 0.0
    %3115 = vmatpush1.msra.mxu0 0.0
    %3116 = vmatprep.subr.mxu0 0.0
    %3117 = vmatpush1.msra.mxu0 0.0
    %3118 = vmatprep.subr.mxu0 0.0
    %3119 = vmatpush1.msra.mxu0 0.0
    %3120 = vmatprep.subr.mxu0 0.0
    %3121 = vmatpush1.msra.mxu0 0.0
    %3122 = vmatprep.subr.mxu0 0.0
    %3123 = vmatpush1.msra.mxu0 0.0
    %3124 = vmatprep.subr.mxu0 0.0
    %3125 = vmatpush1.msra.mxu0 0.0
    %3126 = vmatprep.subr.mxu0 0.0
    %3127 = vmatpush1.msra.mxu0 0.0
    %3128 = vmatprep.subr.mxu0 0.0
    %3129 = vmatpush1.msra.mxu0 0.0
    %3130 = vmatprep.subr.mxu0 0.0
    %3131 = vmatpush1.msra.mxu0 0.0
    %3132 = vmatprep.subr.mxu0 0.0
    %3133 = vmatpush1.msra.mxu0 0.0
    %3134 = vmatprep.subr.mxu0 0.0
    %3135 = vmatpush1.msra.mxu0 0.0
    %3136 = vmatprep.subr.mxu0 0.0
    %3137 = vmatpush1.msra.mxu0 0.0
    %3138 = vmatprep.subr.mxu0 0.0
    %3139 = vmatpush1.msra.mxu0 0.0
    %3140 = vmatprep.subr.mxu0 0.0
    %3141 = vmatpush1.msra.mxu0 0.0
    %3142 = vmatprep.subr.mxu0 0.0
    %3143 = vmatpush1.msra.mxu0 0.0
    %3144 = vmatprep.subr.mxu0 0.0
    %3145 = vmatpush1.msra.mxu0 0.0
    %3146 = vmatprep.subr.mxu0 0.0
    %3147 = vmatpush1.msra.mxu0 0.0
    %3148 = vmatprep.subr.mxu0 0.0
    %3149 = vmatpush1.msra.mxu0 0.0
    %3150 = vmatprep.mubr.f32.mxu0 0.0
    %3151 = vmatmul.mubr.f32.gmra.mrb[0].mxu0 %v3075
    %v3152 = vpop.f32.mrb[0].mxu0
    %v3153 = vadd.f32 0.0, %v3152
    %v3154 = vpop.f32.mrb[0].mxu0
    %3155 = vmatprep.mubr.f32.mxu0 0.0
    %3156 = vmatmul.mubr.f32.gmra.mrb[0].mxu0 %v3078
    %v3157 = vpop.f32.mrb[0].mxu0
    %v3158 = vadd.f32 0.0, %v3157
    %v3159 = vpop.f32.mrb[0].mxu0
    %3160 = vmatprep.mubr.f32.mxu0 0.0
    %3161 = vmatmul.mubr.f32.gmra.mrb[0].mxu0 %v3081
    %v3162 = vpop.f32.mrb[0].mxu0
    %v3163 = vadd.f32 0.0, %v3162
    %v3164 = vpop.f32.mrb[0].mxu0
    %3165 = vmatprep.mubr.f32.mxu0 0.0
    %3166 = vmatmul.mubr.f32.gmra.mrb[0].mxu0 %v3084
    %v3167 = vpop.f32.mrb[0].mxu0
    %v3168 = vadd.f32 0.0, %v3167
    %v3169 = vpop.f32.mrb[0].mxu0
    %3170 = vdwg.mxu0
    %v3171 = vadd.f32 %v829, %v3153
    %v3172 = vadd.f32 %v834, %v3158
    %v3173 = vadd.f32 %v839, %v3163
    %v3174 = vadd.f32 %v844, %v3168
    %v3175 = vxor.u32 %v3171, 2147483648
    %v3176 = vxor.u32 %v3172, 2147483648
    %v3177 = vxor.u32 %v3173, 2147483648
    %v3178 = vxor.u32 %v3174, 2147483648
    %v3179 = vmul.f32 %v3175, 1.442695
    %v3180 = vpow.pop %v3179
    %v3181 = vmul.f32 %v3176, 1.442695
    %v3182 = vpow.pop %v3181
    %v3183 = vmul.f32 %v3177, 1.442695
    %v3184 = vpow.pop %v3183
    %v3185 = vmul.f32 %v3178, 1.442695
    %v3186 = vpow.pop %v3185
    %v3187 = vadd.f32 %v3180, 1.0
    %v3188 = vadd.f32 %v3182, 1.0
    %v3189 = vadd.f32 %v3184, 1.0
    %v3190 = vadd.f32 %v3186, 1.0
    %v3191 = vrcp.pop %v3187
    %v3192 = vmul.f32 1.0, %v3191
    %v3193 = vrcp.pop %v3188
    %v3194 = vmul.f32 1.0, %v3193
    %v3195 = vrcp.pop %v3189
    %v3196 = vmul.f32 1.0, %v3195
    %v3197 = vrcp.pop %v3190
    %v3198 = vmul.f32 1.0, %v3197
    %3199 = vmatprep.subr.mxu0 0.0
    %3200 = vmatpush1.msra.mxu0 %v1140
    %3201 = vmatprep.subr.mxu0 0.0
    %3202 = vmatpush1.msra.mxu0 %v1141
    %3203 = vmatprep.subr.mxu0 0.0
    %3204 = vmatpush1.msra.mxu0 %v1142
    %3205 = vmatprep.subr.mxu0 0.0
    %3206 = vmatpush1.msra.mxu0 %v1143
    %3207 = vmatprep.subr.mxu0 0.0
    %3208 = vmatpush1.msra.mxu0 0.0
    %3209 = vmatprep.subr.mxu0 0.0
    %3210 = vmatpush1.msra.mxu0 0.0
    %3211 = vmatprep.subr.mxu0 0.0
    %3212 = vmatpush1.msra.mxu0 0.0
    %3213 = vmatprep.subr.mxu0 0.0
    %3214 = vmatpush1.msra.mxu0 0.0
    %3215 = vmatprep.subr.mxu0 0.0
    %3216 = vmatpush1.msra.mxu0 0.0
    %3217 = vmatprep.subr.mxu0 0.0
    %3218 = vmatpush1.msra.mxu0 0.0
    %3219 = vmatprep.subr.mxu0 0.0
    %3220 = vmatpush1.msra.mxu0 0.0
    %3221 = vmatprep.subr.mxu0 0.0
    %3222 = vmatpush1.msra.mxu0 0.0
    %3223 = vmatprep.subr.mxu0 0.0
    %3224 = vmatpush1.msra.mxu0 0.0
    %3225 = vmatprep.subr.mxu0 0.0
    %3226 = vmatpush1.msra.mxu0 0.0
    %3227 = vmatprep.subr.mxu0 0.0
    %3228 = vmatpush1.msra.mxu0 0.0
    %3229 = vmatprep.subr.mxu0 0.0
    %3230 = vmatpush1.msra.mxu0 0.0
    %3231 = vmatprep.subr.mxu0 0.0
    %3232 = vmatpush1.msra.mxu0 0.0
    %3233 = vmatprep.subr.mxu0 0.0
    %3234 = vmatpush1.msra.mxu0 0.0
    %3235 = vmatprep.subr.mxu0 0.0
    %3236 = vmatpush1.msra.mxu0 0.0
    %3237 = vmatprep.subr.mxu0 0.0
    %3238 = vmatpush1.msra.mxu0 0.0
    %3239 = vmatprep.subr.mxu0 0.0
    %3240 = vmatpush1.msra.mxu0 0.0
    %3241 = vmatprep.subr.mxu0 0.0
    %3242 = vmatpush1.msra.mxu0 0.0
    %3243 = vmatprep.subr.mxu0 0.0
    %3244 = vmatpush1.msra.mxu0 0.0
    %3245 = vmatprep.subr.mxu0 0.0
    %3246 = vmatpush1.msra.mxu0 0.0
    %3247 = vmatprep.subr.mxu0 0.0
    %3248 = vmatpush1.msra.mxu0 0.0
    %3249 = vmatprep.subr.mxu0 0.0
    %3250 = vmatpush1.msra.mxu0 0.0
    %3251 = vmatprep.subr.mxu0 0.0
    %3252 = vmatpush1.msra.mxu0 0.0
    %3253 = vmatprep.subr.mxu0 0.0
    %3254 = vmatpush1.msra.mxu0 0.0
    %3255 = vmatprep.subr.mxu0 0.0
    %3256 = vmatpush1.msra.mxu0 0.0
    %3257 = vmatprep.subr.mxu0 0.0
    %3258 = vmatpush1.msra.mxu0 0.0
    %3259 = vmatprep.subr.mxu0 0.0
    %3260 = vmatpush1.msra.mxu0 0.0
    %3261 = vmatprep.subr.mxu0 0.0
    %3262 = vmatpush1.msra.mxu0 0.0
    %3263 = vmatprep.mubr.f32.mxu0 0.0
    %3264 = vmatmul.mubr.f32.gmra.mrb[0].mxu0 %v3075
    %v3265 = vpop.f32.mrb[0].mxu0
    %v3266 = vadd.f32 0.0, %v3265
    %v3267 = vpop.f32.mrb[0].mxu0
    %3268 = vmatprep.mubr.f32.mxu0 0.0
    %3269 = vmatmul.mubr.f32.gmra.mrb[0].mxu0 %v3078
    %v3270 = vpop.f32.mrb[0].mxu0
    %v3271 = vadd.f32 0.0, %v3270
    %v3272 = vpop.f32.mrb[0].mxu0
    %3273 = vmatprep.mubr.f32.mxu0 0.0
    %3274 = vmatmul.mubr.f32.gmra.mrb[0].mxu0 %v3081
    %v3275 = vpop.f32.mrb[0].mxu0
    %v3276 = vadd.f32 0.0, %v3275
    %v3277 = vpop.f32.mrb[0].mxu0
    %3278 = vmatprep.mubr.f32.mxu0 0.0
    %3279 = vmatmul.mubr.f32.gmra.mrb[0].mxu0 %v3084
    %v3280 = vpop.f32.mrb[0].mxu0
    %v3281 = vadd.f32 0.0, %v3280
    %v3282 = vpop.f32.mrb[0].mxu0
    %3283 = vdwg.mxu0
    %v3284 = vadd.f32 %v925, %v3266
    %v3285 = vadd.f32 %v930, %v3271
    %v3286 = vadd.f32 %v935, %v3276
    %v3287 = vadd.f32 %v940, %v3281
    %v3288 = vxor.u32 %v3284, 2147483648
    %v3289 = vxor.u32 %v3285, 2147483648
    %v3290 = vxor.u32 %v3286, 2147483648
    %v3291 = vxor.u32 %v3287, 2147483648
    %v3292 = vmul.f32 %v3288, 1.442695
    %v3293 = vpow.pop %v3292
    %v3294 = vmul.f32 %v3289, 1.442695
    %v3295 = vpow.pop %v3294
    %v3296 = vmul.f32 %v3290, 1.442695
    %v3297 = vpow.pop %v3296
    %v3298 = vmul.f32 %v3291, 1.442695
    %v3299 = vpow.pop %v3298
    %v3300 = vadd.f32 %v3293, 1.0
    %v3301 = vadd.f32 %v3295, 1.0
    %v3302 = vadd.f32 %v3297, 1.0
    %v3303 = vadd.f32 %v3299, 1.0
    %v3304 = vrcp.pop %v3300
    %v3305 = vmul.f32 1.0, %v3304
    %v3306 = vrcp.pop %v3301
    %v3307 = vmul.f32 1.0, %v3306
    %v3308 = vrcp.pop %v3302
    %v3309 = vmul.f32 1.0, %v3308
    %v3310 = vrcp.pop %v3303
    %v3311 = vmul.f32 1.0, %v3310
    %3312 = vmatprep.subr.mxu0 0.0
    %3313 = vmatpush1.msra.mxu0 %v1145
    %3314 = vmatprep.subr.mxu0 0.0
    %3315 = vmatpush1.msra.mxu0 %v1146
    %3316 = vmatprep.subr.mxu0 0.0
    %3317 = vmatpush1.msra.mxu0 %v1147
    %3318 = vmatprep.subr.mxu0 0.0
    %3319 = vmatpush1.msra.mxu0 %v1148
    %3320 = vmatprep.subr.mxu0 0.0
    %3321 = vmatpush1.msra.mxu0 0.0
    %3322 = vmatprep.subr.mxu0 0.0
    %3323 = vmatpush1.msra.mxu0 0.0
    %3324 = vmatprep.subr.mxu0 0.0
    %3325 = vmatpush1.msra.mxu0 0.0
    %3326 = vmatprep.subr.mxu0 0.0
    %3327 = vmatpush1.msra.mxu0 0.0
    %3328 = vmatprep.subr.mxu0 0.0
    %3329 = vmatpush1.msra.mxu0 0.0
    %3330 = vmatprep.subr.mxu0 0.0
    %3331 = vmatpush1.msra.mxu0 0.0
    %3332 = vmatprep.subr.mxu0 0.0
    %3333 = vmatpush1.msra.mxu0 0.0
    %3334 = vmatprep.subr.mxu0 0.0
    %3335 = vmatpush1.msra.mxu0 0.0
    %3336 = vmatprep.subr.mxu0 0.0
    %3337 = vmatpush1.msra.mxu0 0.0
    %3338 = vmatprep.subr.mxu0 0.0
    %3339 = vmatpush1.msra.mxu0 0.0
    %3340 = vmatprep.subr.mxu0 0.0
    %3341 = vmatpush1.msra.mxu0 0.0
    %3342 = vmatprep.subr.mxu0 0.0
    %3343 = vmatpush1.msra.mxu0 0.0
    %3344 = vmatprep.subr.mxu0 0.0
    %3345 = vmatpush1.msra.mxu0 0.0
    %3346 = vmatprep.subr.mxu0 0.0
    %3347 = vmatpush1.msra.mxu0 0.0
    %3348 = vmatprep.subr.mxu0 0.0
    %3349 = vmatpush1.msra.mxu0 0.0
    %3350 = vmatprep.subr.mxu0 0.0
    %3351 = vmatpush1.msra.mxu0 0.0
    %3352 = vmatprep.subr.mxu0 0.0
    %3353 = vmatpush1.msra.mxu0 0.0
    %3354 = vmatprep.subr.mxu0 0.0
    %3355 = vmatpush1.msra.mxu0 0.0
    %3356 = vmatprep.subr.mxu0 0.0
    %3357 = vmatpush1.msra.mxu0 0.0
    %3358 = vmatprep.subr.mxu0 0.0
    %3359 = vmatpush1.msra.mxu0 0.0
    %3360 = vmatprep.subr.mxu0 0.0
    %3361 = vmatpush1.msra.mxu0 0.0
    %3362 = vmatprep.subr.mxu0 0.0
    %3363 = vmatpush1.msra.mxu0 0.0
    %3364 = vmatprep.subr.mxu0 0.0
    %3365 = vmatpush1.msra.mxu0 0.0
    %3366 = vmatprep.subr.mxu0 0.0
    %3367 = vmatpush1.msra.mxu0 0.0
    %3368 = vmatprep.subr.mxu0 0.0
    %3369 = vmatpush1.msra.mxu0 0.0
    %3370 = vmatprep.subr.mxu0 0.0
    %3371 = vmatpush1.msra.mxu0 0.0
    %3372 = vmatprep.subr.mxu0 0.0
    %3373 = vmatpush1.msra.mxu0 0.0
    %3374 = vmatprep.subr.mxu0 0.0
    %3375 = vmatpush1.msra.mxu0 0.0
    %3376 = vmatprep.mubr.f32.mxu0 0.0
    %3377 = vmatmul.mubr.f32.gmra.mrb[0].mxu0 %v3075
    %v3378 = vpop.f32.mrb[0].mxu0
    %v3379 = vadd.f32 0.0, %v3378
    %v3380 = vpop.f32.mrb[0].mxu0
    %3381 = vmatprep.mubr.f32.mxu0 0.0
    %3382 = vmatmul.mubr.f32.gmra.mrb[0].mxu0 %v3078
    %v3383 = vpop.f32.mrb[0].mxu0
    %v3384 = vadd.f32 0.0, %v3383
    %v3385 = vpop.f32.mrb[0].mxu0
    %3386 = vmatprep.mubr.f32.mxu0 0.0
    %3387 = vmatmul.mubr.f32.gmra.mrb[0].mxu0 %v3081
    %v3388 = vpop.f32.mrb[0].mxu0
    %v3389 = vadd.f32 0.0, %v3388
    %v3390 = vpop.f32.mrb[0].mxu0
    %3391 = vmatprep.mubr.f32.mxu0 0.0
    %3392 = vmatmul.mubr.f32.gmra.mrb[0].mxu0 %v3084
    %v3393 = vpop.f32.mrb[0].mxu0
    %v3394 = vadd.f32 0.0, %v3393
    %v3395 = vpop.f32.mrb[0].mxu0
    %3396 = vdwg.mxu0
    %v3397 = vadd.f32 %v1021, %v3379
    %v3398 = vadd.f32 %v1026, %v3384
    %v3399 = vadd.f32 %v1031, %v3389
    %v3400 = vadd.f32 %v1036, %v3394
    %v3401 = vtanh.pop %v3397
    %v3402 = vtanh.pop %v3398
    %v3403 = vtanh.pop %v3399
    %v3404 = vtanh.pop %v3400
    %3405 = vmatprep.subr.mxu0 0.0
    %3406 = vmatpush1.msra.mxu0 %v1150
    %3407 = vmatprep.subr.mxu0 0.0
    %3408 = vmatpush1.msra.mxu0 %v1151
    %3409 = vmatprep.subr.mxu0 0.0
    %3410 = vmatpush1.msra.mxu0 %v1152
    %3411 = vmatprep.subr.mxu0 0.0
    %3412 = vmatpush1.msra.mxu0 %v1153
    %3413 = vmatprep.subr.mxu0 0.0
    %3414 = vmatpush1.msra.mxu0 0.0
    %3415 = vmatprep.subr.mxu0 0.0
    %3416 = vmatpush1.msra.mxu0 0.0
    %3417 = vmatprep.subr.mxu0 0.0
    %3418 = vmatpush1.msra.mxu0 0.0
    %3419 = vmatprep.subr.mxu0 0.0
    %3420 = vmatpush1.msra.mxu0 0.0
    %3421 = vmatprep.subr.mxu0 0.0
    %3422 = vmatpush1.msra.mxu0 0.0
    %3423 = vmatprep.subr.mxu0 0.0
    %3424 = vmatpush1.msra.mxu0 0.0
    %3425 = vmatprep.subr.mxu0 0.0
    %3426 = vmatpush1.msra.mxu0 0.0
    %3427 = vmatprep.subr.mxu0 0.0
    %3428 = vmatpush1.msra.mxu0 0.0
    %3429 = vmatprep.subr.mxu0 0.0
    %3430 = vmatpush1.msra.mxu0 0.0
    %3431 = vmatprep.subr.mxu0 0.0
    %3432 = vmatpush1.msra.mxu0 0.0
    %3433 = vmatprep.subr.mxu0 0.0
    %3434 = vmatpush1.msra.mxu0 0.0
    %3435 = vmatprep.subr.mxu0 0.0
    %3436 = vmatpush1.msra.mxu0 0.0
    %3437 = vmatprep.subr.mxu0 0.0
    %3438 = vmatpush1.msra.mxu0 0.0
    %3439 = vmatprep.subr.mxu0 0.0
    %3440 = vmatpush1.msra.mxu0 0.0
    %3441 = vmatprep.subr.mxu0 0.0
    %3442 = vmatpush1.msra.mxu0 0.0
    %3443 = vmatprep.subr.mxu0 0.0
    %3444 = vmatpush1.msra.mxu0 0.0
    %3445 = vmatprep.subr.mxu0 0.0
    %3446 = vmatpush1.msra.mxu0 0.0
    %3447 = vmatprep.subr.mxu0 0.0
    %3448 = vmatpush1.msra.mxu0 0.0
    %3449 = vmatprep.subr.mxu0 0.0
    %3450 = vmatpush1.msra.mxu0 0.0
    %3451 = vmatprep.subr.mxu0 0.0
    %3452 = vmatpush1.msra.mxu0 0.0
    %3453 = vmatprep.subr.mxu0 0.0
    %3454 = vmatpush1.msra.mxu0 0.0
    %3455 = vmatprep.subr.mxu0 0.0
    %3456 = vmatpush1.msra.mxu0 0.0
    %3457 = vmatprep.subr.mxu0 0.0
    %3458 = vmatpush1.msra.mxu0 0.0
    %3459 = vmatprep.subr.mxu0 0.0
    %3460 = vmatpush1.msra.mxu0 0.0
    %3461 = vmatprep.subr.mxu0 0.0
    %3462 = vmatpush1.msra.mxu0 0.0
    %3463 = vmatprep.subr.mxu0 0.0
    %3464 = vmatpush1.msra.mxu0 0.0
    %3465 = vmatprep.subr.mxu0 0.0
    %3466 = vmatpush1.msra.mxu0 0.0
    %3467 = vmatprep.subr.mxu0 0.0
    %3468 = vmatpush1.msra.mxu0 0.0
    %3469 = vmatprep.mubr.f32.mxu0 0.0
    %3470 = vmatmul.mubr.f32.gmra.mrb[0].mxu0 %v3075
    %v3471 = vpop.f32.mrb[0].mxu0
    %v3472 = vadd.f32 0.0, %v3471
    %v3473 = vpop.f32.mrb[0].mxu0
    %3474 = vmatprep.mubr.f32.mxu0 0.0
    %3475 = vmatmul.mubr.f32.gmra.mrb[0].mxu0 %v3078
    %v3476 = vpop.f32.mrb[0].mxu0
    %v3477 = vadd.f32 0.0, %v3476
    %v3478 = vpop.f32.mrb[0].mxu0
    %3479 = vmatprep.mubr.f32.mxu0 0.0
    %3480 = vmatmul.mubr.f32.gmra.mrb[0].mxu0 %v3081
    %v3481 = vpop.f32.mrb[0].mxu0
    %v3482 = vadd.f32 0.0, %v3481
    %v3483 = vpop.f32.mrb[0].mxu0
    %3484 = vmatprep.mubr.f32.mxu0 0.0
    %3485 = vmatmul.mubr.f32.gmra.mrb[0].mxu0 %v3084
    %v3486 = vpop.f32.mrb[0].mxu0
    %v3487 = vadd.f32 0.0, %v3486
    %v3488 = vpop.f32.mrb[0].mxu0
    %3489 = vdwg.mxu0
    %v3490 = vadd.f32 %v1117, %v3472
    %v3491 = vadd.f32 %v1122, %v3477
    %v3492 = vadd.f32 %v1127, %v3482
    %v3493 = vadd.f32 %v1132, %v3487
    %v3494 = vxor.u32 %v3490, 2147483648
    %v3495 = vxor.u32 %v3491, 2147483648
    %v3496 = vxor.u32 %v3492, 2147483648
    %v3497 = vxor.u32 %v3493, 2147483648
    %v3498 = vmul.f32 %v3494, 1.442695
    %v3499 = vpow.pop %v3498
    %v3500 = vmul.f32 %v3495, 1.442695
    %v3501 = vpow.pop %v3500
    %v3502 = vmul.f32 %v3496, 1.442695
    %v3503 = vpow.pop %v3502
    %v3504 = vmul.f32 %v3497, 1.442695
    %v3505 = vpow.pop %v3504
    %v3506 = vadd.f32 %v3499, 1.0
    %v3507 = vadd.f32 %v3501, 1.0
    %v3508 = vadd.f32 %v3503, 1.0
    %v3509 = vadd.f32 %v3505, 1.0
    %v3510 = vrcp.pop %v3506
    %v3511 = vmul.f32 1.0, %v3510
    %v3512 = vrcp.pop %v3507
    %v3513 = vmul.f32 1.0, %v3512
    %v3514 = vrcp.pop %v3508
    %v3515 = vmul.f32 1.0, %v3514
    %v3516 = vrcp.pop %v3509
    %v3517 = vmul.f32 1.0, %v3516
    %v3518 = vmul.f32 %v3305, %v3062
    %v3519 = vmul.f32 %v3307, %v3063
    %v3520 = vmul.f32 %v3309, %v3064
    %v3521 = vmul.f32 %v3311, %v3065
    %v3522 = vmul.f32 %v3192, %v3401
    %v3523 = vmul.f32 %v3194, %v3402
    %v3524 = vmul.f32 %v3196, %v3403
    %v3525 = vmul.f32 %v3198, %v3404
    %v3526 = vadd.f32 %v3518, %v3522
    %v3527 = vadd.f32 %v3519, %v3523
    %v3528 = vadd.f32 %v3520, %v3524
    %v3529 = vadd.f32 %v3521, %v3525
    %v3530 = vtanh.pop %v3526
    %v3531 = vtanh.pop %v3527
    %v3532 = vtanh.pop %v3528
    %v3533 = vtanh.pop %v3529
    %v3534 = vmul.f32 %v3511, %v3530
    %v3535 = vmul.f32 %v3513, %v3531
    %v3536 = vmul.f32 %v3515, %v3532
    %v3537 = vmul.f32 %v3517, %v3533
    %v3539 = vsel %vm490, %v3534, 0
    %v3542 = vsel %vm490, %v3535, 0
    %v3545 = vsel %vm490, %v3536, 0
    %v3548 = vsel %vm490, %v3537, 0
    %3550 = vmatprep.subr.mxu0 0.0
    %3551 = vmatpush1.msra.mxu0 %v1135
    %3552 = vmatprep.subr.mxu0 0.0
    %3553 = vmatpush1.msra.mxu0 %v1136
    %3554 = vmatprep.subr.mxu0 0.0
    %3555 = vmatpush1.msra.mxu0 %v1137
    %3556 = vmatprep.subr.mxu0 0.0
    %3557 = vmatpush1.msra.mxu0 %v1138
    %3558 = vmatprep.subr.mxu0 0.0
    %3559 = vmatpush1.msra.mxu0 0.0
    %3560 = vmatprep.subr.mxu0 0.0
    %3561 = vmatpush1.msra.mxu0 0.0
    %3562 = vmatprep.subr.mxu0 0.0
    %3563 = vmatpush1.msra.mxu0 0.0
    %3564 = vmatprep.subr.mxu0 0.0
    %3565 = vmatpush1.msra.mxu0 0.0
    %3566 = vmatprep.subr.mxu0 0.0
    %3567 = vmatpush1.msra.mxu0 0.0
    %3568 = vmatprep.subr.mxu0 0.0
    %3569 = vmatpush1.msra.mxu0 0.0
    %3570 = vmatprep.subr.mxu0 0.0
    %3571 = vmatpush1.msra.mxu0 0.0
    %3572 = vmatprep.subr.mxu0 0.0
    %3573 = vmatpush1.msra.mxu0 0.0
    %3574 = vmatprep.subr.mxu0 0.0
    %3575 = vmatpush1.msra.mxu0 0.0
    %3576 = vmatprep.subr.mxu0 0.0
    %3577 = vmatpush1.msra.mxu0 0.0
    %3578 = vmatprep.subr.mxu0 0.0
    %3579 = vmatpush1.msra.mxu0 0.0
    %3580 = vmatprep.subr.mxu0 0.0
    %3581 = vmatpush1.msra.mxu0 0.0
    %3582 = vmatprep.subr.mxu0 0.0
    %3583 = vmatpush1.msra.mxu0 0.0
    %3584 = vmatprep.subr.mxu0 0.0
    %3585 = vmatpush1.msra.mxu0 0.0
    %3586 = vmatprep.subr.mxu0 0.0
    %3587 = vmatpush1.msra.mxu0 0.0
    %3588 = vmatprep.subr.mxu0 0.0
    %3589 = vmatpush1.msra.mxu0 0.0
    %3590 = vmatprep.subr.mxu0 0.0
    %3591 = vmatpush1.msra.mxu0 0.0
    %3592 = vmatprep.subr.mxu0 0.0
    %3593 = vmatpush1.msra.mxu0 0.0
    %3594 = vmatprep.subr.mxu0 0.0
    %3595 = vmatpush1.msra.mxu0 0.0
    %3596 = vmatprep.subr.mxu0 0.0
    %3597 = vmatpush1.msra.mxu0 0.0
    %3598 = vmatprep.subr.mxu0 0.0
    %3599 = vmatpush1.msra.mxu0 0.0
    %3600 = vmatprep.subr.mxu0 0.0
    %3601 = vmatpush1.msra.mxu0 0.0
    %3602 = vmatprep.subr.mxu0 0.0
    %3603 = vmatpush1.msra.mxu0 0.0
    %3604 = vmatprep.subr.mxu0 0.0
    %3605 = vmatpush1.msra.mxu0 0.0
    %3606 = vmatprep.subr.mxu0 0.0
    %3607 = vmatpush1.msra.mxu0 0.0
    %3608 = vmatprep.subr.mxu0 0.0
    %3609 = vmatpush1.msra.mxu0 0.0
    %3610 = vmatprep.subr.mxu0 0.0
    %3611 = vmatpush1.msra.mxu0 0.0
    %3612 = vmatprep.subr.mxu0 0.0
    %3613 = vmatpush1.msra.mxu0 0.0
    %3614 = vmatprep.mubr.f32.mxu0 0.0
    %3615 = vmatmul.mubr.f32.gmra.mrb[0].mxu0 %v3539
    %v3616 = vpop.f32.mrb[0].mxu0
    %v3617 = vadd.f32 0.0, %v3616
    %v3618 = vpop.f32.mrb[0].mxu0
    %3619 = vmatprep.mubr.f32.mxu0 0.0
    %3620 = vmatmul.mubr.f32.gmra.mrb[0].mxu0 %v3542
    %v3621 = vpop.f32.mrb[0].mxu0
    %v3622 = vadd.f32 0.0, %v3621
    %v3623 = vpop.f32.mrb[0].mxu0
    %3624 = vmatprep.mubr.f32.mxu0 0.0
    %3625 = vmatmul.mubr.f32.gmra.mrb[0].mxu0 %v3545
    %v3626 = vpop.f32.mrb[0].mxu0
    %v3627 = vadd.f32 0.0, %v3626
    %v3628 = vpop.f32.mrb[0].mxu0
    %3629 = vmatprep.mubr.f32.mxu0 0.0
    %3630 = vmatmul.mubr.f32.gmra.mrb[0].mxu0 %v3548
    %v3631 = vpop.f32.mrb[0].mxu0
    %v3632 = vadd.f32 0.0, %v3631
    %v3633 = vpop.f32.mrb[0].mxu0
    %3634 = vdwg.mxu0
    %v3635 = vadd.f32 %v829, %v3617
    %v3636 = vadd.f32 %v834, %v3622
    %v3637 = vadd.f32 %v839, %v3627
    %v3638 = vadd.f32 %v844, %v3632
    %v3639 = vxor.u32 %v3635, 2147483648
    %v3640 = vxor.u32 %v3636, 2147483648
    %v3641 = vxor.u32 %v3637, 2147483648
    %v3642 = vxor.u32 %v3638, 2147483648
    %v3643 = vmul.f32 %v3639, 1.442695
    %v3644 = vpow.pop %v3643
    %v3645 = vmul.f32 %v3640, 1.442695
    %v3646 = vpow.pop %v3645
    %v3647 = vmul.f32 %v3641, 1.442695
    %v3648 = vpow.pop %v3647
    %v3649 = vmul.f32 %v3642, 1.442695
    %v3650 = vpow.pop %v3649
    %v3651 = vadd.f32 %v3644, 1.0
    %v3652 = vadd.f32 %v3646, 1.0
    %v3653 = vadd.f32 %v3648, 1.0
    %v3654 = vadd.f32 %v3650, 1.0
    %v3655 = vrcp.pop %v3651
    %v3656 = vmul.f32 1.0, %v3655
    %v3657 = vrcp.pop %v3652
    %v3658 = vmul.f32 1.0, %v3657
    %v3659 = vrcp.pop %v3653
    %v3660 = vmul.f32 1.0, %v3659
    %v3661 = vrcp.pop %v3654
    %v3662 = vmul.f32 1.0, %v3661
    %3663 = vmatprep.subr.mxu0 0.0
    %3664 = vmatpush1.msra.mxu0 %v1140
    %3665 = vmatprep.subr.mxu0 0.0
    %3666 = vmatpush1.msra.mxu0 %v1141
    %3667 = vmatprep.subr.mxu0 0.0
    %3668 = vmatpush1.msra.mxu0 %v1142
    %3669 = vmatprep.subr.mxu0 0.0
    %3670 = vmatpush1.msra.mxu0 %v1143
    %3671 = vmatprep.subr.mxu0 0.0
    %3672 = vmatpush1.msra.mxu0 0.0
    %3673 = vmatprep.subr.mxu0 0.0
    %3674 = vmatpush1.msra.mxu0 0.0
    %3675 = vmatprep.subr.mxu0 0.0
    %3676 = vmatpush1.msra.mxu0 0.0
    %3677 = vmatprep.subr.mxu0 0.0
    %3678 = vmatpush1.msra.mxu0 0.0
    %3679 = vmatprep.subr.mxu0 0.0
    %3680 = vmatpush1.msra.mxu0 0.0
    %3681 = vmatprep.subr.mxu0 0.0
    %3682 = vmatpush1.msra.mxu0 0.0
    %3683 = vmatprep.subr.mxu0 0.0
    %3684 = vmatpush1.msra.mxu0 0.0
    %3685 = vmatprep.subr.mxu0 0.0
    %3686 = vmatpush1.msra.mxu0 0.0
    %3687 = vmatprep.subr.mxu0 0.0
    %3688 = vmatpush1.msra.mxu0 0.0
    %3689 = vmatprep.subr.mxu0 0.0
    %3690 = vmatpush1.msra.mxu0 0.0
    %3691 = vmatprep.subr.mxu0 0.0
    %3692 = vmatpush1.msra.mxu0 0.0
    %3693 = vmatprep.subr.mxu0 0.0
    %3694 = vmatpush1.msra.mxu0 0.0
    %3695 = vmatprep.subr.mxu0 0.0
    %3696 = vmatpush1.msra.mxu0 0.0
    %3697 = vmatprep.subr.mxu0 0.0
    %3698 = vmatpush1.msra.mxu0 0.0
    %3699 = vmatprep.subr.mxu0 0.0
    %3700 = vmatpush1.msra.mxu0 0.0
    %3701 = vmatprep.subr.mxu0 0.0
    %3702 = vmatpush1.msra.mxu0 0.0
    %3703 = vmatprep.subr.mxu0 0.0
    %3704 = vmatpush1.msra.mxu0 0.0
    %3705 = vmatprep.subr.mxu0 0.0
    %3706 = vmatpush1.msra.mxu0 0.0
    %3707 = vmatprep.subr.mxu0 0.0
    %3708 = vmatpush1.msra.mxu0 0.0
    %3709 = vmatprep.subr.mxu0 0.0
    %3710 = vmatpush1.msra.mxu0 0.0
    %3711 = vmatprep.subr.mxu0 0.0
    %3712 = vmatpush1.msra.mxu0 0.0
    %3713 = vmatprep.subr.mxu0 0.0
    %3714 = vmatpush1.msra.mxu0 0.0
    %3715 = vmatprep.subr.mxu0 0.0
    %3716 = vmatpush1.msra.mxu0 0.0
    %3717 = vmatprep.subr.mxu0 0.0
    %3718 = vmatpush1.msra.mxu0 0.0
    %3719 = vmatprep.subr.mxu0 0.0
    %3720 = vmatpush1.msra.mxu0 0.0
    %3721 = vmatprep.subr.mxu0 0.0
    %3722 = vmatpush1.msra.mxu0 0.0
    %3723 = vmatprep.subr.mxu0 0.0
    %3724 = vmatpush1.msra.mxu0 0.0
    %3725 = vmatprep.subr.mxu0 0.0
    %3726 = vmatpush1.msra.mxu0 0.0
    %3727 = vmatprep.mubr.f32.mxu0 0.0
    %3728 = vmatmul.mubr.f32.gmra.mrb[0].mxu0 %v3539
    %v3729 = vpop.f32.mrb[0].mxu0
    %v3730 = vadd.f32 0.0, %v3729
    %v3731 = vpop.f32.mrb[0].mxu0
    %3732 = vmatprep.mubr.f32.mxu0 0.0
    %3733 = vmatmul.mubr.f32.gmra.mrb[0].mxu0 %v3542
    %v3734 = vpop.f32.mrb[0].mxu0
    %v3735 = vadd.f32 0.0, %v3734
    %v3736 = vpop.f32.mrb[0].mxu0
    %3737 = vmatprep.mubr.f32.mxu0 0.0
    %3738 = vmatmul.mubr.f32.gmra.mrb[0].mxu0 %v3545
    %v3739 = vpop.f32.mrb[0].mxu0
    %v3740 = vadd.f32 0.0, %v3739
    %v3741 = vpop.f32.mrb[0].mxu0
    %3742 = vmatprep.mubr.f32.mxu0 0.0
    %3743 = vmatmul.mubr.f32.gmra.mrb[0].mxu0 %v3548
    %v3744 = vpop.f32.mrb[0].mxu0
    %v3745 = vadd.f32 0.0, %v3744
    %v3746 = vpop.f32.mrb[0].mxu0
    %3747 = vdwg.mxu0
    %v3748 = vadd.f32 %v925, %v3730
    %v3749 = vadd.f32 %v930, %v3735
    %v3750 = vadd.f32 %v935, %v3740
    %v3751 = vadd.f32 %v940, %v3745
    %v3752 = vxor.u32 %v3748, 2147483648
    %v3753 = vxor.u32 %v3749, 2147483648
    %v3754 = vxor.u32 %v3750, 2147483648
    %v3755 = vxor.u32 %v3751, 2147483648
    %v3756 = vmul.f32 %v3752, 1.442695
    %v3757 = vpow.pop %v3756
    %v3758 = vmul.f32 %v3753, 1.442695
    %v3759 = vpow.pop %v3758
    %v3760 = vmul.f32 %v3754, 1.442695
    %v3761 = vpow.pop %v3760
    %v3762 = vmul.f32 %v3755, 1.442695
    %v3763 = vpow.pop %v3762
    %v3764 = vadd.f32 %v3757, 1.0
    %v3765 = vadd.f32 %v3759, 1.0
    %v3766 = vadd.f32 %v3761, 1.0
    %v3767 = vadd.f32 %v3763, 1.0
    %v3768 = vrcp.pop %v3764
    %v3769 = vmul.f32 1.0, %v3768
    %v3770 = vrcp.pop %v3765
    %v3771 = vmul.f32 1.0, %v3770
    %v3772 = vrcp.pop %v3766
    %v3773 = vmul.f32 1.0, %v3772
    %v3774 = vrcp.pop %v3767
    %v3775 = vmul.f32 1.0, %v3774
    %3776 = vmatprep.subr.mxu0 0.0
    %3777 = vmatpush1.msra.mxu0 %v1145
    %3778 = vmatprep.subr.mxu0 0.0
    %3779 = vmatpush1.msra.mxu0 %v1146
    %3780 = vmatprep.subr.mxu0 0.0
    %3781 = vmatpush1.msra.mxu0 %v1147
    %3782 = vmatprep.subr.mxu0 0.0
    %3783 = vmatpush1.msra.mxu0 %v1148
    %3784 = vmatprep.subr.mxu0 0.0
    %3785 = vmatpush1.msra.mxu0 0.0
    %3786 = vmatprep.subr.mxu0 0.0
    %3787 = vmatpush1.msra.mxu0 0.0
    %3788 = vmatprep.subr.mxu0 0.0
    %3789 = vmatpush1.msra.mxu0 0.0
    %3790 = vmatprep.subr.mxu0 0.0
    %3791 = vmatpush1.msra.mxu0 0.0
    %3792 = vmatprep.subr.mxu0 0.0
    %3793 = vmatpush1.msra.mxu0 0.0
    %3794 = vmatprep.subr.mxu0 0.0
    %3795 = vmatpush1.msra.mxu0 0.0
    %3796 = vmatprep.subr.mxu0 0.0
    %3797 = vmatpush1.msra.mxu0 0.0
    %3798 = vmatprep.subr.mxu0 0.0
    %3799 = vmatpush1.msra.mxu0 0.0
    %3800 = vmatprep.subr.mxu0 0.0
    %3801 = vmatpush1.msra.mxu0 0.0
    %3802 = vmatprep.subr.mxu0 0.0
    %3803 = vmatpush1.msra.mxu0 0.0
    %3804 = vmatprep.subr.mxu0 0.0
    %3805 = vmatpush1.msra.mxu0 0.0
    %3806 = vmatprep.subr.mxu0 0.0
    %3807 = vmatpush1.msra.mxu0 0.0
    %3808 = vmatprep.subr.mxu0 0.0
    %3809 = vmatpush1.msra.mxu0 0.0
    %3810 = vmatprep.subr.mxu0 0.0
    %3811 = vmatpush1.msra.mxu0 0.0
    %3812 = vmatprep.subr.mxu0 0.0
    %3813 = vmatpush1.msra.mxu0 0.0
    %3814 = vmatprep.subr.mxu0 0.0
    %3815 = vmatpush1.msra.mxu0 0.0
    %3816 = vmatprep.subr.mxu0 0.0
    %3817 = vmatpush1.msra.mxu0 0.0
    %3818 = vmatprep.subr.mxu0 0.0
    %3819 = vmatpush1.msra.mxu0 0.0
    %3820 = vmatprep.subr.mxu0 0.0
    %3821 = vmatpush1.msra.mxu0 0.0
    %3822 = vmatprep.subr.mxu0 0.0
    %3823 = vmatpush1.msra.mxu0 0.0
    %3824 = vmatprep.subr.mxu0 0.0
    %3825 = vmatpush1.msra.mxu0 0.0
    %3826 = vmatprep.subr.mxu0 0.0
    %3827 = vmatpush1.msra.mxu0 0.0
    %3828 = vmatprep.subr.mxu0 0.0
    %3829 = vmatpush1.msra.mxu0 0.0
    %3830 = vmatprep.subr.mxu0 0.0
    %3831 = vmatpush1.msra.mxu0 0.0
    %3832 = vmatprep.subr.mxu0 0.0
    %3833 = vmatpush1.msra.mxu0 0.0
    %3834 = vmatprep.subr.mxu0 0.0
    %3835 = vmatpush1.msra.mxu0 0.0
    %3836 = vmatprep.subr.mxu0 0.0
    %3837 = vmatpush1.msra.mxu0 0.0
    %3838 = vmatprep.subr.mxu0 0.0
    %3839 = vmatpush1.msra.mxu0 0.0
    %3840 = vmatprep.mubr.f32.mxu0 0.0
    %3841 = vmatmul.mubr.f32.gmra.mrb[0].mxu0 %v3539
    %v3842 = vpop.f32.mrb[0].mxu0
    %v3843 = vadd.f32 0.0, %v3842
    %v3844 = vpop.f32.mrb[0].mxu0
    %3845 = vmatprep.mubr.f32.mxu0 0.0
    %3846 = vmatmul.mubr.f32.gmra.mrb[0].mxu0 %v3542
    %v3847 = vpop.f32.mrb[0].mxu0
    %v3848 = vadd.f32 0.0, %v3847
    %v3849 = vpop.f32.mrb[0].mxu0
    %3850 = vmatprep.mubr.f32.mxu0 0.0
    %3851 = vmatmul.mubr.f32.gmra.mrb[0].mxu0 %v3545
    %v3852 = vpop.f32.mrb[0].mxu0
    %v3853 = vadd.f32 0.0, %v3852
    %v3854 = vpop.f32.mrb[0].mxu0
    %3855 = vmatprep.mubr.f32.mxu0 0.0
    %3856 = vmatmul.mubr.f32.gmra.mrb[0].mxu0 %v3548
    %v3857 = vpop.f32.mrb[0].mxu0
    %v3858 = vadd.f32 0.0, %v3857
    %v3859 = vpop.f32.mrb[0].mxu0
    %3860 = vdwg.mxu0
    %v3861 = vadd.f32 %v1021, %v3843
    %v3862 = vadd.f32 %v1026, %v3848
    %v3863 = vadd.f32 %v1031, %v3853
    %v3864 = vadd.f32 %v1036, %v3858
    %v3865 = vtanh.pop %v3861
    %v3866 = vtanh.pop %v3862
    %v3867 = vtanh.pop %v3863
    %v3868 = vtanh.pop %v3864
    %3869 = vmatprep.subr.mxu0 0.0
    %3870 = vmatpush1.msra.mxu0 %v1150
    %3871 = vmatprep.subr.mxu0 0.0
    %3872 = vmatpush1.msra.mxu0 %v1151
    %3873 = vmatprep.subr.mxu0 0.0
    %3874 = vmatpush1.msra.mxu0 %v1152
    %3875 = vmatprep.subr.mxu0 0.0
    %3876 = vmatpush1.msra.mxu0 %v1153
    %3877 = vmatprep.subr.mxu0 0.0
    %3878 = vmatpush1.msra.mxu0 0.0
    %3879 = vmatprep.subr.mxu0 0.0
    %3880 = vmatpush1.msra.mxu0 0.0
    %3881 = vmatprep.subr.mxu0 0.0
    %3882 = vmatpush1.msra.mxu0 0.0
    %3883 = vmatprep.subr.mxu0 0.0
    %3884 = vmatpush1.msra.mxu0 0.0
    %3885 = vmatprep.subr.mxu0 0.0
    %3886 = vmatpush1.msra.mxu0 0.0
    %3887 = vmatprep.subr.mxu0 0.0
    %3888 = vmatpush1.msra.mxu0 0.0
    %3889 = vmatprep.subr.mxu0 0.0
    %3890 = vmatpush1.msra.mxu0 0.0
    %3891 = vmatprep.subr.mxu0 0.0
    %3892 = vmatpush1.msra.mxu0 0.0
    %3893 = vmatprep.subr.mxu0 0.0
    %3894 = vmatpush1.msra.mxu0 0.0
    %3895 = vmatprep.subr.mxu0 0.0
    %3896 = vmatpush1.msra.mxu0 0.0
    %3897 = vmatprep.subr.mxu0 0.0
    %3898 = vmatpush1.msra.mxu0 0.0
    %3899 = vmatprep.subr.mxu0 0.0
    %3900 = vmatpush1.msra.mxu0 0.0
    %3901 = vmatprep.subr.mxu0 0.0
    %3902 = vmatpush1.msra.mxu0 0.0
    %3903 = vmatprep.subr.mxu0 0.0
    %3904 = vmatpush1.msra.mxu0 0.0
    %3905 = vmatprep.subr.mxu0 0.0
    %3906 = vmatpush1.msra.mxu0 0.0
    %3907 = vmatprep.subr.mxu0 0.0
    %3908 = vmatpush1.msra.mxu0 0.0
    %3909 = vmatprep.subr.mxu0 0.0
    %3910 = vmatpush1.msra.mxu0 0.0
    %3911 = vmatprep.subr.mxu0 0.0
    %3912 = vmatpush1.msra.mxu0 0.0
    %3913 = vmatprep.subr.mxu0 0.0
    %3914 = vmatpush1.msra.mxu0 0.0
    %3915 = vmatprep.subr.mxu0 0.0
    %3916 = vmatpush1.msra.mxu0 0.0
    %3917 = vmatprep.subr.mxu0 0.0
    %3918 = vmatpush1.msra.mxu0 0.0
    %3919 = vmatprep.subr.mxu0 0.0
    %3920 = vmatpush1.msra.mxu0 0.0
    %3921 = vmatprep.subr.mxu0 0.0
    %3922 = vmatpush1.msra.mxu0 0.0
    %3923 = vmatprep.subr.mxu0 0.0
    %3924 = vmatpush1.msra.mxu0 0.0
    %3925 = vmatprep.subr.mxu0 0.0
    %3926 = vmatpush1.msra.mxu0 0.0
    %3927 = vmatprep.subr.mxu0 0.0
    %3928 = vmatpush1.msra.mxu0 0.0
    %3929 = vmatprep.subr.mxu0 0.0
    %3930 = vmatpush1.msra.mxu0 0.0
    %3931 = vmatprep.subr.mxu0 0.0
    %3932 = vmatpush1.msra.mxu0 0.0
    %3933 = vmatprep.mubr.f32.mxu0 0.0
    %3934 = vmatmul.mubr.f32.gmra.mrb[0].mxu0 %v3539
    %v3935 = vpop.f32.mrb[0].mxu0
    %v3936 = vadd.f32 0.0, %v3935
    %v3937 = vpop.f32.mrb[0].mxu0
    %3938 = vmatprep.mubr.f32.mxu0 0.0
    %3939 = vmatmul.mubr.f32.gmra.mrb[0].mxu0 %v3542
    %v3940 = vpop.f32.mrb[0].mxu0
    %v3941 = vadd.f32 0.0, %v3940
    %v3942 = vpop.f32.mrb[0].mxu0
    %3943 = vmatprep.mubr.f32.mxu0 0.0
    %3944 = vmatmul.mubr.f32.gmra.mrb[0].mxu0 %v3545
    %v3945 = vpop.f32.mrb[0].mxu0
    %v3946 = vadd.f32 0.0, %v3945
    %v3947 = vpop.f32.mrb[0].mxu0
    %3948 = vmatprep.mubr.f32.mxu0 0.0
    %3949 = vmatmul.mubr.f32.gmra.mrb[0].mxu0 %v3548
    %v3950 = vpop.f32.mrb[0].mxu0
    %v3951 = vadd.f32 0.0, %v3950
    %v3952 = vpop.f32.mrb[0].mxu0
    %3953 = vdwg.mxu0
    %v3954 = vadd.f32 %v1117, %v3936
    %v3955 = vadd.f32 %v1122, %v3941
    %v3956 = vadd.f32 %v1127, %v3946
    %v3957 = vadd.f32 %v1132, %v3951
    %v3958 = vxor.u32 %v3954, 2147483648
    %v3959 = vxor.u32 %v3955, 2147483648
    %v3960 = vxor.u32 %v3956, 2147483648
    %v3961 = vxor.u32 %v3957, 2147483648
    %v3962 = vmul.f32 %v3958, 1.442695
    %v3963 = vpow.pop %v3962
    %v3964 = vmul.f32 %v3959, 1.442695
    %v3965 = vpow.pop %v3964
    %v3966 = vmul.f32 %v3960, 1.442695
    %v3967 = vpow.pop %v3966
    %v3968 = vmul.f32 %v3961, 1.442695
    %v3969 = vpow.pop %v3968
    %v3970 = vadd.f32 %v3963, 1.0
    %v3971 = vadd.f32 %v3965, 1.0
    %v3972 = vadd.f32 %v3967, 1.0
    %v3973 = vadd.f32 %v3969, 1.0
    %v3974 = vrcp.pop %v3970
    %v3975 = vmul.f32 1.0, %v3974
    %v3976 = vrcp.pop %v3971
    %v3977 = vmul.f32 1.0, %v3976
    %v3978 = vrcp.pop %v3972
    %v3979 = vmul.f32 1.0, %v3978
    %v3980 = vrcp.pop %v3973
    %v3981 = vmul.f32 1.0, %v3980
    %v3982 = vmul.f32 %v3769, %v3526
    %v3983 = vmul.f32 %v3771, %v3527
    %v3984 = vmul.f32 %v3773, %v3528
    %v3985 = vmul.f32 %v3775, %v3529
    %v3986 = vmul.f32 %v3656, %v3865
    %v3987 = vmul.f32 %v3658, %v3866
    %v3988 = vmul.f32 %v3660, %v3867
    %v3989 = vmul.f32 %v3662, %v3868
    %v3990 = vadd.f32 %v3982, %v3986
    %v3991 = vadd.f32 %v3983, %v3987
    %v3992 = vadd.f32 %v3984, %v3988
    %v3993 = vadd.f32 %v3985, %v3989
    %v3994 = vtanh.pop %v3990
    %v3995 = vtanh.pop %v3991
    %v3996 = vtanh.pop %v3992
    %v3997 = vtanh.pop %v3993
    %v3998 = vmul.f32 %v3975, %v3994
    %v3999 = vmul.f32 %v3977, %v3995
    %v4000 = vmul.f32 %v3979, %v3996
    %v4001 = vmul.f32 %v3981, %v3997
    %v4003 = vsel %vm490, %v3998, 0
    %v4006 = vsel %vm490, %v3999, 0
    %v4009 = vsel %vm490, %v4000, 0
    %v4012 = vsel %vm490, %v4001, 0
    %4014 = vmatprep.subr.mxu0 0.0
    %4015 = vmatpush1.msra.mxu0 %v1135
    %4016 = vmatprep.subr.mxu0 0.0
    %4017 = vmatpush1.msra.mxu0 %v1136
    %4018 = vmatprep.subr.mxu0 0.0
    %4019 = vmatpush1.msra.mxu0 %v1137
    %4020 = vmatprep.subr.mxu0 0.0
    %4021 = vmatpush1.msra.mxu0 %v1138
    %4022 = vmatprep.subr.mxu0 0.0
    %4023 = vmatpush1.msra.mxu0 0.0
    %4024 = vmatprep.subr.mxu0 0.0
    %4025 = vmatpush1.msra.mxu0 0.0
    %4026 = vmatprep.subr.mxu0 0.0
    %4027 = vmatpush1.msra.mxu0 0.0
    %4028 = vmatprep.subr.mxu0 0.0
    %4029 = vmatpush1.msra.mxu0 0.0
    %4030 = vmatprep.subr.mxu0 0.0
    %4031 = vmatpush1.msra.mxu0 0.0
    %4032 = vmatprep.subr.mxu0 0.0
    %4033 = vmatpush1.msra.mxu0 0.0
    %4034 = vmatprep.subr.mxu0 0.0
    %4035 = vmatpush1.msra.mxu0 0.0
    %4036 = vmatprep.subr.mxu0 0.0
    %4037 = vmatpush1.msra.mxu0 0.0
    %4038 = vmatprep.subr.mxu0 0.0
    %4039 = vmatpush1.msra.mxu0 0.0
    %4040 = vmatprep.subr.mxu0 0.0
    %4041 = vmatpush1.msra.mxu0 0.0
    %4042 = vmatprep.subr.mxu0 0.0
    %4043 = vmatpush1.msra.mxu0 0.0
    %4044 = vmatprep.subr.mxu0 0.0
    %4045 = vmatpush1.msra.mxu0 0.0
    %4046 = vmatprep.subr.mxu0 0.0
    %4047 = vmatpush1.msra.mxu0 0.0
    %4048 = vmatprep.subr.mxu0 0.0
    %4049 = vmatpush1.msra.mxu0 0.0
    %4050 = vmatprep.subr.mxu0 0.0
    %4051 = vmatpush1.msra.mxu0 0.0
    %4052 = vmatprep.subr.mxu0 0.0
    %4053 = vmatpush1.msra.mxu0 0.0
    %4054 = vmatprep.subr.mxu0 0.0
    %4055 = vmatpush1.msra.mxu0 0.0
    %4056 = vmatprep.subr.mxu0 0.0
    %4057 = vmatpush1.msra.mxu0 0.0
    %4058 = vmatprep.subr.mxu0 0.0
    %4059 = vmatpush1.msra.mxu0 0.0
    %4060 = vmatprep.subr.mxu0 0.0
    %4061 = vmatpush1.msra.mxu0 0.0
    %4062 = vmatprep.subr.mxu0 0.0
    %4063 = vmatpush1.msra.mxu0 0.0
    %4064 = vmatprep.subr.mxu0 0.0
    %4065 = vmatpush1.msra.mxu0 0.0
    %4066 = vmatprep.subr.mxu0 0.0
    %4067 = vmatpush1.msra.mxu0 0.0
    %4068 = vmatprep.subr.mxu0 0.0
    %4069 = vmatpush1.msra.mxu0 0.0
    %4070 = vmatprep.subr.mxu0 0.0
    %4071 = vmatpush1.msra.mxu0 0.0
    %4072 = vmatprep.subr.mxu0 0.0
    %4073 = vmatpush1.msra.mxu0 0.0
    %4074 = vmatprep.subr.mxu0 0.0
    %4075 = vmatpush1.msra.mxu0 0.0
    %4076 = vmatprep.subr.mxu0 0.0
    %4077 = vmatpush1.msra.mxu0 0.0
    %4078 = vmatprep.mubr.f32.mxu0 0.0
    %4079 = vmatmul.mubr.f32.gmra.mrb[0].mxu0 %v4003
    %v4080 = vpop.f32.mrb[0].mxu0
    %v4081 = vadd.f32 0.0, %v4080
    %v4082 = vpop.f32.mrb[0].mxu0
    %4083 = vmatprep.mubr.f32.mxu0 0.0
    %4084 = vmatmul.mubr.f32.gmra.mrb[0].mxu0 %v4006
    %v4085 = vpop.f32.mrb[0].mxu0
    %v4086 = vadd.f32 0.0, %v4085
    %v4087 = vpop.f32.mrb[0].mxu0
    %4088 = vmatprep.mubr.f32.mxu0 0.0
    %4089 = vmatmul.mubr.f32.gmra.mrb[0].mxu0 %v4009
    %v4090 = vpop.f32.mrb[0].mxu0
    %v4091 = vadd.f32 0.0, %v4090
    %v4092 = vpop.f32.mrb[0].mxu0
    %4093 = vmatprep.mubr.f32.mxu0 0.0
    %4094 = vmatmul.mubr.f32.gmra.mrb[0].mxu0 %v4012
    %v4095 = vpop.f32.mrb[0].mxu0
    %v4096 = vadd.f32 0.0, %v4095
    %v4097 = vpop.f32.mrb[0].mxu0
    %4098 = vdwg.mxu0
    %v4099 = vadd.f32 %v829, %v4081
    %v4100 = vadd.f32 %v834, %v4086
    %v4101 = vadd.f32 %v839, %v4091
    %v4102 = vadd.f32 %v844, %v4096
    %v4103 = vxor.u32 %v4099, 2147483648
    %v4104 = vxor.u32 %v4100, 2147483648
    %v4105 = vxor.u32 %v4101, 2147483648
    %v4106 = vxor.u32 %v4102, 2147483648
    %v4107 = vmul.f32 %v4103, 1.442695
    %v4108 = vpow.pop %v4107
    %v4109 = vmul.f32 %v4104, 1.442695
    %v4110 = vpow.pop %v4109
    %v4111 = vmul.f32 %v4105, 1.442695
    %v4112 = vpow.pop %v4111
    %v4113 = vmul.f32 %v4106, 1.442695
    %v4114 = vpow.pop %v4113
    %v4115 = vadd.f32 %v4108, 1.0
    %v4116 = vadd.f32 %v4110, 1.0
    %v4117 = vadd.f32 %v4112, 1.0
    %v4118 = vadd.f32 %v4114, 1.0
    %v4119 = vrcp.pop %v4115
    %v4120 = vmul.f32 1.0, %v4119
    %v4121 = vrcp.pop %v4116
    %v4122 = vmul.f32 1.0, %v4121
    %v4123 = vrcp.pop %v4117
    %v4124 = vmul.f32 1.0, %v4123
    %v4125 = vrcp.pop %v4118
    %v4126 = vmul.f32 1.0, %v4125
    %4127 = vmatprep.subr.mxu0 0.0
    %4128 = vmatpush1.msra.mxu0 %v1140
    %4129 = vmatprep.subr.mxu0 0.0
    %4130 = vmatpush1.msra.mxu0 %v1141
    %4131 = vmatprep.subr.mxu0 0.0
    %4132 = vmatpush1.msra.mxu0 %v1142
    %4133 = vmatprep.subr.mxu0 0.0
    %4134 = vmatpush1.msra.mxu0 %v1143
    %4135 = vmatprep.subr.mxu0 0.0
    %4136 = vmatpush1.msra.mxu0 0.0
    %4137 = vmatprep.subr.mxu0 0.0
    %4138 = vmatpush1.msra.mxu0 0.0
    %4139 = vmatprep.subr.mxu0 0.0
    %4140 = vmatpush1.msra.mxu0 0.0
    %4141 = vmatprep.subr.mxu0 0.0
    %4142 = vmatpush1.msra.mxu0 0.0
    %4143 = vmatprep.subr.mxu0 0.0
    %4144 = vmatpush1.msra.mxu0 0.0
    %4145 = vmatprep.subr.mxu0 0.0
    %4146 = vmatpush1.msra.mxu0 0.0
    %4147 = vmatprep.subr.mxu0 0.0
    %4148 = vmatpush1.msra.mxu0 0.0
    %4149 = vmatprep.subr.mxu0 0.0
    %4150 = vmatpush1.msra.mxu0 0.0
    %4151 = vmatprep.subr.mxu0 0.0
    %4152 = vmatpush1.msra.mxu0 0.0
    %4153 = vmatprep.subr.mxu0 0.0
    %4154 = vmatpush1.msra.mxu0 0.0
    %4155 = vmatprep.subr.mxu0 0.0
    %4156 = vmatpush1.msra.mxu0 0.0
    %4157 = vmatprep.subr.mxu0 0.0
    %4158 = vmatpush1.msra.mxu0 0.0
    %4159 = vmatprep.subr.mxu0 0.0
    %4160 = vmatpush1.msra.mxu0 0.0
    %4161 = vmatprep.subr.mxu0 0.0
    %4162 = vmatpush1.msra.mxu0 0.0
    %4163 = vmatprep.subr.mxu0 0.0
    %4164 = vmatpush1.msra.mxu0 0.0
    %4165 = vmatprep.subr.mxu0 0.0
    %4166 = vmatpush1.msra.mxu0 0.0
    %4167 = vmatprep.subr.mxu0 0.0
    %4168 = vmatpush1.msra.mxu0 0.0
    %4169 = vmatprep.subr.mxu0 0.0
    %4170 = vmatpush1.msra.mxu0 0.0
    %4171 = vmatprep.subr.mxu0 0.0
    %4172 = vmatpush1.msra.mxu0 0.0
    %4173 = vmatprep.subr.mxu0 0.0
    %4174 = vmatpush1.msra.mxu0 0.0
    %4175 = vmatprep.subr.mxu0 0.0
    %4176 = vmatpush1.msra.mxu0 0.0
    %4177 = vmatprep.subr.mxu0 0.0
    %4178 = vmatpush1.msra.mxu0 0.0
    %4179 = vmatprep.subr.mxu0 0.0
    %4180 = vmatpush1.msra.mxu0 0.0
    %4181 = vmatprep.subr.mxu0 0.0
    %4182 = vmatpush1.msra.mxu0 0.0
    %4183 = vmatprep.subr.mxu0 0.0
    %4184 = vmatpush1.msra.mxu0 0.0
    %4185 = vmatprep.subr.mxu0 0.0
    %4186 = vmatpush1.msra.mxu0 0.0
    %4187 = vmatprep.subr.mxu0 0.0
    %4188 = vmatpush1.msra.mxu0 0.0
    %4189 = vmatprep.subr.mxu0 0.0
    %4190 = vmatpush1.msra.mxu0 0.0
    %4191 = vmatprep.mubr.f32.mxu0 0.0
    %4192 = vmatmul.mubr.f32.gmra.mrb[0].mxu0 %v4003
    %v4193 = vpop.f32.mrb[0].mxu0
    %v4194 = vadd.f32 0.0, %v4193
    %v4195 = vpop.f32.mrb[0].mxu0
    %4196 = vmatprep.mubr.f32.mxu0 0.0
    %4197 = vmatmul.mubr.f32.gmra.mrb[0].mxu0 %v4006
    %v4198 = vpop.f32.mrb[0].mxu0
    %v4199 = vadd.f32 0.0, %v4198
    %v4200 = vpop.f32.mrb[0].mxu0
    %4201 = vmatprep.mubr.f32.mxu0 0.0
    %4202 = vmatmul.mubr.f32.gmra.mrb[0].mxu0 %v4009
    %v4203 = vpop.f32.mrb[0].mxu0
    %v4204 = vadd.f32 0.0, %v4203
    %v4205 = vpop.f32.mrb[0].mxu0
    %4206 = vmatprep.mubr.f32.mxu0 0.0
    %4207 = vmatmul.mubr.f32.gmra.mrb[0].mxu0 %v4012
    %v4208 = vpop.f32.mrb[0].mxu0
    %v4209 = vadd.f32 0.0, %v4208
    %v4210 = vpop.f32.mrb[0].mxu0
    %4211 = vdwg.mxu0
    %v4212 = vadd.f32 %v925, %v4194
    %v4213 = vadd.f32 %v930, %v4199
    %v4214 = vadd.f32 %v935, %v4204
    %v4215 = vadd.f32 %v940, %v4209
    %v4216 = vxor.u32 %v4212, 2147483648
    %v4217 = vxor.u32 %v4213, 2147483648
    %v4218 = vxor.u32 %v4214, 2147483648
    %v4219 = vxor.u32 %v4215, 2147483648
    %v4220 = vmul.f32 %v4216, 1.442695
    %v4221 = vpow.pop %v4220
    %v4222 = vmul.f32 %v4217, 1.442695
    %v4223 = vpow.pop %v4222
    %v4224 = vmul.f32 %v4218, 1.442695
    %v4225 = vpow.pop %v4224
    %v4226 = vmul.f32 %v4219, 1.442695
    %v4227 = vpow.pop %v4226
    %v4228 = vadd.f32 %v4221, 1.0
    %v4229 = vadd.f32 %v4223, 1.0
    %v4230 = vadd.f32 %v4225, 1.0
    %v4231 = vadd.f32 %v4227, 1.0
    %v4232 = vrcp.pop %v4228
    %v4233 = vmul.f32 1.0, %v4232
    %v4234 = vrcp.pop %v4229
    %v4235 = vmul.f32 1.0, %v4234
    %v4236 = vrcp.pop %v4230
    %v4237 = vmul.f32 1.0, %v4236
    %v4238 = vrcp.pop %v4231
    %v4239 = vmul.f32 1.0, %v4238
    %4240 = vmatprep.subr.mxu0 0.0
    %4241 = vmatpush1.msra.mxu0 %v1145
    %4242 = vmatprep.subr.mxu0 0.0
    %4243 = vmatpush1.msra.mxu0 %v1146
    %4244 = vmatprep.subr.mxu0 0.0
    %4245 = vmatpush1.msra.mxu0 %v1147
    %4246 = vmatprep.subr.mxu0 0.0
    %4247 = vmatpush1.msra.mxu0 %v1148
    %4248 = vmatprep.subr.mxu0 0.0
    %4249 = vmatpush1.msra.mxu0 0.0
    %4250 = vmatprep.subr.mxu0 0.0
    %4251 = vmatpush1.msra.mxu0 0.0
    %4252 = vmatprep.subr.mxu0 0.0
    %4253 = vmatpush1.msra.mxu0 0.0
    %4254 = vmatprep.subr.mxu0 0.0
    %4255 = vmatpush1.msra.mxu0 0.0
    %4256 = vmatprep.subr.mxu0 0.0
    %4257 = vmatpush1.msra.mxu0 0.0
    %4258 = vmatprep.subr.mxu0 0.0
    %4259 = vmatpush1.msra.mxu0 0.0
    %4260 = vmatprep.subr.mxu0 0.0
    %4261 = vmatpush1.msra.mxu0 0.0
    %4262 = vmatprep.subr.mxu0 0.0
    %4263 = vmatpush1.msra.mxu0 0.0
    %4264 = vmatprep.subr.mxu0 0.0
    %4265 = vmatpush1.msra.mxu0 0.0
    %4266 = vmatprep.subr.mxu0 0.0
    %4267 = vmatpush1.msra.mxu0 0.0
    %4268 = vmatprep.subr.mxu0 0.0
    %4269 = vmatpush1.msra.mxu0 0.0
    %4270 = vmatprep.subr.mxu0 0.0
    %4271 = vmatpush1.msra.mxu0 0.0
    %4272 = vmatprep.subr.mxu0 0.0
    %4273 = vmatpush1.msra.mxu0 0.0
    %4274 = vmatprep.subr.mxu0 0.0
    %4275 = vmatpush1.msra.mxu0 0.0
    %4276 = vmatprep.subr.mxu0 0.0
    %4277 = vmatpush1.msra.mxu0 0.0
    %4278 = vmatprep.subr.mxu0 0.0
    %4279 = vmatpush1.msra.mxu0 0.0
    %4280 = vmatprep.subr.mxu0 0.0
    %4281 = vmatpush1.msra.mxu0 0.0
    %4282 = vmatprep.subr.mxu0 0.0
    %4283 = vmatpush1.msra.mxu0 0.0
    %4284 = vmatprep.subr.mxu0 0.0
    %4285 = vmatpush1.msra.mxu0 0.0
    %4286 = vmatprep.subr.mxu0 0.0
    %4287 = vmatpush1.msra.mxu0 0.0
    %4288 = vmatprep.subr.mxu0 0.0
    %4289 = vmatpush1.msra.mxu0 0.0
    %4290 = vmatprep.subr.mxu0 0.0
    %4291 = vmatpush1.msra.mxu0 0.0
    %4292 = vmatprep.subr.mxu0 0.0
    %4293 = vmatpush1.msra.mxu0 0.0
    %4294 = vmatprep.subr.mxu0 0.0
    %4295 = vmatpush1.msra.mxu0 0.0
    %4296 = vmatprep.subr.mxu0 0.0
    %4297 = vmatpush1.msra.mxu0 0.0
    %4298 = vmatprep.subr.mxu0 0.0
    %4299 = vmatpush1.msra.mxu0 0.0
    %4300 = vmatprep.subr.mxu0 0.0
    %4301 = vmatpush1.msra.mxu0 0.0
    %4302 = vmatprep.subr.mxu0 0.0
    %4303 = vmatpush1.msra.mxu0 0.0
    %4304 = vmatprep.mubr.f32.mxu0 0.0
    %4305 = vmatmul.mubr.f32.gmra.mrb[0].mxu0 %v4003
    %v4306 = vpop.f32.mrb[0].mxu0
    %v4307 = vadd.f32 0.0, %v4306
    %v4308 = vpop.f32.mrb[0].mxu0
    %4309 = vmatprep.mubr.f32.mxu0 0.0
    %4310 = vmatmul.mubr.f32.gmra.mrb[0].mxu0 %v4006
    %v4311 = vpop.f32.mrb[0].mxu0
    %v4312 = vadd.f32 0.0, %v4311
    %v4313 = vpop.f32.mrb[0].mxu0
    %4314 = vmatprep.mubr.f32.mxu0 0.0
    %4315 = vmatmul.mubr.f32.gmra.mrb[0].mxu0 %v4009
    %v4316 = vpop.f32.mrb[0].mxu0
    %v4317 = vadd.f32 0.0, %v4316
    %v4318 = vpop.f32.mrb[0].mxu0
    %4319 = vmatprep.mubr.f32.mxu0 0.0
    %4320 = vmatmul.mubr.f32.gmra.mrb[0].mxu0 %v4012
    %v4321 = vpop.f32.mrb[0].mxu0
    %v4322 = vadd.f32 0.0, %v4321
    %v4323 = vpop.f32.mrb[0].mxu0
    %4324 = vdwg.mxu0
    %v4325 = vadd.f32 %v1021, %v4307
    %v4326 = vadd.f32 %v1026, %v4312
    %v4327 = vadd.f32 %v1031, %v4317
    %v4328 = vadd.f32 %v1036, %v4322
    %v4329 = vtanh.pop %v4325
    %v4330 = vtanh.pop %v4326
    %v4331 = vtanh.pop %v4327
    %v4332 = vtanh.pop %v4328
    %4333 = vmatprep.subr.mxu0 0.0
    %4334 = vmatpush1.msra.mxu0 %v1150
    %4335 = vmatprep.subr.mxu0 0.0
    %4336 = vmatpush1.msra.mxu0 %v1151
    %4337 = vmatprep.subr.mxu0 0.0
    %4338 = vmatpush1.msra.mxu0 %v1152
    %4339 = vmatprep.subr.mxu0 0.0
    %4340 = vmatpush1.msra.mxu0 %v1153
    %4341 = vmatprep.subr.mxu0 0.0
    %4342 = vmatpush1.msra.mxu0 0.0
    %4343 = vmatprep.subr.mxu0 0.0
    %4344 = vmatpush1.msra.mxu0 0.0
    %4345 = vmatprep.subr.mxu0 0.0
    %4346 = vmatpush1.msra.mxu0 0.0
    %4347 = vmatprep.subr.mxu0 0.0
    %4348 = vmatpush1.msra.mxu0 0.0
    %4349 = vmatprep.subr.mxu0 0.0
    %4350 = vmatpush1.msra.mxu0 0.0
    %4351 = vmatprep.subr.mxu0 0.0
    %4352 = vmatpush1.msra.mxu0 0.0
    %4353 = vmatprep.subr.mxu0 0.0
    %4354 = vmatpush1.msra.mxu0 0.0
    %4355 = vmatprep.subr.mxu0 0.0
    %4356 = vmatpush1.msra.mxu0 0.0
    %4357 = vmatprep.subr.mxu0 0.0
    %4358 = vmatpush1.msra.mxu0 0.0
    %4359 = vmatprep.subr.mxu0 0.0
    %4360 = vmatpush1.msra.mxu0 0.0
    %4361 = vmatprep.subr.mxu0 0.0
    %4362 = vmatpush1.msra.mxu0 0.0
    %4363 = vmatprep.subr.mxu0 0.0
    %4364 = vmatpush1.msra.mxu0 0.0
    %4365 = vmatprep.subr.mxu0 0.0
    %4366 = vmatpush1.msra.mxu0 0.0
    %4367 = vmatprep.subr.mxu0 0.0
    %4368 = vmatpush1.msra.mxu0 0.0
    %4369 = vmatprep.subr.mxu0 0.0
    %4370 = vmatpush1.msra.mxu0 0.0
    %4371 = vmatprep.subr.mxu0 0.0
    %4372 = vmatpush1.msra.mxu0 0.0
    %4373 = vmatprep.subr.mxu0 0.0
    %4374 = vmatpush1.msra.mxu0 0.0
    %4375 = vmatprep.subr.mxu0 0.0
    %4376 = vmatpush1.msra.mxu0 0.0
    %4377 = vmatprep.subr.mxu0 0.0
    %4378 = vmatpush1.msra.mxu0 0.0
    %4379 = vmatprep.subr.mxu0 0.0
    %4380 = vmatpush1.msra.mxu0 0.0
    %4381 = vmatprep.subr.mxu0 0.0
    %4382 = vmatpush1.msra.mxu0 0.0
    %4383 = vmatprep.subr.mxu0 0.0
    %4384 = vmatpush1.msra.mxu0 0.0
    %4385 = vmatprep.subr.mxu0 0.0
    %4386 = vmatpush1.msra.mxu0 0.0
    %4387 = vmatprep.subr.mxu0 0.0
    %4388 = vmatpush1.msra.mxu0 0.0
    %4389 = vmatprep.subr.mxu0 0.0
    %4390 = vmatpush1.msra.mxu0 0.0
    %4391 = vmatprep.subr.mxu0 0.0
    %4392 = vmatpush1.msra.mxu0 0.0
    %4393 = vmatprep.subr.mxu0 0.0
    %4394 = vmatpush1.msra.mxu0 0.0
    %4395 = vmatprep.subr.mxu0 0.0
    %4396 = vmatpush1.msra.mxu0 0.0
    %4397 = vmatprep.mubr.f32.mxu0 0.0
    %4398 = vmatmul.mubr.f32.gmra.mrb[0].mxu0 %v4003
    %v4399 = vpop.f32.mrb[0].mxu0
    %v4400 = vadd.f32 0.0, %v4399
    %v4401 = vpop.f32.mrb[0].mxu0
    %4402 = vmatprep.mubr.f32.mxu0 0.0
    %4403 = vmatmul.mubr.f32.gmra.mrb[0].mxu0 %v4006
    %v4404 = vpop.f32.mrb[0].mxu0
    %v4405 = vadd.f32 0.0, %v4404
    %v4406 = vpop.f32.mrb[0].mxu0
    %4407 = vmatprep.mubr.f32.mxu0 0.0
    %4408 = vmatmul.mubr.f32.gmra.mrb[0].mxu0 %v4009
    %v4409 = vpop.f32.mrb[0].mxu0
    %v4410 = vadd.f32 0.0, %v4409
    %v4411 = vpop.f32.mrb[0].mxu0
    %4412 = vmatprep.mubr.f32.mxu0 0.0
    %4413 = vmatmul.mubr.f32.gmra.mrb[0].mxu0 %v4012
    %v4414 = vpop.f32.mrb[0].mxu0
    %v4415 = vadd.f32 0.0, %v4414
    %v4416 = vpop.f32.mrb[0].mxu0
    %4417 = vdwg.mxu0
    %v4418 = vadd.f32 %v1117, %v4400
    %v4419 = vadd.f32 %v1122, %v4405
    %v4420 = vadd.f32 %v1127, %v4410
    %v4421 = vadd.f32 %v1132, %v4415
    %v4422 = vxor.u32 %v4418, 2147483648
    %v4423 = vxor.u32 %v4419, 2147483648
    %v4424 = vxor.u32 %v4420, 2147483648
    %v4425 = vxor.u32 %v4421, 2147483648
    %v4426 = vmul.f32 %v4422, 1.442695
    %v4427 = vpow.pop %v4426
    %v4428 = vmul.f32 %v4423, 1.442695
    %v4429 = vpow.pop %v4428
    %v4430 = vmul.f32 %v4424, 1.442695
    %v4431 = vpow.pop %v4430
    %v4432 = vmul.f32 %v4425, 1.442695
    %v4433 = vpow.pop %v4432
    %v4434 = vadd.f32 %v4427, 1.0
    %v4435 = vadd.f32 %v4429, 1.0
    %v4436 = vadd.f32 %v4431, 1.0
    %v4437 = vadd.f32 %v4433, 1.0
    %v4438 = vrcp.pop %v4434
    %v4439 = vmul.f32 1.0, %v4438
    %v4440 = vrcp.pop %v4435
    %v4441 = vmul.f32 1.0, %v4440
    %v4442 = vrcp.pop %v4436
    %v4443 = vmul.f32 1.0, %v4442
    %v4444 = vrcp.pop %v4437
    %v4445 = vmul.f32 1.0, %v4444
    %v4446 = vmul.f32 %v4233, %v3990
    %v4447 = vmul.f32 %v4235, %v3991
    %v4448 = vmul.f32 %v4237, %v3992
    %v4449 = vmul.f32 %v4239, %v3993
    %v4450 = vmul.f32 %v4120, %v4329
    %v4451 = vmul.f32 %v4122, %v4330
    %v4452 = vmul.f32 %v4124, %v4331
    %v4453 = vmul.f32 %v4126, %v4332
    %v4454 = vadd.f32 %v4446, %v4450
    %v4455 = vadd.f32 %v4447, %v4451
    %v4456 = vadd.f32 %v4448, %v4452
    %v4457 = vadd.f32 %v4449, %v4453
    %v4458 = vtanh.pop %v4454
    %v4459 = vtanh.pop %v4455
    %v4460 = vtanh.pop %v4456
    %v4461 = vtanh.pop %v4457
    %v4462 = vmul.f32 %v4439, %v4458
    %v4463 = vmul.f32 %v4441, %v4459
    %v4464 = vmul.f32 %v4443, %v4460
    %v4465 = vmul.f32 %v4445, %v4461
    %4466 = vxpose.xlu0.b32.start [1/16] %v4462, 128
    %4467 = vxpose.xlu0.b32.cont [2/16] %v4463, 128
    %4468 = vxpose.xlu0.b32.cont [3/16] %v4464, 128
    %4469 = vxpose.xlu0.b32.cont [4/16] %v4465, 128
    %4470 = vxpose.xlu0.b32.cont [5/16] 0.0, 128
    %4471 = vxpose.xlu0.b32.cont [6/16] 0.0, 128
    %4472 = vxpose.xlu0.b32.cont [7/16] 0.0, 128
    %4473 = vxpose.xlu0.b32.cont [8/16] 0.0, 128
    %4474 = vxpose.xlu0.b32.cont [9/16] 0.0, 128
    %4475 = vxpose.xlu0.b32.cont [10/16] 0.0, 128
    %4476 = vxpose.xlu0.b32.cont [11/16] 0.0, 128
    %4477 = vxpose.xlu0.b32.cont [12/16] 0.0, 128
    %4478 = vxpose.xlu0.b32.cont [13/16] 0.0, 128
    %4479 = vxpose.xlu0.b32.cont [14/16] 0.0, 128
    %4480 = vxpose.xlu0.b32.cont [15/16] 0.0, 128
    %4481 = vxpose.xlu0.b32.end [16/16] 0.0, 128
    %v4482 = vpop.trf.xlu0
    %v4483 = vpop.trf.xlu0
    %v4484 = vpop.trf.xlu0
    %v4485 = vpop.trf.xlu0
    %v4486 = vpop.trf.xlu0
    %v4487 = vpop.trf.xlu0
    %v4488 = vpop.trf.xlu0
    %v4489 = vpop.trf.xlu0
    %v4490 = vpop.trf.xlu0
    %v4491 = vpop.trf.xlu0
    %v4492 = vpop.trf.xlu0
    %v4493 = vpop.trf.xlu0
    %v4494 = vpop.trf.xlu0
    %v4495 = vpop.trf.xlu0
    %v4496 = vpop.trf.xlu0
    %v4497 = vpop.trf.xlu0
    %v4498 = vld [vmem:[%s10] sm:$0xff]
    %v4499 = vld [vmem:[%s10 + $0x8] sm:$0xff]
    %v4500 = vld [vmem:[%s10 + $0x10] sm:$0xff]
    %v4501 = vld [vmem:[%s10 + $0x18] sm:$0xff]
    %4503 = vset.pattern.permute.xlu0 0
    %4504 = vperm.xlu0 %4503, %v4498
    %v4505 = vpop.permute.xlu0 %4504
    %4508 = vset.pattern.permute.xlu0 0
    %4509 = vperm.xlu0 %4508, %v4499
    %v4510 = vpop.permute.xlu0 %4509
    %4513 = vset.pattern.permute.xlu0 0
    %4514 = vperm.xlu0 %4513, %v4500
    %v4515 = vpop.permute.xlu0 %4514
    %4518 = vset.pattern.permute.xlu0 0
    %4519 = vperm.xlu0 %4518, %v4501
    %v4520 = vpop.permute.xlu0 %4519
    %v4522 = vmul.f32 %v4482, %v4505
    %v4523 = vmul.f32 %v4483, %v4510
    %v4524 = vmul.f32 %v4484, %v4515
    %v4525 = vmul.f32 %v4485, %v4520
    %v4526 = vsel %vm490, %v4522, 0.0
    %v4527 = vsel %vm490, %v4523, 0.0
    %v4528 = vadd.f32 %v4526, %v4527
    %v4529 = vsel %vm490, %v4524, 0.0
    %v4530 = vadd.f32 %v4528, %v4529
    %v4531 = vsel %vm490, %v4525, 0.0
    %v4532 = vadd.f32 %v4530, %v4531
    %v4533 = vrot.slane %v4532, 4
    %v4534 = vadd.f32 %v4532, %v4533
    %v4535 = vrot.slane %v4534, 2
    %v4536 = vadd.f32 %v4534, %v4535
    %v4537 = vrot.slane %v4536, 1
    %v4538 = vadd.f32 %v4536, %v4537
    %v4539 = vld [vmem:[#allocation2] sm:$0x1]
    %4541 = vset.pattern.permute.xlu0 0
    %4542 = vperm.xlu0 %4541, %v4539
    %v4543 = vpop.permute.xlu0 %4542
    %v4545 = vlaneseq
    %v4546 = vshrl.u32 %v4545, 7
    %v4547 = vsub.s32 0, %v4546
    %v4548 = vrot.slane %v4543, %v4547
    %v4549 = vadd.f32 %v4538, %v4548
    %vm4550 = vcmask 253952
    %4551 = vst.msk [vmem:[#allocation8] sm:$0x1] %vm4550, %v4549
    // Predicated region
    $region58: #{tpu_custom_call.1} parent=1 // pred_check
      _
    $region59: #{tpu_custom_call.1} parent=1 // pred_check_branch
      %4553 = sbr.rel (0) target = $region61
    $region60: #{tpu_custom_call.1} parent=1 // pred_region
      %s4555 = ssub.s32 16, 16
      %4556 = vsyncadd [#allocation5], %s4555
      %s4558 = sshll.u32 [#allocation8], 4
      %s4559 = int_to_ptr.vmem [resolvable:$true] %s4558
      %4561 = dma.vmem_to_hbm [thread:$0]  %s4559, 16, %s12, [#allocation5]
    $region61: #{tpu_custom_call.1} parent=1 // pred_fallthru
      _
    // Predicated region
    $region62: #{tpu_custom_call.1} parent=1 // pred_check
      _
    $region63: #{tpu_custom_call.1} parent=1 // pred_check_branch
      %4563 = sbr.rel (0) target = $region65
    $region64: #{tpu_custom_call.1} parent=1 // pred_region
      %4564 = dma.done [#allocation5], 16
    $region65: #{tpu_custom_call.1} parent=1 // pred_fallthru
      _
    %4565 = vsyncpa [#allocation4], 1
    %4566 = vsyncpa [#allocation7], 1
    %4567 = vsyncpa [#allocation5], 1

</llo_original>
